<compile_context>
chip_gen: v7x
topology: tpu7x:2x2x1
jax: 0.10.0
libtpu: 0.0.40
codegen_flags: <defaults>
</compile_context>

<pallas_src>
import functools

import jax
import jax.numpy as jnp
from jax import lax
from jax.experimental import pallas as pl
from jax.experimental.pallas import tpu as pltpu

EPS = 1e-5
LANE = 128        # channel dims are zero-padded up to a multiple of this
SUBLANE = 8


def _round_up(x, m):
    return (x + m - 1) // m * m


def _pad_to(a, shape):
    return jnp.pad(a, [(0, t - s) for s, t in zip(a.shape, shape)])


# ------------------------------ Pallas kernels ------------------------------ #

def _conv1_kernel(x_ref, w_ref, h_ref, st_ref):
    """1x1 conv (rows @ w1) + per-tile BN partials (sum, sumsq)."""
    h = jnp.dot(x_ref[...].astype(jnp.bfloat16), w_ref[...],
                preferred_element_type=jnp.float32)
    h_ref[...] = h
    st_ref[0, 0:1, :] = jnp.sum(h, axis=0, keepdims=True)
    st_ref[0, 1:2, :] = jnp.sum(h * h, axis=0, keepdims=True)


def _conv2_kernel(H, W, h1p_ref, s_ref, t_ref, w2_ref, h2_ref, st_ref):
    """bn1+relu (folded scale/shift) + 3x3 conv as 9 shifted matmuls + partials.

    h1p_ref holds one spatially zero-padded (H+2, W+2, C) plane of the *raw*
    conv1 output; the halo is re-zeroed after the BN affine so it behaves like
    conv zero-padding of the activation.
    """
    C = h1p_ref.shape[-1]
    scale = s_ref[...].reshape(1, 1, C)
    shift = t_ref[...].reshape(1, 1, C)
    a = jnp.maximum(h1p_ref[0] * scale + shift, 0.0)            # (H+2, W+2, C)
    row = lax.broadcasted_iota(jnp.int32, a.shape, 0)
    col = lax.broadcasted_iota(jnp.int32, a.shape, 1)
    interior = (row >= 1) & (row <= H) & (col >= 1) & (col <= W)
    a = jnp.where(interior, a, 0.0)

    acc = jnp.zeros((H * W, C), jnp.float32)
    for dj in range(3):
        # W-shifted window, flattened so each tap is a contiguous row range.
        m = a[:, dj:dj + W, :].reshape((H + 2) * W, C)
        for di in range(3):
            tap = m[di * W:di * W + H * W, :].astype(jnp.bfloat16)
            acc = acc + jnp.dot(tap, w2_ref[di * 3 + dj],
                                preferred_element_type=jnp.float32)
    h2_ref[0] = acc
    st_ref[0, 0:1, :] = jnp.sum(acc, axis=0, keepdims=True)
    st_ref[0, 1:2, :] = jnp.sum(acc * acc, axis=0, keepdims=True)


def _conv3_kernel(h2_ref, s_ref, t_ref, w_ref, h_ref, st_ref):
    """bn2+relu (folded) + 1x1 conv + per-tile BN partials."""
    a = jnp.maximum(h2_ref[...] * s_ref[...] + t_ref[...], 0.0)
    h = jnp.dot(a.astype(jnp.bfloat16), w_ref[...],
                preferred_element_type=jnp.float32)
    h_ref[...] = h
    st_ref[0, 0:1, :] = jnp.sum(h, axis=0, keepdims=True)
    st_ref[0, 1:2, :] = jnp.sum(h * h, axis=0, keepdims=True)


def _bn3_residual_kernel(h3_ref, s_ref, t_ref, x_ref, o_ref):
    """bn3 (folded) + residual add + final relu."""
    o_ref[...] = jnp.maximum(
        h3_ref[...] * s_ref[...] + t_ref[...] + x_ref[...], 0.0)


# -------------------------------- JAX glue ---------------------------------- #

def _bn_affine(stats, n_rows, gamma, beta):
    """Fold per-tile (sum, sumsq) partials into BN scale/shift vectors."""
    tot = jnp.sum(stats, axis=0)                    # (2, C)
    mean = tot[0] / n_rows
    var = tot[1] / n_rows - mean * mean             # biased variance
    scale = gamma * lax.rsqrt(var + EPS)
    shift = beta - mean * scale
    return scale.reshape(1, -1), shift.reshape(1, -1)


def _pick_row_tile(rows, cap):
    t = min(cap, rows)
    t -= t % SUBLANE
    while t > SUBLANE and rows % t != 0:
        t -= SUBLANE
    t = max(t, SUBLANE)
    assert rows % t == 0, "N*H*W must be a multiple of 8"
    return t


# --------------------------------- wrapper ---------------------------------- #

def bottleneck_forward(x_nchw, params, stride=1, tile_rows=512):
    """BottleNeck.forward (downsample=None, stride=1 — module defaults)."""
    w1, g1, b1, w2, g2, b2, w3, g3, b3 = params
    N, Cin, H, W = x_nchw.shape
    Cmid = w1.shape[1]
    Cout = w3.shape[1]
    # With downsample=None the residual add requires stride==1 and Cin==Cout.
    assert stride == 1 and Cin == Cout
    # TODO(synk): stride>1 / downsample branch not implemented (module default).
    # TODO(synk): training-mode BN also updates running_mean/var module buffers;
    #             that state update is not part of the returned tensor.

    f32, bf16 = jnp.float32, jnp.bfloat16
    Cpi = _round_up(Cin, LANE)
    Cpm = _round_up(Cmid, LANE)
    Cpo = _round_up(Cout, LANE)
    assert Cpi == Cpo
    R = N * H * W
    tr = _pick_row_tile(R, tile_rows)
    T = R // tr

    # layout prep (pure layout glue; all heavy math is inside the kernels)
    x_rows = _pad_to(jnp.transpose(x_nchw, (0, 2, 3, 1)).astype(f32)
                     .reshape(R, Cin), (R, Cpi))
    w1p = _pad_to(w1.astype(bf16), (Cpi, Cpm))
    w2p = _pad_to(w2.astype(bf16), (3, 3, Cpm, Cpm)).reshape(9, Cpm, Cpm)
    w3p = _pad_to(w3.astype(bf16), (Cpm, Cpo))
    g1p = _pad_to(g1.astype(f32).reshape(-1), (Cpm,))
    b1p = _pad_to(b1.astype(f32).reshape(-1), (Cpm,))
    g2p = _pad_to(g2.astype(f32).reshape(-1), (Cpm,))
    b2p = _pad_to(b2.astype(f32).reshape(-1), (Cpm,))
    g3p = _pad_to(g3.astype(f32).reshape(-1), (Cpo,))
    b3p = _pad_to(b3.astype(f32).reshape(-1), (Cpo,))

    cparams = pltpu.CompilerParams(
        dimension_semantics=("parallel",),          # tiles/images independent
        vmem_limit_bytes=32 * 1024 * 1024)          # sized for v7x's 64MiB VMEM

    # ---- stage 1: conv1 (1x1) + bn1 partial stats (row-tiled, pipelined) ----
    h1, st1 = pl.pallas_call(
        _conv1_kernel,
        out_shape=(jax.ShapeDtypeStruct((R, Cpm), f32),
                   jax.ShapeDtypeStruct((T, 2, Cpm), f32)),
        grid=(T,),
        in_specs=[pl.BlockSpec((tr, Cpi), lambda i: (i, 0)),
                  pl.BlockSpec((Cpi, Cpm), lambda i: (0, 0))],
        out_specs=(pl.BlockSpec((tr, Cpm), lambda i: (i, 0)),
                   pl.BlockSpec((1, 2, Cpm), lambda i: (i, 0, 0))),
        compiler_params=cparams,
        cost_estimate=pl.CostEstimate(
            flops=2 * R * Cpi * Cpm, transcendentals=0,
            bytes_accessed=R * Cpi * 4 + Cpi * Cpm * 2 + (R + 2 * T) * Cpm * 4),
    )(x_rows, w1p)
    s1, t1 = _bn_affine(st1, R, g1p, b1p)

    # zero-pad raw conv1 output spatially (halo re-zeroed post-BN in kernel B)
    h1p = jnp.pad(h1.reshape(N, H, W, Cpm), ((0, 0), (1, 1), (1, 1), (0, 0)))

    # ---- stage 2: bn1+relu + 3x3 conv (9 shifted matmuls) + bn2 partials ----
    h2, st2 = pl.pallas_call(
        functools.partial(_conv2_kernel, H, W),
        out_shape=(jax.ShapeDtypeStruct((N, H * W, Cpm), f32),
                   jax.ShapeDtypeStruct((N, 2, Cpm), f32)),
        grid=(N,),
        in_specs=[pl.BlockSpec((1, H + 2, W + 2, Cpm), lambda n: (n, 0, 0, 0)),
                  pl.BlockSpec((1, Cpm), lambda n: (0, 0)),
                  pl.BlockSpec((1, Cpm), lambda n: (0, 0)),
                  pl.BlockSpec((9, Cpm, Cpm), lambda n: (0, 0, 0))],
        out_specs=(pl.BlockSpec((1, H * W, Cpm), lambda n: (n, 0, 0)),
                   pl.BlockSpec((1, 2, Cpm), lambda n: (n, 0, 0))),
        compiler_params=cparams,
        cost_estimate=pl.CostEstimate(
            flops=2 * 9 * R * Cpm * Cpm, transcendentals=0,
            bytes_accessed=(N * (H + 2) * (W + 2) * Cpm * 4
                            + 9 * Cpm * Cpm * 2 + (R + 2 * N) * Cpm * 4)),
    )(h1p, s1, t1, w2p)
    s2, t2 = _bn_affine(st2, R, g2p, b2p)

    # ---- stage 3: bn2+relu + conv3 (1x1) + bn3 partial stats (row-tiled) ----
    h3, st3 = pl.pallas_call(
        _conv3_kernel,
        out_shape=(jax.ShapeDtypeStruct((R, Cpo), f32),
                   jax.ShapeDtypeStruct((T, 2, Cpo), f32)),
        grid=(T,),
        in_specs=[pl.BlockSpec((tr, Cpm), lambda i: (i, 0)),
                  pl.BlockSpec((1, Cpm), lambda i: (0, 0)),
                  pl.BlockSpec((1, Cpm), lambda i: (0, 0)),
                  pl.BlockSpec((Cpm, Cpo), lambda i: (0, 0))],
        out_specs=(pl.BlockSpec((tr, Cpo), lambda i: (i, 0)),
                   pl.BlockSpec((1, 2, Cpo), lambda i: (i, 0, 0))),
        compiler_params=cparams,
        cost_estimate=pl.CostEstimate(
            flops=2 * R * Cpm * Cpo, transcendentals=0,
            bytes_accessed=(R * Cpm * 4 + Cpm * Cpo * 2
                            + (R + 2 * T) * Cpo * 4)),
    )(h2.reshape(R, Cpm), s2, t2, w3p)
    s3, t3 = _bn_affine(st3, R, g3p, b3p)

    # ---- stage 4: bn3 + residual add + relu (row-tiled, lane-dense store) ----
    out_rows = pl.pallas_call(
        _bn3_residual_kernel,
        out_shape=jax.ShapeDtypeStruct((R, Cpo), f32),
        grid=(T,),
        in_specs=[pl.BlockSpec((tr, Cpo), lambda i: (i, 0)),
                  pl.BlockSpec((1, Cpo), lambda i: (0, 0)),
                  pl.BlockSpec((1, Cpo), lambda i: (0, 0)),
                  pl.BlockSpec((tr, Cpo), lambda i: (i, 0))],
        out_specs=pl.BlockSpec((tr, Cpo), lambda i: (i, 0)),
        compiler_params=cparams,
        cost_estimate=pl.CostEstimate(
            flops=3 * R * Cpo, transcendentals=0,
            bytes_accessed=3 * R * Cpo * 4),
    )(h3, s3, t3, x_rows)

    out = out_rows[:, :Cout].reshape(N, H, W, Cout)
    return jnp.transpose(out, (0, 3, 1, 2))            # back to NCHW


# ------------------------- pure-JAX reference check ------------------------- #

def _bn_train_ref(x_nhwc, gamma, beta):
    mean = jnp.mean(x_nhwc, axis=(0, 1, 2), keepdims=True)
    var = jnp.mean(jnp.square(x_nhwc - mean), axis=(0, 1, 2), keepdims=True)
    return ((x_nhwc - mean) * lax.rsqrt(var + EPS) * gamma.reshape(1, 1, 1, -1)
            + beta.reshape(1, 1, 1, -1))


def bottleneck_reference(x_nchw, params, mxu_dtype=jnp.float32):
    w1, g1, b1, w2, g2, b2, w3, g3, b3 = params
    dn = ('NHWC', 'HWIO', 'NHWC')

    def conv(h, w, padding):
        return lax.conv_general_dilated(
            h.astype(mxu_dtype), w.astype(mxu_dtype), (1, 1), padding,
            dimension_numbers=dn, preferred_element_type=jnp.float32,
            precision=lax.Precision.HIGHEST)

    x = jnp.transpose(x_nchw, (0, 2, 3, 1))
    h = conv(x, w1.reshape(1, 1, *w1.shape), 'VALID')
    h = jax.nn.relu(_bn_train_ref(h, g1, b1))
    h = conv(h, w2, ((1, 1), (1, 1)))
    h = jax.nn.relu(_bn_train_ref(h, g2, b2))
    h = conv(h, w3.reshape(1, 1, *w3.shape), 'VALID')
    h = _bn_train_ref(h, g3, b3)
    h = jax.nn.relu(h + x)
    return jnp.transpose(h, (0, 3, 1, 2))


# ----------------------------------- main ------------------------------------ #

if __name__ == "__main__":
    # BottleNeck(in_planes=16, out_planes=4): conv1 16->4, conv2 4->4 (3x3),
    # conv3 4->16; residual valid because in_planes == out_planes * 4.
    in_planes, out_planes = 16, 4
    N, H, W = 2, 16, 16
    Cmid, Cout = out_planes, out_planes * 4

    key = jax.random.PRNGKey(0)
    ks = jax.random.split(key, 10)
    x = jax.random.normal(ks[0], (N, in_planes, H, W), jnp.float32)
    w1 = 0.1 * jax.random.normal(ks[1], (in_planes, Cmid), jnp.float32)
    w2 = 0.1 * jax.random.normal(ks[2], (3, 3, Cmid, Cmid), jnp.float32)
    w3 = 0.1 * jax.random.normal(ks[3], (Cmid, Cout), jnp.float32)
    g1 = 1.0 + 0.1 * jax.random.normal(ks[4], (Cmid,), jnp.float32)
    b1 = 0.1 * jax.random.normal(ks[5], (Cmid,), jnp.float32)
    g2 = 1.0 + 0.1 * jax.random.normal(ks[6], (Cmid,), jnp.float32)
    b2 = 0.1 * jax.random.normal(ks[7], (Cmid,), jnp.float32)
    g3 = 1.0 + 0.1 * jax.random.normal(ks[8], (Cout,), jnp.float32)
    b3 = 0.1 * jax.random.normal(ks[9], (Cout,), jnp.float32)
    params = (w1, g1, b1, w2, g2, b2, w3, g3, b3)

    fwd = jax.jit(functools.partial(bottleneck_forward, stride=1, tile_rows=128))
    out = jax.block_until_ready(fwd(x, params))
    assert out.shape == (N, Cout, H, W), out.shape

    # reference with matched MXU numerics (bf16 operands, f32 accumulation)
    ref_bf16 = jax.block_until_ready(
        bottleneck_reference(x, params, mxu_dtype=jnp.bfloat16))
    # pure-f32 reference (loose bound: bf16 MXU operands cost ~1e-2 max abs)
    ref_f32 = jax.block_until_ready(
        bottleneck_reference(x, params, mxu_dtype=jnp.float32))

    err_matched = float(jnp.max(jnp.abs(out - ref_bf16)))
    err_f32 = float(jnp.max(jnp.abs(out - ref_f32)))
    assert err_matched < 2e-3, f"mismatch vs matched-precision ref: {err_matched}"
    assert err_f32 < 5e-2, f"mismatch vs f32 ref: {err_f32}"
    print("KERNEL_OK")
</pallas_src>

<mosaic_0001>
module attributes {stable_mosaic.version = 11 : i64} {
  func.func @_conv1_kernel(%arg0: i32, %arg1: memref<128x128xf32, #tpu.memory_space<vmem>>, %arg2: memref<128x128xbf16, #tpu.memory_space<vmem>>, %arg3: memref<128x128xf32, #tpu.memory_space<vmem>>, %arg4: memref<1x2x128xf32, #tpu.memory_space<vmem>>) attributes {dimension_semantics = [#tpu.dimension_semantics<parallel>], iteration_bounds = array<i64: 4>, scalar_prefetch = 0 : i64, scratch_operands = 0 : i64, tpu.core_type = #tpu.core_type<tc>, window_params = [{transform_indices = @transform_0, window_bounds = array<i64: 128, 128>}, {pipeline_mode = #tpu.pipeline_mode<synchronous>, transform_indices = @transform_1, window_bounds = array<i64: 128, 128>}, {transform_indices = @transform_2, window_bounds = array<i64: 128, 128>}, {transform_indices = @transform_3, window_bounds = array<i64: 1, 2, 128>}]} {
    %c0 = arith.constant 0 : index
    %c0_0 = arith.constant 0 : index
    %0 = vector.load %arg1[%c0, %c0_0] : memref<128x128xf32, #tpu.memory_space<vmem>>, vector<128x128xf32>
    %1 = arith.truncf %0 : vector<128x128xf32> to vector<128x128xbf16>
    %c0_1 = arith.constant 0 : index
    %c0_2 = arith.constant 0 : index
    %2 = vector.load %arg2[%c0_1, %c0_2] : memref<128x128xbf16, #tpu.memory_space<vmem>>, vector<128x128xbf16>
    %cst = arith.constant dense<0.000000e+00> : vector<128x128xf32>
    %3 = tpu.matmul %1, %2, %cst {dimension_numbers = #tpu.dot_dimension_numbers<[1], [0], [0], [1], [0, 0, 1, 1], [], []>} : vector<128x128xbf16>, vector<128x128xbf16>, vector<128x128xf32> -> vector<128x128xf32>
    %c0_3 = arith.constant 0 : index
    %c0_4 = arith.constant 0 : index
    %4 = vector.load %arg3[%c0_3, %c0_4] : memref<128x128xf32, #tpu.memory_space<vmem>>, vector<128x128xf32>
    tpu.vector_store %arg3[%c0_3, %c0_4], %3 {strides = array<i32>} : memref<128x128xf32, #tpu.memory_space<vmem>>, vector<128x128xf32>,
    %cst_5 = arith.constant dense<0.000000e+00> : vector<128xf32>
    %5 = vector.multi_reduction <add>, %3, %cst_5 [0] : vector<128x128xf32> to vector<128xf32>
    %6 = vector.shape_cast %5 : vector<128xf32> to vector<1x128xf32>
    %c0_6 = arith.constant 0 : index
    %c0_7 = arith.constant 0 : index
    %c0_8 = arith.constant 0 : index
    %7 = vector.load %arg4[%c0_6, %c0_7, %c0_8] : memref<1x2x128xf32, #tpu.memory_space<vmem>>, vector<1x1x128xf32>
    %8 = vector.shape_cast %7 : vector<1x1x128xf32> to vector<1x128xf32>
    %9 = vector.shape_cast %6 : vector<1x128xf32> to vector<1x1x128xf32>
    tpu.vector_store %arg4[%c0_6, %c0_7, %c0_8], %9 {strides = array<i32>} : memref<1x2x128xf32, #tpu.memory_space<vmem>>, vector<1x1x128xf32>,
    %10 = arith.mulf %3, %3 : vector<128x128xf32>
    %cst_9 = arith.constant dense<0.000000e+00> : vector<128xf32>
    %11 = vector.multi_reduction <add>, %10, %cst_9 [0] : vector<128x128xf32> to vector<128xf32>
    %12 = vector.shape_cast %11 : vector<128xf32> to vector<1x128xf32>
    %c0_10 = arith.constant 0 : index
    %c1 = arith.constant 1 : index
    %c0_11 = arith.constant 0 : index
    %13 = vector.load %arg4[%c0_10, %c1, %c0_11] : memref<1x2x128xf32, #tpu.memory_space<vmem>>, vector<1x1x128xf32>
    %14 = vector.shape_cast %13 : vector<1x1x128xf32> to vector<1x128xf32>
    %15 = vector.shape_cast %12 : vector<1x128xf32> to vector<1x1x128xf32>
    tpu.vector_store %arg4[%c0_10, %c1, %c0_11], %15 {strides = array<i32>} : memref<1x2x128xf32, #tpu.memory_space<vmem>>, vector<1x1x128xf32>,
    return
  }
  func.func @transform_0(%arg0: i32) -> (i32, i32) {
    %c0_i32 = arith.constant 0 : i32
    %c0_i32_0 = arith.constant 0 : i32
    return %arg0, %c0_i32 : i32, i32
  }
  func.func @transform_1(%arg0: i32) -> (i32, i32) {
    %c0_i32 = arith.constant 0 : i32
    %c0_i32_0 = arith.constant 0 : i32
    %c0_i32_1 = arith.constant 0 : i32
    return %c0_i32, %c0_i32_0 : i32, i32
  }
  func.func @transform_2(%arg0: i32) -> (i32, i32) {
    %c0_i32 = arith.constant 0 : i32
    %c0_i32_0 = arith.constant 0 : i32
    return %arg0, %c0_i32 : i32, i32
  }
  func.func @transform_3(%arg0: i32) -> (i32, i32, i32) {
    %c0_i32 = arith.constant 0 : i32
    %c0_i32_0 = arith.constant 0 : i32
    %c0_i32_1 = arith.constant 0 : i32
    return %arg0, %c0_i32, %c0_i32_0 : i32, i32, i32
  }
}

module attributes {stable_mosaic.version = 11 : i64} {
  func.func @_bn3_residual_kernel(%arg0: i32, %arg1: memref<128x128xf32, #tpu.memory_space<vmem>>, %arg2: memref<1x128xf32, #tpu.memory_space<vmem>>, %arg3: memref<1x128xf32, #tpu.memory_space<vmem>>, %arg4: memref<128x128xf32, #tpu.memory_space<vmem>>, %arg5: memref<128x128xf32, #tpu.memory_space<vmem>>) attributes {dimension_semantics = [#tpu.dimension_semantics<parallel>], iteration_bounds = array<i64: 4>, scalar_prefetch = 0 : i64, scratch_operands = 0 : i64, tpu.core_type = #tpu.core_type<tc>, window_params = [{transform_indices = @transform_0, window_bounds = array<i64: 128, 128>}, {pipeline_mode = #tpu.pipeline_mode<synchronous>, transform_indices = @transform_1, window_bounds = array<i64: 1, 128>}, {pipeline_mode = #tpu.pipeline_mode<synchronous>, transform_indices = @transform_2, window_bounds = array<i64: 1, 128>}, {transform_indices = @transform_3, window_bounds = array<i64: 128, 128>}, {transform_indices = @transform_4, window_bounds = array<i64: 128, 128>}]} {
    %c0 = arith.constant 0 : index
    %c0_0 = arith.constant 0 : index
    %0 = vector.load %arg1[%c0, %c0_0] : memref<128x128xf32, #tpu.memory_space<vmem>>, vector<128x128xf32>
    %c0_1 = arith.constant 0 : index
    %c0_2 = arith.constant 0 : index
    %1 = vector.load %arg2[%c0_1, %c0_2] : memref<1x128xf32, #tpu.memory_space<vmem>>, vector<1x128xf32>
    %2 = vector.broadcast %1 : vector<1x128xf32> to vector<128x128xf32>
    %3 = arith.mulf %0, %2 : vector<128x128xf32>
    %c0_3 = arith.constant 0 : index
    %c0_4 = arith.constant 0 : index
    %4 = vector.load %arg3[%c0_3, %c0_4] : memref<1x128xf32, #tpu.memory_space<vmem>>, vector<1x128xf32>
    %5 = vector.broadcast %4 : vector<1x128xf32> to vector<128x128xf32>
    %6 = arith.addf %3, %5 : vector<128x128xf32>
    %c0_5 = arith.constant 0 : index
    %c0_6 = arith.constant 0 : index
    %7 = vector.load %arg4[%c0_5, %c0_6] : memref<128x128xf32, #tpu.memory_space<vmem>>, vector<128x128xf32>
    %8 = arith.addf %6, %7 : vector<128x128xf32>
    %cst = arith.constant 0.000000e+00 : f32
    %9 = vector.broadcast %cst : f32 to vector<128x128xf32>
    %10 = arith.maximumf %8, %9 : vector<128x128xf32>
    %c0_7 = arith.constant 0 : index
    %c0_8 = arith.constant 0 : index
    %11 = vector.load %arg5[%c0_7, %c0_8] : memref<128x128xf32, #tpu.memory_space<vmem>>, vector<128x128xf32>
    tpu.vector_store %arg5[%c0_7, %c0_8], %10 {strides = array<i32>} : memref<128x128xf32, #tpu.memory_space<vmem>>, vector<128x128xf32>,
    return
  }
  func.func @transform_0(%arg0: i32) -> (i32, i32) {
    %c0_i32 = arith.constant 0 : i32
    %c0_i32_0 = arith.constant 0 : i32
    return %arg0, %c0_i32 : i32, i32
  }
  func.func @transform_1(%arg0: i32) -> (i32, i32) {
    %c0_i32 = arith.constant 0 : i32
    %c0_i32_0 = arith.constant 0 : i32
    %c0_i32_1 = arith.constant 0 : i32
    return %c0_i32, %c0_i32_0 : i32, i32
  }
  func.func @transform_2(%arg0: i32) -> (i32, i32) {
    %c0_i32 = arith.constant 0 : i32
    %c0_i32_0 = arith.constant 0 : i32
    %c0_i32_1 = arith.constant 0 : i32
    return %c0_i32, %c0_i32_0 : i32, i32
  }
  func.func @transform_3(%arg0: i32) -> (i32, i32) {
    %c0_i32 = arith.constant 0 : i32
    %c0_i32_0 = arith.constant 0 : i32
    return %arg0, %c0_i32 : i32, i32
  }
  func.func @transform_4(%arg0: i32) -> (i32, i32) {
    %c0_i32 = arith.constant 0 : i32
    %c0_i32_0 = arith.constant 0 : i32
    return %arg0, %c0_i32 : i32, i32
  }
}

module attributes {stable_mosaic.version = 11 : i64} {
  func.func @_conv2_kernel(%arg0: i32, %arg1: memref<1x18x18x128xf32, #tpu.memory_space<vmem>>, %arg2: memref<1x128xf32, #tpu.memory_space<vmem>>, %arg3: memref<1x128xf32, #tpu.memory_space<vmem>>, %arg4: memref<9x128x128xbf16, #tpu.memory_space<vmem>>, %arg5: memref<1x256x128xf32, #tpu.memory_space<vmem>>, %arg6: memref<1x2x128xf32, #tpu.memory_space<vmem>>) attributes {dimension_semantics = [#tpu.dimension_semantics<parallel>], iteration_bounds = array<i64: 2>, scalar_prefetch = 0 : i64, scratch_operands = 0 : i64, tpu.core_type = #tpu.core_type<tc>, window_params = [{transform_indices = @transform_0, window_bounds = array<i64: 1, 18, 18, 128>}, {pipeline_mode = #tpu.pipeline_mode<synchronous>, transform_indices = @transform_1, window_bounds = array<i64: 1, 128>}, {pipeline_mode = #tpu.pipeline_mode<synchronous>, transform_indices = @transform_2, window_bounds = array<i64: 1, 128>}, {pipeline_mode = #tpu.pipeline_mode<synchronous>, transform_indices = @transform_3, window_bounds = array<i64: 9, 128, 128>}, {transform_indices = @transform_4, window_bounds = array<i64: 1, 256, 128>}, {transform_indices = @transform_5, window_bounds = array<i64: 1, 2, 128>}]} {
    %c0 = arith.constant 0 : index
    %c0_0 = arith.constant 0 : index
    %0 = vector.load %arg2[%c0, %c0_0] : memref<1x128xf32, #tpu.memory_space<vmem>>, vector<1x128xf32>
    %1 = vector.shape_cast %0 : vector<1x128xf32> to vector<1x1x128xf32>
    %c0_1 = arith.constant 0 : index
    %c0_2 = arith.constant 0 : index
    %2 = vector.load %arg3[%c0_1, %c0_2] : memref<1x128xf32, #tpu.memory_space<vmem>>, vector<1x128xf32>
    %3 = vector.shape_cast %2 : vector<1x128xf32> to vector<1x1x128xf32>
    %c0_3 = arith.constant 0 : index
    %c0_4 = arith.constant 0 : index
    %c0_5 = arith.constant 0 : index
    %c0_6 = arith.constant 0 : index
    %4 = vector.load %arg1[%c0_3, %c0_4, %c0_5, %c0_6] : memref<1x18x18x128xf32, #tpu.memory_space<vmem>>, vector<1x18x18x128xf32>
    %5 = vector.shape_cast %4 : vector<1x18x18x128xf32> to vector<18x18x128xf32>
    %6 = vector.broadcast %1 : vector<1x1x128xf32> to vector<18x18x128xf32>
    %7 = arith.mulf %5, %6 : vector<18x18x128xf32>
    %8 = vector.broadcast %3 : vector<1x1x128xf32> to vector<18x18x128xf32>
    %9 = arith.addf %7, %8 : vector<18x18x128xf32>
    %cst = arith.constant 0.000000e+00 : f32
    %10 = vector.broadcast %cst : f32 to vector<18x18x128xf32>
    %11 = arith.maximumf %9, %10 : vector<18x18x128xf32>
    %12 = tpu.iota {dimensions = array<i32: 0>} : vector<18x18x128xi32>
    %13 = tpu.iota {dimensions = array<i32: 1>} : vector<18x18x128xi32>
    %c1_i32 = arith.constant 1 : i32
    %14 = vector.broadcast %c1_i32 : i32 to vector<18x18x128xi32>
    %15 = arith.cmpi sge, %12, %14 : vector<18x18x128xi32>
    %c16_i32 = arith.constant 16 : i32
    %16 = vector.broadcast %c16_i32 : i32 to vector<18x18x128xi32>
    %17 = arith.cmpi sle, %12, %16 : vector<18x18x128xi32>
    %18 = arith.andi %15, %17 : vector<18x18x128xi1>
    %c1_i32_7 = arith.constant 1 : i32
    %19 = vector.broadcast %c1_i32_7 : i32 to vector<18x18x128xi32>
    %20 = arith.cmpi sge, %13, %19 : vector<18x18x128xi32>
    %21 = arith.andi %18, %20 : vector<18x18x128xi1>
    %c16_i32_8 = arith.constant 16 : i32
    %22 = vector.broadcast %c16_i32_8 : i32 to vector<18x18x128xi32>
    %23 = arith.cmpi sle, %13, %22 : vector<18x18x128xi32>
    %24 = arith.andi %21, %23 : vector<18x18x128xi1>
    %cst_9 = arith.constant 0.000000e+00 : f32
    %25 = vector.broadcast %cst_9 : f32 to vector<18x18x128xf32>
    %26 = arith.select %24, %11, %25 : vector<18x18x128xi1>, vector<18x18x128xf32>
    %cst_10 = arith.constant 0.000000e+00 : f32
    %27 = vector.broadcast %cst_10 : f32 to vector<256x128xf32>
    %28 = vector.extract_strided_slice %26 {offsets = [0, 0, 0], sizes = [18, 16, 128], strides = [1, 1, 1]} : vector<18x18x128xf32> to vector<18x16x128xf32>
    %29 = vector.shape_cast %28 : vector<18x16x128xf32> to vector<288x128xf32>
    %30 = vector.extract_strided_slice %29 {offsets = [0, 0], sizes = [256, 128], strides = [1, 1]} : vector<288x128xf32> to vector<256x128xf32>
    %31 = arith.truncf %30 : vector<256x128xf32> to vector<256x128xbf16>
    %c0_11 = arith.constant 0 : index
    %c0_12 = arith.constant 0 : index
    %c0_13 = arith.constant 0 : index
    %32 = vector.load %arg4[%c0_11, %c0_12, %c0_13] : memref<9x128x128xbf16, #tpu.memory_space<vmem>>, vector<1x128x128xbf16>
    %33 = vector.shape_cast %32 : vector<1x128x128xbf16> to vector<128x128xbf16>
    %cst_14 = arith.constant dense<0.000000e+00> : vector<256x128xf32>
    %34 = tpu.matmul %31, %33, %cst_14 {dimension_numbers = #tpu.dot_dimension_numbers<[1], [0], [0], [1], [0, 0, 1, 1], [], []>} : vector<256x128xbf16>, vector<128x128xbf16>, vector<256x128xf32> -> vector<256x128xf32>
    %35 = arith.addf %27, %34 : vector<256x128xf32>
    %36 = vector.extract_strided_slice %29 {offsets = [16, 0], sizes = [256, 128], strides = [1, 1]} : vector<288x128xf32> to vector<256x128xf32>
    %37 = arith.truncf %36 : vector<256x128xf32> to vector<256x128xbf16>
    %c3 = arith.constant 3 : index
    %c0_15 = arith.constant 0 : index
    %c0_16 = arith.constant 0 : index
    %38 = vector.load %arg4[%c3, %c0_15, %c0_16] : memref<9x128x128xbf16, #tpu.memory_space<vmem>>, vector<1x128x128xbf16>
    %39 = vector.shape_cast %38 : vector<1x128x128xbf16> to vector<128x128xbf16>
    %cst_17 = arith.constant dense<0.000000e+00> : vector<256x128xf32>
    %40 = tpu.matmul %37, %39, %cst_17 {dimension_numbers = #tpu.dot_dimension_numbers<[1], [0], [0], [1], [0, 0, 1, 1], [], []>} : vector<256x128xbf16>, vector<128x128xbf16>, vector<256x128xf32> -> vector<256x128xf32>
    %41 = arith.addf %35, %40 : vector<256x128xf32>
    %42 = vector.extract_strided_slice %29 {offsets = [32, 0], sizes = [256, 128], strides = [1, 1]} : vector<288x128xf32> to vector<256x128xf32>
    %43 = arith.truncf %42 : vector<256x128xf32> to vector<256x128xbf16>
    %c6 = arith.constant 6 : index
    %c0_18 = arith.constant 0 : index
    %c0_19 = arith.constant 0 : index
    %44 = vector.load %arg4[%c6, %c0_18, %c0_19] : memref<9x128x128xbf16, #tpu.memory_space<vmem>>, vector<1x128x128xbf16>
    %45 = vector.shape_cast %44 : vector<1x128x128xbf16> to vector<128x128xbf16>
    %cst_20 = arith.constant dense<0.000000e+00> : vector<256x128xf32>
    %46 = tpu.matmul %43, %45, %cst_20 {dimension_numbers = #tpu.dot_dimension_numbers<[1], [0], [0], [1], [0, 0, 1, 1], [], []>} : vector<256x128xbf16>, vector<128x128xbf16>, vector<256x128xf32> -> vector<256x128xf32>
    %47 = arith.addf %41, %46 : vector<256x128xf32>
    %48 = vector.extract_strided_slice %26 {offsets = [0, 1, 0], sizes = [18, 16, 128], strides = [1, 1, 1]} : vector<18x18x128xf32> to vector<18x16x128xf32>
    %49 = vector.shape_cast %48 : vector<18x16x128xf32> to vector<288x128xf32>
    %50 = vector.extract_strided_slice %49 {offsets = [0, 0], sizes = [256, 128], strides = [1, 1]} : vector<288x128xf32> to vector<256x128xf32>
    %51 = arith.truncf %50 : vector<256x128xf32> to vector<256x128xbf16>
    %c1 = arith.constant 1 : index
    %c0_21 = arith.constant 0 : index
    %c0_22 = arith.constant 0 : index
    %52 = vector.load %arg4[%c1, %c0_21, %c0_22] : memref<9x128x128xbf16, #tpu.memory_space<vmem>>, vector<1x128x128xbf16>
    %53 = vector.shape_cast %52 : vector<1x128x128xbf16> to vector<128x128xbf16>
    %cst_23 = arith.constant dense<0.000000e+00> : vector<256x128xf32>
    %54 = tpu.matmul %51, %53, %cst_23 {dimension_numbers = #tpu.dot_dimension_numbers<[1], [0], [0], [1], [0, 0, 1, 1], [], []>} : vector<256x128xbf16>, vector<128x128xbf16>, vector<256x128xf32> -> vector<256x128xf32>
    %55 = arith.addf %47, %54 : vector<256x128xf32>
    %56 = vector.extract_strided_slice %49 {offsets = [16, 0], sizes = [256, 128], strides = [1, 1]} : vector<288x128xf32> to vector<256x128xf32>
    %57 = arith.truncf %56 : vector<256x128xf32> to vector<256x128xbf16>
    %c4 = arith.constant 4 : index
    %c0_24 = arith.constant 0 : index
    %c0_25 = arith.constant 0 : index
    %58 = vector.load %arg4[%c4, %c0_24, %c0_25] : memref<9x128x128xbf16, #tpu.memory_space<vmem>>, vector<1x128x128xbf16>
    %59 = vector.shape_cast %58 : vector<1x128x128xbf16> to vector<128x128xbf16>
    %cst_26 = arith.constant dense<0.000000e+00> : vector<256x128xf32>
    %60 = tpu.matmul %57, %59, %cst_26 {dimension_numbers = #tpu.dot_dimension_numbers<[1], [0], [0], [1], [0, 0, 1, 1], [], []>} : vector<256x128xbf16>, vector<128x128xbf16>, vector<256x128xf32> -> vector<256x128xf32>
    %61 = arith.addf %55, %60 : vector<256x128xf32>
    %62 = vector.extract_strided_slice %49 {offsets = [32, 0], sizes = [256, 128], strides = [1, 1]} : vector<288x128xf32> to vector<256x128xf32>
    %63 = arith.truncf %62 : vector<256x128xf32> to vector<256x128xbf16>
    %c7 = arith.constant 7 : index
    %c0_27 = arith.constant 0 : index
    %c0_28 = arith.constant 0 : index
    %64 = vector.load %arg4[%c7, %c0_27, %c0_28] : memref<9x128x128xbf16, #tpu.memory_space<vmem>>, vector<1x128x128xbf16>
    %65 = vector.shape_cast %64 : vector<1x128x128xbf16> to vector<128x128xbf16>
    %cst_29 = arith.constant dense<0.000000e+00> : vector<256x128xf32>
    %66 = tpu.matmul %63, %65, %cst_29 {dimension_numbers = #tpu.dot_dimension_numbers<[1], [0], [0], [1], [0, 0, 1, 1], [], []>} : vector<256x128xbf16>, vector<128x128xbf16>, vector<256x128xf32> -> vector<256x128xf32>
    %67 = arith.addf %61, %66 : vector<256x128xf32>
    %68 = vector.extract_strided_slice %26 {offsets = [0, 2, 0], sizes = [18, 16, 128], strides = [1, 1, 1]} : vector<18x18x128xf32> to vector<18x16x128xf32>
    %69 = vector.shape_cast %68 : vector<18x16x128xf32> to vector<288x128xf32>
    %70 = vector.extract_strided_slice %69 {offsets = [0, 0], sizes = [256, 128], strides = [1, 1]} : vector<288x128xf32> to vector<256x128xf32>
    %71 = arith.truncf %70 : vector<256x128xf32> to vector<256x128xbf16>
    %c2 = arith.constant 2 : index
    %c0_30 = arith.constant 0 : index
    %c0_31 = arith.constant 0 : index
    %72 = vector.load %arg4[%c2, %c0_30, %c0_31] : memref<9x128x128xbf16, #tpu.memory_space<vmem>>, vector<1x128x128xbf16>
    %73 = vector.shape_cast %72 : vector<1x128x128xbf16> to vector<128x128xbf16>
    %cst_32 = arith.constant dense<0.000000e+00> : vector<256x128xf32>
    %74 = tpu.matmul %71, %73, %cst_32 {dimension_numbers = #tpu.dot_dimension_numbers<[1], [0], [0], [1], [0, 0, 1, 1], [], []>} : vector<256x128xbf16>, vector<128x128xbf16>, vector<256x128xf32> -> vector<256x128xf32>
    %75 = arith.addf %67, %74 : vector<256x128xf32>
    %76 = vector.extract_strided_slice %69 {offsets = [16, 0], sizes = [256, 128], strides = [1, 1]} : vector<288x128xf32> to vector<256x128xf32>
    %77 = arith.truncf %76 : vector<256x128xf32> to vector<256x128xbf16>
    %c5 = arith.constant 5 : index
    %c0_33 = arith.constant 0 : index
    %c0_34 = arith.constant 0 : index
    %78 = vector.load %arg4[%c5, %c0_33, %c0_34] : memref<9x128x128xbf16, #tpu.memory_space<vmem>>, vector<1x128x128xbf16>
    %79 = vector.shape_cast %78 : vector<1x128x128xbf16> to vector<128x128xbf16>
    %cst_35 = arith.constant dense<0.000000e+00> : vector<256x128xf32>
    %80 = tpu.matmul %77, %79, %cst_35 {dimension_numbers = #tpu.dot_dimension_numbers<[1], [0], [0], [1], [0, 0, 1, 1], [], []>} : vector<256x128xbf16>, vector<128x128xbf16>, vector<256x128xf32> -> vector<256x128xf32>
    %81 = arith.addf %75, %80 : vector<256x128xf32>
    %82 = vector.extract_strided_slice %69 {offsets = [32, 0], sizes = [256, 128], strides = [1, 1]} : vector<288x128xf32> to vector<256x128xf32>
    %83 = arith.truncf %82 : vector<256x128xf32> to vector<256x128xbf16>
    %c8 = arith.constant 8 : index
    %c0_36 = arith.constant 0 : index
    %c0_37 = arith.constant 0 : index
    %84 = vector.load %arg4[%c8, %c0_36, %c0_37] : memref<9x128x128xbf16, #tpu.memory_space<vmem>>, vector<1x128x128xbf16>
    %85 = vector.shape_cast %84 : vector<1x128x128xbf16> to vector<128x128xbf16>
    %cst_38 = arith.constant dense<0.000000e+00> : vector<256x128xf32>
    %86 = tpu.matmul %83, %85, %cst_38 {dimension_numbers = #tpu.dot_dimension_numbers<[1], [0], [0], [1], [0, 0, 1, 1], [], []>} : vector<256x128xbf16>, vector<128x128xbf16>, vector<256x128xf32> -> vector<256x128xf32>
    %87 = arith.addf %81, %86 : vector<256x128xf32>
    %c0_39 = arith.constant 0 : index
    %c0_40 = arith.constant 0 : index
    %c0_41 = arith.constant 0 : index
    %88 = vector.load %arg5[%c0_39, %c0_40, %c0_41] : memref<1x256x128xf32, #tpu.memory_space<vmem>>, vector<1x256x128xf32>
    %89 = vector.shape_cast %88 : vector<1x256x128xf32> to vector<256x128xf32>
    %90 = vector.shape_cast %87 : vector<256x128xf32> to vector<1x256x128xf32>
    tpu.vector_store %arg5[%c0_39, %c0_40, %c0_41], %90 {strides = array<i32>} : memref<1x256x128xf32, #tpu.memory_space<vmem>>, vector<1x256x128xf32>,
    %cst_42 = arith.constant dense<0.000000e+00> : vector<128xf32>
    %91 = vector.multi_reduction <add>, %87, %cst_42 [0] : vector<256x128xf32> to vector<128xf32>
    %92 = vector.shape_cast %91 : vector<128xf32> to vector<1x128xf32>
    %c0_43 = arith.constant 0 : index
    %c0_44 = arith.constant 0 : index
    %c0_45 = arith.constant 0 : index
    %93 = vector.load %arg6[%c0_43, %c0_44, %c0_45] : memref<1x2x128xf32, #tpu.memory_space<vmem>>, vector<1x1x128xf32>
    %94 = vector.shape_cast %93 : vector<1x1x128xf32> to vector<1x128xf32>
    %95 = vector.shape_cast %92 : vector<1x128xf32> to vector<1x1x128xf32>
    tpu.vector_store %arg6[%c0_43, %c0_44, %c0_45], %95 {strides = array<i32>} : memref<1x2x128xf32, #tpu.memory_space<vmem>>, vector<1x1x128xf32>,
    %96 = arith.mulf %87, %87 : vector<256x128xf32>
    %cst_46 = arith.constant dense<0.000000e+00> : vector<128xf32>
    %97 = vector.multi_reduction <add>, %96, %cst_46 [0] : vector<256x128xf32> to vector<128xf32>
    %98 = vector.shape_cast %97 : vector<128xf32> to vector<1x128xf32>
    %c0_47 = arith.constant 0 : index
    %c1_48 = arith.constant 1 : index
    %c0_49 = arith.constant 0 : index
    %99 = vector.load %arg6[%c0_47, %c1_48, %c0_49] : memref<1x2x128xf32, #tpu.memory_space<vmem>>, vector<1x1x128xf32>
    %100 = vector.shape_cast %99 : vector<1x1x128xf32> to vector<1x128xf32>
    %101 = vector.shape_cast %98 : vector<1x128xf32> to vector<1x1x128xf32>
    tpu.vector_store %arg6[%c0_47, %c1_48, %c0_49], %101 {strides = array<i32>} : memref<1x2x128xf32, #tpu.memory_space<vmem>>, vector<1x1x128xf32>,
    return
  }
  func.func @transform_0(%arg0: i32) -> (i32, i32, i32, i32) {
    %c0_i32 = arith.constant 0 : i32
    %c0_i32_0 = arith.constant 0 : i32
    %c0_i32_1 = arith.constant 0 : i32
    %c0_i32_2 = arith.constant 0 : i32
    return %arg0, %c0_i32, %c0_i32_0, %c0_i32_1 : i32, i32, i32, i32
  }
  func.func @transform_1(%arg0: i32) -> (i32, i32) {
    %c0_i32 = arith.constant 0 : i32
    %c0_i32_0 = arith.constant 0 : i32
    %c0_i32_1 = arith.constant 0 : i32
    return %c0_i32, %c0_i32_0 : i32, i32
  }
  func.func @transform_2(%arg0: i32) -> (i32, i32) {
    %c0_i32 = arith.constant 0 : i32
    %c0_i32_0 = arith.constant 0 : i32
    %c0_i32_1 = arith.constant 0 : i32
    return %c0_i32, %c0_i32_0 : i32, i32
  }
  func.func @transform_3(%arg0: i32) -> (i32, i32, i32) {
    %c0_i32 = arith.constant 0 : i32
    %c0_i32_0 = arith.constant 0 : i32
    %c0_i32_1 = arith.constant 0 : i32
    %c0_i32_2 = arith.constant 0 : i32
    return %c0_i32, %c0_i32_0, %c0_i32_1 : i32, i32, i32
  }
  func.func @transform_4(%arg0: i32) -> (i32, i32, i32) {
    %c0_i32 = arith.constant 0 : i32
    %c0_i32_0 = arith.constant 0 : i32
    %c0_i32_1 = arith.constant 0 : i32
    return %arg0, %c0_i32, %c0_i32_0 : i32, i32, i32
  }
  func.func @transform_5(%arg0: i32) -> (i32, i32, i32) {
    %c0_i32 = arith.constant 0 : i32
    %c0_i32_0 = arith.constant 0 : i32
    %c0_i32_1 = arith.constant 0 : i32
    return %arg0, %c0_i32, %c0_i32_0 : i32, i32, i32
  }
}

module attributes {stable_mosaic.version = 11 : i64} {
  func.func @_conv3_kernel(%arg0: i32, %arg1: memref<128x128xf32, #tpu.memory_space<vmem>>, %arg2: memref<1x128xf32, #tpu.memory_space<vmem>>, %arg3: memref<1x128xf32, #tpu.memory_space<vmem>>, %arg4: memref<128x128xbf16, #tpu.memory_space<vmem>>, %arg5: memref<128x128xf32, #tpu.memory_space<vmem>>, %arg6: memref<1x2x128xf32, #tpu.memory_space<vmem>>) attributes {dimension_semantics = [#tpu.dimension_semantics<parallel>], iteration_bounds = array<i64: 4>, scalar_prefetch = 0 : i64, scratch_operands = 0 : i64, tpu.core_type = #tpu.core_type<tc>, window_params = [{transform_indices = @transform_0, window_bounds = array<i64: 128, 128>}, {pipeline_mode = #tpu.pipeline_mode<synchronous>, transform_indices = @transform_1, window_bounds = array<i64: 1, 128>}, {pipeline_mode = #tpu.pipeline_mode<synchronous>, transform_indices = @transform_2, window_bounds = array<i64: 1, 128>}, {pipeline_mode = #tpu.pipeline_mode<synchronous>, transform_indices = @transform_3, window_bounds = array<i64: 128, 128>}, {transform_indices = @transform_4, window_bounds = array<i64: 128, 128>}, {transform_indices = @transform_5, window_bounds = array<i64: 1, 2, 128>}]} {
    %c0 = arith.constant 0 : index
    %c0_0 = arith.constant 0 : index
    %0 = vector.load %arg1[%c0, %c0_0] : memref<128x128xf32, #tpu.memory_space<vmem>>, vector<128x128xf32>
    %c0_1 = arith.constant 0 : index
    %c0_2 = arith.constant 0 : index
    %1 = vector.load %arg2[%c0_1, %c0_2] : memref<1x128xf32, #tpu.memory_space<vmem>>, vector<1x128xf32>
    %2 = vector.broadcast %1 : vector<1x128xf32> to vector<128x128xf32>
    %3 = arith.mulf %0, %2 : vector<128x128xf32>
    %c0_3 = arith.constant 0 : index
    %c0_4 = arith.constant 0 : index
    %4 = vector.load %arg3[%c0_3, %c0_4] : memref<1x128xf32, #tpu.memory_space<vmem>>, vector<1x128xf32>
    %5 = vector.broadcast %4 : vector<1x128xf32> to vector<128x128xf32>
    %6 = arith.addf %3, %5 : vector<128x128xf32>
    %cst = arith.constant 0.000000e+00 : f32
    %7 = vector.broadcast %cst : f32 to vector<128x128xf32>
    %8 = arith.maximumf %6, %7 : vector<128x128xf32>
    %9 = arith.truncf %8 : vector<128x128xf32> to vector<128x128xbf16>
    %c0_5 = arith.constant 0 : index
    %c0_6 = arith.constant 0 : index
    %10 = vector.load %arg4[%c0_5, %c0_6] : memref<128x128xbf16, #tpu.memory_space<vmem>>, vector<128x128xbf16>
    %cst_7 = arith.constant dense<0.000000e+00> : vector<128x128xf32>
    %11 = tpu.matmul %9, %10, %cst_7 {dimension_numbers = #tpu.dot_dimension_numbers<[1], [0], [0], [1], [0, 0, 1, 1], [], []>} : vector<128x128xbf16>, vector<128x128xbf16>, vector<128x128xf32> -> vector<128x128xf32>
    %c0_8 = arith.constant 0 : index
    %c0_9 = arith.constant 0 : index
    %12 = vector.load %arg5[%c0_8, %c0_9] : memref<128x128xf32, #tpu.memory_space<vmem>>, vector<128x128xf32>
    tpu.vector_store %arg5[%c0_8, %c0_9], %11 {strides = array<i32>} : memref<128x128xf32, #tpu.memory_space<vmem>>, vector<128x128xf32>,
    %cst_10 = arith.constant dense<0.000000e+00> : vector<128xf32>
    %13 = vector.multi_reduction <add>, %11, %cst_10 [0] : vector<128x128xf32> to vector<128xf32>
    %14 = vector.shape_cast %13 : vector<128xf32> to vector<1x128xf32>
    %c0_11 = arith.constant 0 : index
    %c0_12 = arith.constant 0 : index
    %c0_13 = arith.constant 0 : index
    %15 = vector.load %arg6[%c0_11, %c0_12, %c0_13] : memref<1x2x128xf32, #tpu.memory_space<vmem>>, vector<1x1x128xf32>
    %16 = vector.shape_cast %15 : vector<1x1x128xf32> to vector<1x128xf32>
    %17 = vector.shape_cast %14 : vector<1x128xf32> to vector<1x1x128xf32>
    tpu.vector_store %arg6[%c0_11, %c0_12, %c0_13], %17 {strides = array<i32>} : memref<1x2x128xf32, #tpu.memory_space<vmem>>, vector<1x1x128xf32>,
    %18 = arith.mulf %11, %11 : vector<128x128xf32>
    %cst_14 = arith.constant dense<0.000000e+00> : vector<128xf32>
    %19 = vector.multi_reduction <add>, %18, %cst_14 [0] : vector<128x128xf32> to vector<128xf32>
    %20 = vector.shape_cast %19 : vector<128xf32> to vector<1x128xf32>
    %c0_15 = arith.constant 0 : index
    %c1 = arith.constant 1 : index
    %c0_16 = arith.constant 0 : index
    %21 = vector.load %arg6[%c0_15, %c1, %c0_16] : memref<1x2x128xf32, #tpu.memory_space<vmem>>, vector<1x1x128xf32>
    %22 = vector.shape_cast %21 : vector<1x1x128xf32> to vector<1x128xf32>
    %23 = vector.shape_cast %20 : vector<1x128xf32> to vector<1x1x128xf32>
    tpu.vector_store %arg6[%c0_15, %c1, %c0_16], %23 {strides = array<i32>} : memref<1x2x128xf32, #tpu.memory_space<vmem>>, vector<1x1x128xf32>,
    return
  }
  func.func @transform_0(%arg0: i32) -> (i32, i32) {
    %c0_i32 = arith.constant 0 : i32
    %c0_i32_0 = arith.constant 0 : i32
    return %arg0, %c0_i32 : i32, i32
  }
  func.func @transform_1(%arg0: i32) -> (i32, i32) {
    %c0_i32 = arith.constant 0 : i32
    %c0_i32_0 = arith.constant 0 : i32
    %c0_i32_1 = arith.constant 0 : i32
    return %c0_i32, %c0_i32_0 : i32, i32
  }
  func.func @transform_2(%arg0: i32) -> (i32, i32) {
    %c0_i32 = arith.constant 0 : i32
    %c0_i32_0 = arith.constant 0 : i32
    %c0_i32_1 = arith.constant 0 : i32
    return %c0_i32, %c0_i32_0 : i32, i32
  }
  func.func @transform_3(%arg0: i32) -> (i32, i32) {
    %c0_i32 = arith.constant 0 : i32
    %c0_i32_0 = arith.constant 0 : i32
    %c0_i32_1 = arith.constant 0 : i32
    return %c0_i32, %c0_i32_0 : i32, i32
  }
  func.func @transform_4(%arg0: i32) -> (i32, i32) {
    %c0_i32 = arith.constant 0 : i32
    %c0_i32_0 = arith.constant 0 : i32
    return %arg0, %c0_i32 : i32, i32
  }
  func.func @transform_5(%arg0: i32) -> (i32, i32, i32) {
    %c0_i32 = arith.constant 0 : i32
    %c0_i32_0 = arith.constant 0 : i32
    %c0_i32_1 = arith.constant 0 : i32
    return %arg0, %c0_i32, %c0_i32_0 : i32, i32, i32
  }
}

</mosaic_0001>

<llo_original>
// kernel: bottleneck_forward.7
$region0: #{bottleneck_forward.7}
  #allocation0 [shape = 'u32[]', space=smem, size = 0x4, offset = 0x4, fixed_abs, tag = 'smem constant byte address 0x4 - core index']
  #allocation1 [shape = 'u32[144,128]{1,0:T(1,128)}', space=vmem, size = 0x12000, scoped, tag = 'internal scratch']
  %s0 = inlined_call_operand.vmem [shape: f32[512,128], index: 0, kind: input, shape index: {}]
  %s1 = inlined_call_operand.vmem [shape: f32[1,128], index: 1, kind: input, shape index: {}]
  %s2 = inlined_call_operand.vmem [shape: f32[1,128], index: 2, kind: input, shape index: {}]
  %s3 = inlined_call_operand.vmem [shape: f32[512,128], index: 3, kind: input, shape index: {}]
  %s4 = inlined_call_operand.vmem [shape: f32[512,128], index: 4, kind: output, shape index: {}]
  %s5 = sld [smem:[#allocation0]]
  $region49: #{bottleneck_forward.7} parent=0
    _
  %s7 = ssub.s32 1, %s5
  %s8 = scalar_select 0, %s7, %s5
  loop: start=0, step=1, limit=6
  $region2: #{bottleneck_forward.7} parent=0 // loop_pre_header
    _
  $region3: #{bottleneck_forward.7} parent=0 // loop_header
    %s10 = sphi 0, %s14
    %p11 = scmp.ge.s32.totalorder %s10, 6
    %s20 = sphi 0, %s22
    %s23 = sphi 0, %s20
    %s24 = sphi 0, %s23
    %s40 = sphi 0, %s24
    %s44 = sphi 0, %s44
    %s46 = sphi 0, %s44
    %s47 = sphi 0, %s46
    %s61 = sphi 0, %s47
    %s65 = sphi 0, %s65
    %s67 = sphi 0, %s65
    %s68 = sphi 0, %s67
    %s82 = sphi 0, %s68
    %s88 = sphi 0, %s90
    %s91 = sphi 0, %s88
    %s92 = sphi 0, %s91
    %s108 = sphi 0, %s92
    %s114 = sphi 0, %s116
    %s117 = sphi 0, %s114
    %s118 = sphi 0, %s117
    %s134 = sphi 0, %s118
  $region4: #{bottleneck_forward.7} parent=0 // loop_header_branch
    %13 = sbr.rel (%p11) target = $region8
  $region5: #{bottleneck_forward.7} parent=0 // loop_body
    %s15 = ssub.s32 %s10, 1
    %s16 = ssub.s32 %s10, 2
    %s17 = sadd.s32 %s10, 1
    %s18 = ssub.s32 %s10, %s17
    %p19 = scmp.eq.s32.totalorder %s18, 0
    %s21 = sadd.s32 %s20, 1
    %s22 = scalar_select %p19, %s20, %s21
    %p25 = pneg %p19
    %p26 = scmp.eq.s32.totalorder %s10, 3
    %p27 = por %p25, %p26
    %p28 = scmp.ne.s32.totalorder %s20, %s23
    %p29 = scmp.eq.s32.totalorder %s10, 0
    %p30 = por %p28, %p29
    %p31 = scmp.ne.s32.totalorder %s20, %s23
    %p32 = scmp.eq.s32.totalorder %s15, 3
    %p33 = por %p31, %p32
    %p34 = scmp.ne.s32.totalorder %s23, %s24
    %p35 = scmp.eq.s32.totalorder %s15, 0
    %p36 = por %p34, %p35
    %p37 = scmp.ne.s32.totalorder %s23, %s24
    %p38 = scmp.eq.s32.totalorder %s16, 3
    %p39 = por %p37, %p38
    %p41 = scmp.ne.s32.totalorder %s24, %s40
    %p42 = scmp.eq.s32.totalorder %s16, 0
    %p43 = por %p41, %p42
    %s45 = sadd.s32 %s44, 1
    %p48 = scmp.eq.s32.totalorder %s10, 3
    %p49 = scmp.ne.s32.totalorder %s44, %s46
    %p50 = scmp.eq.s32.totalorder %s10, 0
    %p51 = por %p49, %p50
    %p52 = scmp.ne.s32.totalorder %s44, %s46
    %p53 = scmp.eq.s32.totalorder %s15, 3
    %p54 = por %p52, %p53
    %p55 = scmp.ne.s32.totalorder %s46, %s47
    %p56 = scmp.eq.s32.totalorder %s15, 0
    %p57 = por %p55, %p56
    %p58 = scmp.ne.s32.totalorder %s46, %s47
    %p59 = scmp.eq.s32.totalorder %s16, 3
    %p60 = por %p58, %p59
    %p62 = scmp.ne.s32.totalorder %s47, %s61
    %p63 = scmp.eq.s32.totalorder %s16, 0
    %p64 = por %p62, %p63
    %s66 = sadd.s32 %s65, 1
    %p69 = scmp.eq.s32.totalorder %s10, 3
    %p70 = scmp.ne.s32.totalorder %s65, %s67
    %p71 = scmp.eq.s32.totalorder %s10, 0
    %p72 = por %p70, %p71
    %p73 = scmp.ne.s32.totalorder %s65, %s67
    %p74 = scmp.eq.s32.totalorder %s15, 3
    %p75 = por %p73, %p74
    %p76 = scmp.ne.s32.totalorder %s67, %s68
    %p77 = scmp.eq.s32.totalorder %s15, 0
    %p78 = por %p76, %p77
    %p79 = scmp.ne.s32.totalorder %s67, %s68
    %p80 = scmp.eq.s32.totalorder %s16, 3
    %p81 = por %p79, %p80
    %p83 = scmp.ne.s32.totalorder %s68, %s82
    %p84 = scmp.eq.s32.totalorder %s16, 0
    %p85 = por %p83, %p84
    %s86 = ssub.s32 %s10, %s17
    %p87 = scmp.eq.s32.totalorder %s86, 0
    %s89 = sadd.s32 %s88, 1
    %s90 = scalar_select %p87, %s88, %s89
    %p93 = pneg %p87
    %p94 = scmp.eq.s32.totalorder %s10, 3
    %p95 = por %p93, %p94
    %p96 = scmp.ne.s32.totalorder %s88, %s91
    %p97 = scmp.eq.s32.totalorder %s10, 0
    %p98 = por %p96, %p97
    %p99 = scmp.ne.s32.totalorder %s88, %s91
    %p100 = scmp.eq.s32.totalorder %s15, 3
    %p101 = por %p99, %p100
    %p102 = scmp.ne.s32.totalorder %s91, %s92
    %p103 = scmp.eq.s32.totalorder %s15, 0
    %p104 = por %p102, %p103
    %p105 = scmp.ne.s32.totalorder %s91, %s92
    %p106 = scmp.eq.s32.totalorder %s16, 3
    %p107 = por %p105, %p106
    %p109 = scmp.ne.s32.totalorder %s92, %s108
    %p110 = scmp.eq.s32.totalorder %s16, 0
    %p111 = por %p109, %p110
    %s112 = ssub.s32 %s10, %s17
    %p113 = scmp.eq.s32.totalorder %s112, 0
    %s115 = sadd.s32 %s114, 1
    %s116 = scalar_select %p113, %s114, %s115
    %p119 = pneg %p113
    %p120 = scmp.eq.s32.totalorder %s10, 3
    %p121 = por %p119, %p120
    %p122 = scmp.ne.s32.totalorder %s114, %s117
    %p123 = scmp.eq.s32.totalorder %s10, 0
    %p124 = por %p122, %p123
    %p125 = scmp.ne.s32.totalorder %s114, %s117
    %p126 = scmp.eq.s32.totalorder %s15, 3
    %p127 = por %p125, %p126
    %p128 = scmp.ne.s32.totalorder %s117, %s118
    %p129 = scmp.eq.s32.totalorder %s15, 0
    %p130 = por %p128, %p129
    %p131 = scmp.ne.s32.totalorder %s117, %s118
    %p132 = scmp.eq.s32.totalorder %s16, 3
    %p133 = por %p131, %p132
    %p135 = scmp.ne.s32.totalorder %s118, %s134
    %p136 = scmp.eq.s32.totalorder %s16, 0
    %p137 = por %p135, %p136
    %p138 = scmp.le.s32.totalorder 1, %s10
    %p139 = scmp.lt.s32.totalorder %s10, 5
    %p140 = pnand %p138, %p139
    %p141 = pneg %p140
    // Predicated region
    $region9: #{bottleneck_forward.7} parent=5 // pred_check
      _
    $region10: #{bottleneck_forward.7} parent=5 // pred_check_branch
      %143 = sbr.rel (%p140) target = $region12
    $region11: #{bottleneck_forward.7} parent=5 // pred_region
      %s144 = ssub.s32 %s10, 1
      // Predicated region
      $region13: #{bottleneck_forward.7} parent=11 // pred_check
        %p145 = pneg %p57
      $region14: #{bottleneck_forward.7} parent=11 // pred_check_branch
        %147 = sbr.rel (%p145) target = $region16
      $region15: #{bottleneck_forward.7} parent=11 // pred_region
        _
      $region16: #{bottleneck_forward.7} parent=11 // pred_fallthru
        _
      // Predicated region
      $region17: #{bottleneck_forward.7} parent=11 // pred_check
        %p148 = pneg %p78
      $region18: #{bottleneck_forward.7} parent=11 // pred_check_branch
        %150 = sbr.rel (%p148) target = $region20
      $region19: #{bottleneck_forward.7} parent=11 // pred_region
        _
      $region20: #{bottleneck_forward.7} parent=11 // pred_fallthru
        _
    $region12: #{bottleneck_forward.7} parent=5 // pred_fallthru
      _
    %p151 = scmp.lt.s32.totalorder %s10, 4
    // Predicated region
    $region21: #{bottleneck_forward.7} parent=5 // pred_check
      %p152 = pneg %p151
    $region22: #{bottleneck_forward.7} parent=5 // pred_check_branch
      %154 = sbr.rel (%p152) target = $region24
    $region23: #{bottleneck_forward.7} parent=5 // pred_region
      // Predicated region
      $region25: #{bottleneck_forward.7} parent=23 // pred_check
        %p155 = pneg %p30
      $region26: #{bottleneck_forward.7} parent=23 // pred_check_branch
        %157 = sbr.rel (%p155) target = $region28
      $region27: #{bottleneck_forward.7} parent=23 // pred_region
        %s158 = smul.u32 16, %s10
        %p159 = scmp.lt.s32.totalorder %s158, 63
        %s160 = scalar_select %p159, %s158, 63
        %s161 = smul.addr %s160, 8
        %s162 = scalar_lea.vmem %s0, %s161
        %s163 = smul.u32 16, %s10
      $region28: #{bottleneck_forward.7} parent=23 // pred_fallthru
        _
      // Predicated region
      $region29: #{bottleneck_forward.7} parent=23 // pred_check
        %p164 = pneg %p98
      $region30: #{bottleneck_forward.7} parent=23 // pred_check_branch
        %166 = sbr.rel (%p164) target = $region32
      $region31: #{bottleneck_forward.7} parent=23 // pred_region
        %s167 = smul.u32 16, %s10
        %p168 = scmp.lt.s32.totalorder %s167, 63
        %s169 = scalar_select %p168, %s167, 63
        %s170 = smul.addr %s169, 8
        %s171 = scalar_lea.vmem %s3, %s170
        %s172 = smul.u32 16, %s10
      $region32: #{bottleneck_forward.7} parent=23 // pred_fallthru
        _
    $region24: #{bottleneck_forward.7} parent=5 // pred_fallthru
      _
    %p173 = scmp.le.s32.totalorder 1, %s10
    %p174 = scmp.lt.s32.totalorder %s10, 5
    %p175 = pnand %p173, %p174
    %p176 = pneg %p175
    // Predicated region
    $region33: #{bottleneck_forward.7} parent=5 // pred_check
      _
    $region34: #{bottleneck_forward.7} parent=5 // pred_check_branch
      %178 = sbr.rel (%p175) target = $region36
    $region35: #{bottleneck_forward.7} parent=5 // pred_region
      %s179 = ssub.s32 %s10, 1
      %s180 = smul.u32 16, %s15
      %p181 = scmp.lt.s32.totalorder %s180, 63
      %s182 = scalar_select %p181, %s180, 63
      %s183 = smul.addr %s182, 8
      %s184 = scalar_lea.vmem %s0, %s183
      %p185 = pneg %p36
      %p186 = pneg %p33
      %p187 = pneg %p57
      %p188 = pneg %p54
      %p189 = pneg %p78
      %p190 = pneg %p75
      %s191 = smul.u32 16, %s15
      %p192 = scmp.lt.s32.totalorder %s191, 63
      %s193 = scalar_select %p192, %s191, 63
      %s194 = smul.addr %s193, 8
      %s195 = scalar_lea.vmem %s3, %s194
      %p196 = pneg %p104
      %p197 = pneg %p101
      %p198 = pneg %p130
      %p199 = pneg %p127
      %s200 = smul.u32 16, %s15
      %p201 = scmp.lt.s32.totalorder %s200, 63
      %s202 = scalar_select %p201, %s200, 63
      %s203 = smul.addr %s202, 8
      %s204 = scalar_lea.vmem %s4, %s203
      %s205 = smul.u32 16, %s15
      %p206 = scmp.lt.s32.totalorder %s205, 63
      %s207 = scalar_select %p206, %s205, 63
      %s208 = smul.addr %s207, 8
      %s209 = scalar_lea.vmem %s0, %s208
      %s210 = smul.u32 16, %s15
      %s211 = smul.u32 16, %s15
      %p212 = scmp.lt.s32.totalorder %s211, 63
      %s213 = scalar_select %p212, %s211, 63
      %s214 = smul.addr %s213, 8
      %s215 = scalar_lea.vmem %s3, %s214
      %s216 = smul.u32 16, %s15
      %s217 = smul.u32 16, %s15
      %p218 = scmp.lt.s32.totalorder %s217, 63
      %s219 = scalar_select %p218, %s217, 63
      %s220 = smul.addr %s219, 8
      %s221 = scalar_lea.vmem %s4, %s220
      %s222 = smul.u32 16, %s15
      %v223 = vld [vmem:[%s209] sm:$0xff]
      %v224 = vld [vmem:[%s209 + $0x8] sm:$0xff]
      %v225 = vld [vmem:[%s209 + $0x10] sm:$0xff]
      %v226 = vld [vmem:[%s209 + $0x18] sm:$0xff]
      %v227 = vld [vmem:[%s209 + $0x20] sm:$0xff]
      %v228 = vld [vmem:[%s209 + $0x28] sm:$0xff]
      %v229 = vld [vmem:[%s209 + $0x30] sm:$0xff]
      %v230 = vld [vmem:[%s209 + $0x38] sm:$0xff]
      %v231 = vld [vmem:[%s209 + $0x40] sm:$0xff]
      %v232 = vld [vmem:[%s209 + $0x48] sm:$0xff]
      %v233 = vld [vmem:[%s209 + $0x50] sm:$0xff]
      %v234 = vld [vmem:[%s209 + $0x58] sm:$0xff]
      %v235 = vld [vmem:[%s209 + $0x60] sm:$0xff]
      %v236 = vld [vmem:[%s209 + $0x68] sm:$0xff]
      %v237 = vld [vmem:[%s209 + $0x70] sm:$0xff]
      %v238 = vld [vmem:[%s209 + $0x78] sm:$0xff]
      %v239 = vld [vmem:[%s1] sm:$0x1]
      %v241 = vlaneseq
      %v242 = vshrl.u32 %v241, 7
      %v243 = vsub.s32 0, %v242
      %v244 = vrot.slane %v239, %v243
      %v246 = vmul.f32 %v223, %v244
      %v247 = vmul.f32 %v224, %v244
      %v248 = vmul.f32 %v225, %v244
      %v249 = vmul.f32 %v226, %v244
      %v250 = vmul.f32 %v227, %v244
      %v251 = vmul.f32 %v228, %v244
      %v252 = vmul.f32 %v229, %v244
      %v253 = vmul.f32 %v230, %v244
      %v254 = vmul.f32 %v231, %v244
      %v255 = vmul.f32 %v232, %v244
      %v256 = vmul.f32 %v233, %v244
      %v257 = vmul.f32 %v234, %v244
      %v258 = vmul.f32 %v235, %v244
      %v259 = vmul.f32 %v236, %v244
      %v260 = vmul.f32 %v237, %v244
      %v261 = vmul.f32 %v238, %v244
      %v262 = vld [vmem:[%s2] sm:$0x1]
      %v264 = vlaneseq
      %v265 = vshrl.u32 %v264, 7
      %v266 = vsub.s32 0, %v265
      %v267 = vrot.slane %v262, %v266
      %v269 = vadd.f32 %v246, %v267
      %v270 = vadd.f32 %v247, %v267
      %v271 = vadd.f32 %v248, %v267
      %v272 = vadd.f32 %v249, %v267
      %v273 = vadd.f32 %v250, %v267
      %v274 = vadd.f32 %v251, %v267
      %v275 = vadd.f32 %v252, %v267
      %v276 = vadd.f32 %v253, %v267
      %v277 = vadd.f32 %v254, %v267
      %v278 = vadd.f32 %v255, %v267
      %v279 = vadd.f32 %v256, %v267
      %v280 = vadd.f32 %v257, %v267
      %v281 = vadd.f32 %v258, %v267
      %v282 = vadd.f32 %v259, %v267
      %v283 = vadd.f32 %v260, %v267
      %v284 = vadd.f32 %v261, %v267
      %v285 = vld [vmem:[%s215] sm:$0xff]
      %v286 = vld [vmem:[%s215 + $0x8] sm:$0xff]
      %v287 = vld [vmem:[%s215 + $0x10] sm:$0xff]
      %v288 = vld [vmem:[%s215 + $0x18] sm:$0xff]
      %v289 = vld [vmem:[%s215 + $0x20] sm:$0xff]
      %v290 = vld [vmem:[%s215 + $0x28] sm:$0xff]
      %v291 = vld [vmem:[%s215 + $0x30] sm:$0xff]
      %v292 = vld [vmem:[%s215 + $0x38] sm:$0xff]
      %v293 = vld [vmem:[%s215 + $0x40] sm:$0xff]
      %v294 = vld [vmem:[%s215 + $0x48] sm:$0xff]
      %v295 = vld [vmem:[%s215 + $0x50] sm:$0xff]
      %v296 = vld [vmem:[%s215 + $0x58] sm:$0xff]
      %v297 = vld [vmem:[%s215 + $0x60] sm:$0xff]
      %v298 = vld [vmem:[%s215 + $0x68] sm:$0xff]
      %v299 = vld [vmem:[%s215 + $0x70] sm:$0xff]
      %v300 = vld [vmem:[%s215 + $0x78] sm:$0xff]
      %v301 = vadd.f32 %v269, %v285
      %v302 = vadd.f32 %v270, %v286
      %v303 = vadd.f32 %v271, %v287
      %v304 = vadd.f32 %v272, %v288
      %v305 = vadd.f32 %v273, %v289
      %v306 = vadd.f32 %v274, %v290
      %v307 = vadd.f32 %v275, %v291
      %v308 = vadd.f32 %v276, %v292
      %v309 = vadd.f32 %v277, %v293
      %v310 = vadd.f32 %v278, %v294
      %v311 = vadd.f32 %v279, %v295
      %v312 = vadd.f32 %v280, %v296
      %v313 = vadd.f32 %v281, %v297
      %v314 = vadd.f32 %v282, %v298
      %v315 = vadd.f32 %v283, %v299
      %v316 = vadd.f32 %v284, %v300
      %v317 = vmax.f32 %v301, 0.0
      %v318 = vmax.f32 %v302, 0.0
      %v319 = vmax.f32 %v303, 0.0
      %v320 = vmax.f32 %v304, 0.0
      %v321 = vmax.f32 %v305, 0.0
      %v322 = vmax.f32 %v306, 0.0
      %v323 = vmax.f32 %v307, 0.0
      %v324 = vmax.f32 %v308, 0.0
      %v325 = vmax.f32 %v309, 0.0
      %v326 = vmax.f32 %v310, 0.0
      %v327 = vmax.f32 %v311, 0.0
      %v328 = vmax.f32 %v312, 0.0
      %v329 = vmax.f32 %v313, 0.0
      %v330 = vmax.f32 %v314, 0.0
      %v331 = vmax.f32 %v315, 0.0
      %v332 = vmax.f32 %v316, 0.0
      %333 = vst [vmem:[%s221] sm:$0xff] %v317
      %334 = vst [vmem:[%s221 + $0x8] sm:$0xff] %v318
      %335 = vst [vmem:[%s221 + $0x10] sm:$0xff] %v319
      %336 = vst [vmem:[%s221 + $0x18] sm:$0xff] %v320
      %337 = vst [vmem:[%s221 + $0x20] sm:$0xff] %v321
      %338 = vst [vmem:[%s221 + $0x28] sm:$0xff] %v322
      %339 = vst [vmem:[%s221 + $0x30] sm:$0xff] %v323
      %340 = vst [vmem:[%s221 + $0x38] sm:$0xff] %v324
      %341 = vst [vmem:[%s221 + $0x40] sm:$0xff] %v325
      %342 = vst [vmem:[%s221 + $0x48] sm:$0xff] %v326
      %343 = vst [vmem:[%s221 + $0x50] sm:$0xff] %v327
      %344 = vst [vmem:[%s221 + $0x58] sm:$0xff] %v328
      %345 = vst [vmem:[%s221 + $0x60] sm:$0xff] %v329
      %346 = vst [vmem:[%s221 + $0x68] sm:$0xff] %v330
      %347 = vst [vmem:[%s221 + $0x70] sm:$0xff] %v331
      %348 = vst [vmem:[%s221 + $0x78] sm:$0xff] %v332
      %s349 = smul.u32 16, %s15
      %p350 = scmp.lt.s32.totalorder %s349, 63
      %s351 = scalar_select %p350, %s349, 63
      %s352 = smul.addr %s351, 8
      %s353 = scalar_lea.vmem %s4, %s352
      // Predicated region
      $region37: #{bottleneck_forward.7} parent=35 // pred_check
        %p354 = pneg %p127
      $region38: #{bottleneck_forward.7} parent=35 // pred_check_branch
        %356 = sbr.rel (%p354) target = $region40
      $region39: #{bottleneck_forward.7} parent=35 // pred_region
        %s357 = smul.u32 16, %s15
      $region40: #{bottleneck_forward.7} parent=35 // pred_fallthru
        _
    $region36: #{bottleneck_forward.7} parent=5 // pred_fallthru
      _
    %p358 = scmp.le.s32.totalorder 2, %s10
    // Predicated region
    $region41: #{bottleneck_forward.7} parent=5 // pred_check
      %p359 = pneg %p358
    $region42: #{bottleneck_forward.7} parent=5 // pred_check_branch
      %361 = sbr.rel (%p359) target = $region44
    $region43: #{bottleneck_forward.7} parent=5 // pred_region
      %s362 = ssub.s32 %s10, 2
      // Predicated region
      $region45: #{bottleneck_forward.7} parent=43 // pred_check
        %p363 = pneg %p133
      $region46: #{bottleneck_forward.7} parent=43 // pred_check_branch
        %365 = sbr.rel (%p363) target = $region48
      $region47: #{bottleneck_forward.7} parent=43 // pred_region
        %s366 = smul.u32 16, %s16
        %p367 = scmp.lt.s32.totalorder %s366, 63
        %s368 = scalar_select %p367, %s366, 63
        %s369 = smul.addr %s368, 8
        %s370 = scalar_lea.vmem %s4, %s369
      $region48: #{bottleneck_forward.7} parent=43 // pred_fallthru
        _
    $region44: #{bottleneck_forward.7} parent=5 // pred_fallthru
      _
  $region6: #{bottleneck_forward.7} parent=0 // loop_footer
    %s14 = sadd.s32 1, %s10
  $region7: #{bottleneck_forward.7} parent=0 // loop_footer_branch
    %9 = sbr.rel target = $region3
  $region8: #{bottleneck_forward.7} parent=0 // loop_exit
    _

// kernel: bottleneck_forward.4
$region0: #{bottleneck_forward.4}
  #allocation0 [shape = 'u32[]', space=smem, size = 0x4, offset = 0x4, fixed_abs, tag = 'smem constant byte address 0x4 - core index']
  #allocation1 [shape = 'u32[144,128]{1,0:T(1,128)}', space=vmem, size = 0x12000, scoped, tag = 'internal scratch']
  %s0 = inlined_call_operand.vmem [shape: f32[512,128], index: 0, kind: input, shape index: {}]
  %s1 = inlined_call_operand.vmem [shape: bf16[128,128], index: 1, kind: input, shape index: {}]
  %s2 = inlined_call_operand.vmem [shape: f32[512,128], index: 2, kind: output, shape index: {0}]
  %s3 = inlined_call_operand.vmem [shape: f32[4,2,128], index: 3, kind: output, shape index: {1}]
  %4 = xla_tuple %s2, %s3
  %s5 = sld [smem:[#allocation0]]
  $region49: #{bottleneck_forward.4} parent=0
    _
  %s7 = ssub.s32 1, %s5
  %s8 = scalar_select 0, %s7, %s5
  loop: start=0, step=1, limit=6
  $region2: #{bottleneck_forward.4} parent=0 // loop_pre_header
    _
  $region3: #{bottleneck_forward.4} parent=0 // loop_header
    %s10 = sphi 0, %s14
    %p11 = scmp.ge.s32.totalorder %s10, 6
    %s20 = sphi 0, %s22
    %s23 = sphi 0, %s20
    %s24 = sphi 0, %s23
    %s40 = sphi 0, %s24
    %s44 = sphi 0, %s44
    %s46 = sphi 0, %s44
    %s47 = sphi 0, %s46
    %s61 = sphi 0, %s47
    %s67 = sphi 0, %s69
    %s70 = sphi 0, %s67
    %s71 = sphi 0, %s70
    %s87 = sphi 0, %s71
    %s93 = sphi 0, %s95
    %s96 = sphi 0, %s93
    %s97 = sphi 0, %s96
    %s113 = sphi 0, %s97
  $region4: #{bottleneck_forward.4} parent=0 // loop_header_branch
    %13 = sbr.rel (%p11) target = $region8
  $region5: #{bottleneck_forward.4} parent=0 // loop_body
    %s15 = ssub.s32 %s10, 1
    %s16 = ssub.s32 %s10, 2
    %s17 = sadd.s32 %s10, 1
    %s18 = ssub.s32 %s10, %s17
    %p19 = scmp.eq.s32.totalorder %s18, 0
    %s21 = sadd.s32 %s20, 1
    %s22 = scalar_select %p19, %s20, %s21
    %p25 = pneg %p19
    %p26 = scmp.eq.s32.totalorder %s10, 3
    %p27 = por %p25, %p26
    %p28 = scmp.ne.s32.totalorder %s20, %s23
    %p29 = scmp.eq.s32.totalorder %s10, 0
    %p30 = por %p28, %p29
    %p31 = scmp.ne.s32.totalorder %s20, %s23
    %p32 = scmp.eq.s32.totalorder %s15, 3
    %p33 = por %p31, %p32
    %p34 = scmp.ne.s32.totalorder %s23, %s24
    %p35 = scmp.eq.s32.totalorder %s15, 0
    %p36 = por %p34, %p35
    %p37 = scmp.ne.s32.totalorder %s23, %s24
    %p38 = scmp.eq.s32.totalorder %s16, 3
    %p39 = por %p37, %p38
    %p41 = scmp.ne.s32.totalorder %s24, %s40
    %p42 = scmp.eq.s32.totalorder %s16, 0
    %p43 = por %p41, %p42
    %s45 = sadd.s32 %s44, 1
    %p48 = scmp.eq.s32.totalorder %s10, 3
    %p49 = scmp.ne.s32.totalorder %s44, %s46
    %p50 = scmp.eq.s32.totalorder %s10, 0
    %p51 = por %p49, %p50
    %p52 = scmp.ne.s32.totalorder %s44, %s46
    %p53 = scmp.eq.s32.totalorder %s15, 3
    %p54 = por %p52, %p53
    %p55 = scmp.ne.s32.totalorder %s46, %s47
    %p56 = scmp.eq.s32.totalorder %s15, 0
    %p57 = por %p55, %p56
    %p58 = scmp.ne.s32.totalorder %s46, %s47
    %p59 = scmp.eq.s32.totalorder %s16, 3
    %p60 = por %p58, %p59
    %p62 = scmp.ne.s32.totalorder %s47, %s61
    %p63 = scmp.eq.s32.totalorder %s16, 0
    %p64 = por %p62, %p63
    %s65 = ssub.s32 %s10, %s17
    %p66 = scmp.eq.s32.totalorder %s65, 0
    %s68 = sadd.s32 %s67, 1
    %s69 = scalar_select %p66, %s67, %s68
    %p72 = pneg %p66
    %p73 = scmp.eq.s32.totalorder %s10, 3
    %p74 = por %p72, %p73
    %p75 = scmp.ne.s32.totalorder %s67, %s70
    %p76 = scmp.eq.s32.totalorder %s10, 0
    %p77 = por %p75, %p76
    %p78 = scmp.ne.s32.totalorder %s67, %s70
    %p79 = scmp.eq.s32.totalorder %s15, 3
    %p80 = por %p78, %p79
    %p81 = scmp.ne.s32.totalorder %s70, %s71
    %p82 = scmp.eq.s32.totalorder %s15, 0
    %p83 = por %p81, %p82
    %p84 = scmp.ne.s32.totalorder %s70, %s71
    %p85 = scmp.eq.s32.totalorder %s16, 3
    %p86 = por %p84, %p85
    %p88 = scmp.ne.s32.totalorder %s71, %s87
    %p89 = scmp.eq.s32.totalorder %s16, 0
    %p90 = por %p88, %p89
    %s91 = ssub.s32 %s10, %s17
    %p92 = scmp.eq.s32.totalorder %s91, 0
    %s94 = sadd.s32 %s93, 1
    %s95 = scalar_select %p92, %s93, %s94
    %p98 = pneg %p92
    %p99 = scmp.eq.s32.totalorder %s10, 3
    %p100 = por %p98, %p99
    %p101 = scmp.ne.s32.totalorder %s93, %s96
    %p102 = scmp.eq.s32.totalorder %s10, 0
    %p103 = por %p101, %p102
    %p104 = scmp.ne.s32.totalorder %s93, %s96
    %p105 = scmp.eq.s32.totalorder %s15, 3
    %p106 = por %p104, %p105
    %p107 = scmp.ne.s32.totalorder %s96, %s97
    %p108 = scmp.eq.s32.totalorder %s15, 0
    %p109 = por %p107, %p108
    %p110 = scmp.ne.s32.totalorder %s96, %s97
    %p111 = scmp.eq.s32.totalorder %s16, 3
    %p112 = por %p110, %p111
    %p114 = scmp.ne.s32.totalorder %s97, %s113
    %p115 = scmp.eq.s32.totalorder %s16, 0
    %p116 = por %p114, %p115
    %p117 = scmp.le.s32.totalorder 1, %s10
    %p118 = scmp.lt.s32.totalorder %s10, 5
    %p119 = pnand %p117, %p118
    %p120 = pneg %p119
    // Predicated region
    $region9: #{bottleneck_forward.4} parent=5 // pred_check
      _
    $region10: #{bottleneck_forward.4} parent=5 // pred_check_branch
      %122 = sbr.rel (%p119) target = $region12
    $region11: #{bottleneck_forward.4} parent=5 // pred_region
      %s123 = ssub.s32 %s10, 1
      // Predicated region
      $region13: #{bottleneck_forward.4} parent=11 // pred_check
        %p124 = pneg %p57
      $region14: #{bottleneck_forward.4} parent=11 // pred_check_branch
        %126 = sbr.rel (%p124) target = $region16
      $region15: #{bottleneck_forward.4} parent=11 // pred_region
        _
      $region16: #{bottleneck_forward.4} parent=11 // pred_fallthru
        _
    $region12: #{bottleneck_forward.4} parent=5 // pred_fallthru
      _
    %p127 = scmp.lt.s32.totalorder %s10, 4
    // Predicated region
    $region17: #{bottleneck_forward.4} parent=5 // pred_check
      %p128 = pneg %p127
    $region18: #{bottleneck_forward.4} parent=5 // pred_check_branch
      %130 = sbr.rel (%p128) target = $region20
    $region19: #{bottleneck_forward.4} parent=5 // pred_region
      // Predicated region
      $region21: #{bottleneck_forward.4} parent=19 // pred_check
        %p131 = pneg %p30
      $region22: #{bottleneck_forward.4} parent=19 // pred_check_branch
        %133 = sbr.rel (%p131) target = $region24
      $region23: #{bottleneck_forward.4} parent=19 // pred_region
        %s134 = smul.u32 16, %s10
        %p135 = scmp.lt.s32.totalorder %s134, 63
        %s136 = scalar_select %p135, %s134, 63
        %s137 = smul.addr %s136, 8
        %s138 = scalar_lea.vmem %s0, %s137
        %s139 = smul.u32 16, %s10
      $region24: #{bottleneck_forward.4} parent=19 // pred_fallthru
        _
    $region20: #{bottleneck_forward.4} parent=5 // pred_fallthru
      _
    %p140 = scmp.le.s32.totalorder 1, %s10
    %p141 = scmp.lt.s32.totalorder %s10, 5
    %p142 = pnand %p140, %p141
    %p143 = pneg %p142
    // Predicated region
    $region25: #{bottleneck_forward.4} parent=5 // pred_check
      _
    $region26: #{bottleneck_forward.4} parent=5 // pred_check_branch
      %145 = sbr.rel (%p142) target = $region28
    $region27: #{bottleneck_forward.4} parent=5 // pred_region
      %s146 = ssub.s32 %s10, 1
      %s147 = smul.u32 16, %s15
      %p148 = scmp.lt.s32.totalorder %s147, 63
      %s149 = scalar_select %p148, %s147, 63
      %s150 = smul.addr %s149, 8
      %s151 = scalar_lea.vmem %s0, %s150
      %p152 = pneg %p36
      %p153 = pneg %p33
      %p154 = pneg %p57
      %p155 = pneg %p54
      %p156 = pneg %p83
      %p157 = pneg %p80
      %s158 = smul.u32 16, %s15
      %p159 = scmp.lt.s32.totalorder %s158, 63
      %s160 = scalar_select %p159, %s158, 63
      %s161 = smul.addr %s160, 8
      %s162 = scalar_lea.vmem %s2, %s161
      %p163 = pneg %p109
      %p164 = pneg %p106
      %p165 = scmp.lt.s32.totalorder %s15, 3
      %s166 = scalar_select %p165, %s15, 3
      %s167 = smul.addr %s166, 2
      %s168 = scalar_lea.vmem %s3, %s167
      %s169 = smul.u32 16, %s15
      %p170 = scmp.lt.s32.totalorder %s169, 63
      %s171 = scalar_select %p170, %s169, 63
      %s172 = smul.addr %s171, 8
      %s173 = scalar_lea.vmem %s0, %s172
      %s174 = smul.u32 16, %s15
      %s175 = smul.u32 16, %s15
      %p176 = scmp.lt.s32.totalorder %s175, 63
      %s177 = scalar_select %p176, %s175, 63
      %s178 = smul.addr %s177, 8
      %s179 = scalar_lea.vmem %s2, %s178
      %s180 = smul.u32 16, %s15
      %p181 = scmp.lt.s32.totalorder %s15, 3
      %s182 = scalar_select %p181, %s15, 3
      %s183 = smul.addr %s182, 2
      %s184 = scalar_lea.vmem %s3, %s183
      %v186 = vld [vmem:[%s173] sm:$0xff]
      %v187 = vld [vmem:[%s173 + $0x8] sm:$0xff]
      %v188 = vld [vmem:[%s173 + $0x10] sm:$0xff]
      %v189 = vld [vmem:[%s173 + $0x18] sm:$0xff]
      %v190 = vld [vmem:[%s173 + $0x20] sm:$0xff]
      %v191 = vld [vmem:[%s173 + $0x28] sm:$0xff]
      %v192 = vld [vmem:[%s173 + $0x30] sm:$0xff]
      %v193 = vld [vmem:[%s173 + $0x38] sm:$0xff]
      %v194 = vld [vmem:[%s173 + $0x40] sm:$0xff]
      %v195 = vld [vmem:[%s173 + $0x48] sm:$0xff]
      %v196 = vld [vmem:[%s173 + $0x50] sm:$0xff]
      %v197 = vld [vmem:[%s173 + $0x58] sm:$0xff]
      %v198 = vld [vmem:[%s173 + $0x60] sm:$0xff]
      %v199 = vld [vmem:[%s173 + $0x68] sm:$0xff]
      %v200 = vld [vmem:[%s173 + $0x70] sm:$0xff]
      %v201 = vld [vmem:[%s173 + $0x78] sm:$0xff]
      %v202 = vpack.c.bf16 %v187, %v186
      %v203 = vpack.c.bf16 %v189, %v188
      %v204 = vpack.c.bf16 %v191, %v190
      %v205 = vpack.c.bf16 %v193, %v192
      %v206 = vpack.c.bf16 %v195, %v194
      %v207 = vpack.c.bf16 %v197, %v196
      %v208 = vpack.c.bf16 %v199, %v198
      %v209 = vpack.c.bf16 %v201, %v200
      %v210 = vld [vmem:[%s1] sm:$0xf]
      %v211 = vld [vmem:[%s1 + $0x4] sm:$0xf]
      %v212 = vld [vmem:[%s1 + $0x8] sm:$0xf]
      %v213 = vld [vmem:[%s1 + $0xc] sm:$0xf]
      %v214 = vld [vmem:[%s1 + $0x10] sm:$0xf]
      %v215 = vld [vmem:[%s1 + $0x14] sm:$0xf]
      %v216 = vld [vmem:[%s1 + $0x18] sm:$0xf]
      %v217 = vld [vmem:[%s1 + $0x1c] sm:$0xf]
      %v218 = vld [vmem:[%s1 + $0x20] sm:$0xf]
      %v219 = vld [vmem:[%s1 + $0x24] sm:$0xf]
      %v220 = vld [vmem:[%s1 + $0x28] sm:$0xf]
      %v221 = vld [vmem:[%s1 + $0x2c] sm:$0xf]
      %v222 = vld [vmem:[%s1 + $0x30] sm:$0xf]
      %v223 = vld [vmem:[%s1 + $0x34] sm:$0xf]
      %v224 = vld [vmem:[%s1 + $0x38] sm:$0xf]
      %v225 = vld [vmem:[%s1 + $0x3c] sm:$0xf]
      %v242 = vunpack.c.l.b16 %v210
      %v243 = vunpack.c.l.b16 %v211
      %v244 = vunpack.c.l.b16 %v212
      %v245 = vunpack.c.l.b16 %v213
      %v246 = vunpack.c.l.b16 %v214
      %v247 = vunpack.c.l.b16 %v215
      %v248 = vunpack.c.l.b16 %v216
      %v249 = vunpack.c.l.b16 %v217
      %v250 = vunpack.c.l.b16 %v218
      %v251 = vunpack.c.l.b16 %v219
      %v252 = vunpack.c.l.b16 %v220
      %v253 = vunpack.c.l.b16 %v221
      %v254 = vunpack.c.l.b16 %v222
      %v255 = vunpack.c.l.b16 %v223
      %v256 = vunpack.c.l.b16 %v224
      %v257 = vunpack.c.l.b16 %v225
      %v258 = vpack.c.b16 %v243, %v242
      %v259 = vpack.c.b16 %v245, %v244
      %v260 = vpack.c.b16 %v247, %v246
      %v261 = vpack.c.b16 %v249, %v248
      %v262 = vpack.c.b16 %v251, %v250
      %v263 = vpack.c.b16 %v253, %v252
      %v264 = vpack.c.b16 %v255, %v254
      %v265 = vpack.c.b16 %v257, %v256
      %274 = vmatprep.subr.bf16.mxu0 0
      %275 = vmatpush1.bf16.msra.mxu0 %v258
      %276 = vmatprep.subr.bf16.mxu0 0
      %277 = vmatpush1.bf16.msra.mxu0 %v259
      %278 = vmatprep.subr.bf16.mxu0 0
      %279 = vmatpush1.bf16.msra.mxu0 %v260
      %280 = vmatprep.subr.bf16.mxu0 0
      %281 = vmatpush1.bf16.msra.mxu0 %v261
      %282 = vmatprep.subr.bf16.mxu0 0
      %283 = vmatpush1.bf16.msra.mxu0 %v262
      %284 = vmatprep.subr.bf16.mxu0 0
      %285 = vmatpush1.bf16.msra.mxu0 %v263
      %286 = vmatprep.subr.bf16.mxu0 0
      %287 = vmatpush1.bf16.msra.mxu0 %v264
      %288 = vmatprep.subr.bf16.mxu0 0
      %289 = vmatpush1.bf16.msra.mxu0 %v265
      %290 = vmatprep.subr.bf16.mxu0 0
      %291 = vmatpush1.bf16.msra.mxu0 0
      %292 = vmatprep.subr.bf16.mxu0 0
      %293 = vmatpush1.bf16.msra.mxu0 0
      %294 = vmatprep.subr.bf16.mxu0 0
      %295 = vmatpush1.bf16.msra.mxu0 0
      %296 = vmatprep.subr.bf16.mxu0 0
      %297 = vmatpush1.bf16.msra.mxu0 0
      %298 = vmatprep.subr.bf16.mxu0 0
      %299 = vmatpush1.bf16.msra.mxu0 0
      %300 = vmatprep.subr.bf16.mxu0 0
      %301 = vmatpush1.bf16.msra.mxu0 0
      %302 = vmatprep.subr.bf16.mxu0 0
      %303 = vmatpush1.bf16.msra.mxu0 0
      %304 = vmatprep.subr.bf16.mxu0 0
      %305 = vmatpush1.bf16.msra.mxu0 0
      %306 = vmatprep.mubr.bf16.mxu0 0
      %307 = vmatmul.mubr.bf16.gmra.mrb[0].mxu0 %v202
      %v308 = vpop.f32.mrb[0].mxu0
      %v309 = vadd.f32 0.0, %v308
      %v310 = vpop.f32.mrb[0].mxu0
      %v311 = vpop.f32.mrb[0].mxu0
      %v312 = vadd.f32 0.0, %v311
      %v313 = vpop.f32.mrb[0].mxu0
      %314 = vmatprep.mubr.bf16.mxu0 0
      %315 = vmatmul.mubr.bf16.gmra.mrb[0].mxu0 %v203
      %v316 = vpop.f32.mrb[0].mxu0
      %v317 = vadd.f32 0.0, %v316
      %v318 = vpop.f32.mrb[0].mxu0
      %v319 = vpop.f32.mrb[0].mxu0
      %v320 = vadd.f32 0.0, %v319
      %v321 = vpop.f32.mrb[0].mxu0
      %322 = vmatprep.mubr.bf16.mxu0 0
      %323 = vmatmul.mubr.bf16.gmra.mrb[0].mxu0 %v204
      %v324 = vpop.f32.mrb[0].mxu0
      %v325 = vadd.f32 0.0, %v324
      %v326 = vpop.f32.mrb[0].mxu0
      %v327 = vpop.f32.mrb[0].mxu0
      %v328 = vadd.f32 0.0, %v327
      %v329 = vpop.f32.mrb[0].mxu0
      %330 = vmatprep.mubr.bf16.mxu0 0
      %331 = vmatmul.mubr.bf16.gmra.mrb[0].mxu0 %v205
      %v332 = vpop.f32.mrb[0].mxu0
      %v333 = vadd.f32 0.0, %v332
      %v334 = vpop.f32.mrb[0].mxu0
      %v335 = vpop.f32.mrb[0].mxu0
      %v336 = vadd.f32 0.0, %v335
      %v337 = vpop.f32.mrb[0].mxu0
      %338 = vmatprep.mubr.bf16.mxu0 0
      %339 = vmatmul.mubr.bf16.gmra.mrb[0].mxu0 %v206
      %v340 = vpop.f32.mrb[0].mxu0
      %v341 = vadd.f32 0.0, %v340
      %v342 = vpop.f32.mrb[0].mxu0
      %v343 = vpop.f32.mrb[0].mxu0
      %v344 = vadd.f32 0.0, %v343
      %v345 = vpop.f32.mrb[0].mxu0
      %346 = vmatprep.mubr.bf16.mxu0 0
      %347 = vmatmul.mubr.bf16.gmra.mrb[0].mxu0 %v207
      %v348 = vpop.f32.mrb[0].mxu0
      %v349 = vadd.f32 0.0, %v348
      %v350 = vpop.f32.mrb[0].mxu0
      %v351 = vpop.f32.mrb[0].mxu0
      %v352 = vadd.f32 0.0, %v351
      %v353 = vpop.f32.mrb[0].mxu0
      %354 = vmatprep.mubr.bf16.mxu0 0
      %355 = vmatmul.mubr.bf16.gmra.mrb[0].mxu0 %v208
      %v356 = vpop.f32.mrb[0].mxu0
      %v357 = vadd.f32 0.0, %v356
      %v358 = vpop.f32.mrb[0].mxu0
      %v359 = vpop.f32.mrb[0].mxu0
      %v360 = vadd.f32 0.0, %v359
      %v361 = vpop.f32.mrb[0].mxu0
      %362 = vmatprep.mubr.bf16.mxu0 0
      %363 = vmatmul.mubr.bf16.gmra.mrb[0].mxu0 %v209
      %v364 = vpop.f32.mrb[0].mxu0
      %v365 = vadd.f32 0.0, %v364
      %v366 = vpop.f32.mrb[0].mxu0
      %v367 = vpop.f32.mrb[0].mxu0
      %v368 = vadd.f32 0.0, %v367
      %v369 = vpop.f32.mrb[0].mxu0
      %370 = vdwg.mxu0
      %371 = vst [vmem:[%s179] sm:$0xff] %v309
      %372 = vst [vmem:[%s179 + $0x8] sm:$0xff] %v312
      %373 = vst [vmem:[%s179 + $0x10] sm:$0xff] %v317
      %374 = vst [vmem:[%s179 + $0x18] sm:$0xff] %v320
      %375 = vst [vmem:[%s179 + $0x20] sm:$0xff] %v325
      %376 = vst [vmem:[%s179 + $0x28] sm:$0xff] %v328
      %377 = vst [vmem:[%s179 + $0x30] sm:$0xff] %v333
      %378 = vst [vmem:[%s179 + $0x38] sm:$0xff] %v336
      %379 = vst [vmem:[%s179 + $0x40] sm:$0xff] %v341
      %380 = vst [vmem:[%s179 + $0x48] sm:$0xff] %v344
      %381 = vst [vmem:[%s179 + $0x50] sm:$0xff] %v349
      %382 = vst [vmem:[%s179 + $0x58] sm:$0xff] %v352
      %383 = vst [vmem:[%s179 + $0x60] sm:$0xff] %v357
      %384 = vst [vmem:[%s179 + $0x68] sm:$0xff] %v360
      %385 = vst [vmem:[%s179 + $0x70] sm:$0xff] %v365
      %386 = vst [vmem:[%s179 + $0x78] sm:$0xff] %v368
      %v387 = vadd.f32 %v309, %v312
      %v388 = vadd.f32 %v387, %v317
      %v389 = vadd.f32 %v388, %v320
      %v390 = vadd.f32 %v389, %v325
      %v391 = vadd.f32 %v390, %v328
      %v392 = vadd.f32 %v391, %v333
      %v393 = vadd.f32 %v392, %v336
      %v394 = vadd.f32 %v393, %v341
      %v395 = vadd.f32 %v394, %v344
      %v396 = vadd.f32 %v395, %v349
      %v397 = vadd.f32 %v396, %v352
      %v398 = vadd.f32 %v397, %v357
      %v399 = vadd.f32 %v398, %v360
      %v400 = vadd.f32 %v399, %v365
      %v401 = vadd.f32 %v400, %v368
      %v402 = vrot.slane %v401, 4
      %v403 = vadd.f32 %v401, %v402
      %v404 = vrot.slane %v403, 2
      %v405 = vadd.f32 %v403, %v404
      %v406 = vrot.slane %v405, 1
      %v407 = vadd.f32 %v405, %v406
      %408 = vst [vmem:[%s184] sm:$0x1] %v407
      %v409 = vmul.f32 %v309, %v309
      %v410 = vmul.f32 %v312, %v312
      %v411 = vmul.f32 %v317, %v317
      %v412 = vmul.f32 %v320, %v320
      %v413 = vmul.f32 %v325, %v325
      %v414 = vmul.f32 %v328, %v328
      %v415 = vmul.f32 %v333, %v333
      %v416 = vmul.f32 %v336, %v336
      %v417 = vmul.f32 %v341, %v341
      %v418 = vmul.f32 %v344, %v344
      %v419 = vmul.f32 %v349, %v349
      %v420 = vmul.f32 %v352, %v352
      %v421 = vmul.f32 %v357, %v357
      %v422 = vmul.f32 %v360, %v360
      %v423 = vmul.f32 %v365, %v365
      %v424 = vmul.f32 %v368, %v368
      %v425 = vadd.f32 %v409, %v410
      %v426 = vadd.f32 %v425, %v411
      %v427 = vadd.f32 %v426, %v412
      %v428 = vadd.f32 %v427, %v413
      %v429 = vadd.f32 %v428, %v414
      %v430 = vadd.f32 %v429, %v415
      %v431 = vadd.f32 %v430, %v416
      %v432 = vadd.f32 %v431, %v417
      %v433 = vadd.f32 %v432, %v418
      %v434 = vadd.f32 %v433, %v419
      %v435 = vadd.f32 %v434, %v420
      %v436 = vadd.f32 %v435, %v421
      %v437 = vadd.f32 %v436, %v422
      %v438 = vadd.f32 %v437, %v423
      %v439 = vadd.f32 %v438, %v424
      %v440 = vrot.slane %v439, 4
      %v441 = vadd.f32 %v439, %v440
      %v442 = vrot.slane %v441, 2
      %v443 = vadd.f32 %v441, %v442
      %v444 = vrot.slane %v443, 1
      %v445 = vadd.f32 %v443, %v444
      %446 = vst [vmem:[%s184 + $0x1] sm:$0x1] %v445
      %s447 = smul.u32 16, %s15
      %p448 = scmp.lt.s32.totalorder %s447, 63
      %s449 = scalar_select %p448, %s447, 63
      %s450 = smul.addr %s449, 8
      %s451 = scalar_lea.vmem %s2, %s450
      %p452 = scmp.lt.s32.totalorder %s15, 3
      %s453 = scalar_select %p452, %s15, 3
      %s454 = smul.addr %s453, 2
      %s455 = scalar_lea.vmem %s3, %s454
      // Predicated region
      $region29: #{bottleneck_forward.4} parent=27 // pred_check
        %p456 = pneg %p80
      $region30: #{bottleneck_forward.4} parent=27 // pred_check_branch
        %458 = sbr.rel (%p456) target = $region32
      $region31: #{bottleneck_forward.4} parent=27 // pred_region
        %s459 = smul.u32 16, %s15
      $region32: #{bottleneck_forward.4} parent=27 // pred_fallthru
        _
      // Predicated region
      $region33: #{bottleneck_forward.4} parent=27 // pred_check
        %p460 = pneg %p106
      $region34: #{bottleneck_forward.4} parent=27 // pred_check_branch
        %462 = sbr.rel (%p460) target = $region36
      $region35: #{bottleneck_forward.4} parent=27 // pred_region
        _
      $region36: #{bottleneck_forward.4} parent=27 // pred_fallthru
        _
    $region28: #{bottleneck_forward.4} parent=5 // pred_fallthru
      _
    %p463 = scmp.le.s32.totalorder 2, %s10
    // Predicated region
    $region37: #{bottleneck_forward.4} parent=5 // pred_check
      %p464 = pneg %p463
    $region38: #{bottleneck_forward.4} parent=5 // pred_check_branch
      %466 = sbr.rel (%p464) target = $region40
    $region39: #{bottleneck_forward.4} parent=5 // pred_region
      %s467 = ssub.s32 %s10, 2
      // Predicated region
      $region41: #{bottleneck_forward.4} parent=39 // pred_check
        %p468 = pneg %p86
      $region42: #{bottleneck_forward.4} parent=39 // pred_check_branch
        %470 = sbr.rel (%p468) target = $region44
      $region43: #{bottleneck_forward.4} parent=39 // pred_region
        %s471 = smul.u32 16, %s16
        %p472 = scmp.lt.s32.totalorder %s471, 63
        %s473 = scalar_select %p472, %s471, 63
        %s474 = smul.addr %s473, 8
        %s475 = scalar_lea.vmem %s2, %s474
      $region44: #{bottleneck_forward.4} parent=39 // pred_fallthru
        _
      // Predicated region
      $region45: #{bottleneck_forward.4} parent=39 // pred_check
        %p476 = pneg %p112
      $region46: #{bottleneck_forward.4} parent=39 // pred_check_branch
        %478 = sbr.rel (%p476) target = $region48
      $region47: #{bottleneck_forward.4} parent=39 // pred_region
        %p479 = scmp.lt.s32.totalorder %s16, 3
        %s480 = scalar_select %p479, %s16, 3
        %s481 = smul.addr %s480, 2
        %s482 = scalar_lea.vmem %s3, %s481
      $region48: #{bottleneck_forward.4} parent=39 // pred_fallthru
        _
    $region40: #{bottleneck_forward.4} parent=5 // pred_fallthru
      _
  $region6: #{bottleneck_forward.4} parent=0 // loop_footer
    %s14 = sadd.s32 1, %s10
  $region7: #{bottleneck_forward.4} parent=0 // loop_footer_branch
    %9 = sbr.rel target = $region3
  $region8: #{bottleneck_forward.4} parent=0 // loop_exit
    _

// kernel: bottleneck_forward.6
$region0: #{bottleneck_forward.6}
  #allocation0 [shape = 'u32[]', space=smem, size = 0x4, offset = 0x4, fixed_abs, tag = 'smem constant byte address 0x4 - core index']
  #allocation1 [shape = 'u32[144,128]{1,0:T(1,128)}', space=vmem, size = 0x12000, scoped, tag = 'internal scratch']
  %s0 = inlined_call_operand.vmem [shape: f32[512,128], index: 0, kind: input, shape index: {}]
  %s1 = inlined_call_operand.vmem [shape: f32[1,128], index: 1, kind: input, shape index: {}]
  %s2 = inlined_call_operand.vmem [shape: f32[1,128], index: 2, kind: input, shape index: {}]
  %s3 = inlined_call_operand.vmem [shape: bf16[128,128], index: 3, kind: input, shape index: {}]
  %s4 = inlined_call_operand.vmem [shape: f32[512,128], index: 4, kind: output, shape index: {0}]
  %s5 = inlined_call_operand.vmem [shape: f32[4,2,128], index: 5, kind: output, shape index: {1}]
  %6 = xla_tuple %s4, %s5
  %s7 = sld [smem:[#allocation0]]
  $region57: #{bottleneck_forward.6} parent=0
    _
  %s9 = ssub.s32 1, %s7
  %s10 = scalar_select 0, %s9, %s7
  loop: start=0, step=1, limit=6
  $region2: #{bottleneck_forward.6} parent=0 // loop_pre_header
    _
  $region3: #{bottleneck_forward.6} parent=0 // loop_header
    %s12 = sphi 0, %s16
    %p13 = scmp.ge.s32.totalorder %s12, 6
    %s22 = sphi 0, %s24
    %s25 = sphi 0, %s22
    %s26 = sphi 0, %s25
    %s42 = sphi 0, %s26
    %s46 = sphi 0, %s46
    %s48 = sphi 0, %s46
    %s49 = sphi 0, %s48
    %s63 = sphi 0, %s49
    %s67 = sphi 0, %s67
    %s69 = sphi 0, %s67
    %s70 = sphi 0, %s69
    %s84 = sphi 0, %s70
    %s88 = sphi 0, %s88
    %s90 = sphi 0, %s88
    %s91 = sphi 0, %s90
    %s105 = sphi 0, %s91
    %s111 = sphi 0, %s113
    %s114 = sphi 0, %s111
    %s115 = sphi 0, %s114
    %s131 = sphi 0, %s115
    %s137 = sphi 0, %s139
    %s140 = sphi 0, %s137
    %s141 = sphi 0, %s140
    %s157 = sphi 0, %s141
  $region4: #{bottleneck_forward.6} parent=0 // loop_header_branch
    %15 = sbr.rel (%p13) target = $region8
  $region5: #{bottleneck_forward.6} parent=0 // loop_body
    %s17 = ssub.s32 %s12, 1
    %s18 = ssub.s32 %s12, 2
    %s19 = sadd.s32 %s12, 1
    %s20 = ssub.s32 %s12, %s19
    %p21 = scmp.eq.s32.totalorder %s20, 0
    %s23 = sadd.s32 %s22, 1
    %s24 = scalar_select %p21, %s22, %s23
    %p27 = pneg %p21
    %p28 = scmp.eq.s32.totalorder %s12, 3
    %p29 = por %p27, %p28
    %p30 = scmp.ne.s32.totalorder %s22, %s25
    %p31 = scmp.eq.s32.totalorder %s12, 0
    %p32 = por %p30, %p31
    %p33 = scmp.ne.s32.totalorder %s22, %s25
    %p34 = scmp.eq.s32.totalorder %s17, 3
    %p35 = por %p33, %p34
    %p36 = scmp.ne.s32.totalorder %s25, %s26
    %p37 = scmp.eq.s32.totalorder %s17, 0
    %p38 = por %p36, %p37
    %p39 = scmp.ne.s32.totalorder %s25, %s26
    %p40 = scmp.eq.s32.totalorder %s18, 3
    %p41 = por %p39, %p40
    %p43 = scmp.ne.s32.totalorder %s26, %s42
    %p44 = scmp.eq.s32.totalorder %s18, 0
    %p45 = por %p43, %p44
    %s47 = sadd.s32 %s46, 1
    %p50 = scmp.eq.s32.totalorder %s12, 3
    %p51 = scmp.ne.s32.totalorder %s46, %s48
    %p52 = scmp.eq.s32.totalorder %s12, 0
    %p53 = por %p51, %p52
    %p54 = scmp.ne.s32.totalorder %s46, %s48
    %p55 = scmp.eq.s32.totalorder %s17, 3
    %p56 = por %p54, %p55
    %p57 = scmp.ne.s32.totalorder %s48, %s49
    %p58 = scmp.eq.s32.totalorder %s17, 0
    %p59 = por %p57, %p58
    %p60 = scmp.ne.s32.totalorder %s48, %s49
    %p61 = scmp.eq.s32.totalorder %s18, 3
    %p62 = por %p60, %p61
    %p64 = scmp.ne.s32.totalorder %s49, %s63
    %p65 = scmp.eq.s32.totalorder %s18, 0
    %p66 = por %p64, %p65
    %s68 = sadd.s32 %s67, 1
    %p71 = scmp.eq.s32.totalorder %s12, 3
    %p72 = scmp.ne.s32.totalorder %s67, %s69
    %p73 = scmp.eq.s32.totalorder %s12, 0
    %p74 = por %p72, %p73
    %p75 = scmp.ne.s32.totalorder %s67, %s69
    %p76 = scmp.eq.s32.totalorder %s17, 3
    %p77 = por %p75, %p76
    %p78 = scmp.ne.s32.totalorder %s69, %s70
    %p79 = scmp.eq.s32.totalorder %s17, 0
    %p80 = por %p78, %p79
    %p81 = scmp.ne.s32.totalorder %s69, %s70
    %p82 = scmp.eq.s32.totalorder %s18, 3
    %p83 = por %p81, %p82
    %p85 = scmp.ne.s32.totalorder %s70, %s84
    %p86 = scmp.eq.s32.totalorder %s18, 0
    %p87 = por %p85, %p86
    %s89 = sadd.s32 %s88, 1
    %p92 = scmp.eq.s32.totalorder %s12, 3
    %p93 = scmp.ne.s32.totalorder %s88, %s90
    %p94 = scmp.eq.s32.totalorder %s12, 0
    %p95 = por %p93, %p94
    %p96 = scmp.ne.s32.totalorder %s88, %s90
    %p97 = scmp.eq.s32.totalorder %s17, 3
    %p98 = por %p96, %p97
    %p99 = scmp.ne.s32.totalorder %s90, %s91
    %p100 = scmp.eq.s32.totalorder %s17, 0
    %p101 = por %p99, %p100
    %p102 = scmp.ne.s32.totalorder %s90, %s91
    %p103 = scmp.eq.s32.totalorder %s18, 3
    %p104 = por %p102, %p103
    %p106 = scmp.ne.s32.totalorder %s91, %s105
    %p107 = scmp.eq.s32.totalorder %s18, 0
    %p108 = por %p106, %p107
    %s109 = ssub.s32 %s12, %s19
    %p110 = scmp.eq.s32.totalorder %s109, 0
    %s112 = sadd.s32 %s111, 1
    %s113 = scalar_select %p110, %s111, %s112
    %p116 = pneg %p110
    %p117 = scmp.eq.s32.totalorder %s12, 3
    %p118 = por %p116, %p117
    %p119 = scmp.ne.s32.totalorder %s111, %s114
    %p120 = scmp.eq.s32.totalorder %s12, 0
    %p121 = por %p119, %p120
    %p122 = scmp.ne.s32.totalorder %s111, %s114
    %p123 = scmp.eq.s32.totalorder %s17, 3
    %p124 = por %p122, %p123
    %p125 = scmp.ne.s32.totalorder %s114, %s115
    %p126 = scmp.eq.s32.totalorder %s17, 0
    %p127 = por %p125, %p126
    %p128 = scmp.ne.s32.totalorder %s114, %s115
    %p129 = scmp.eq.s32.totalorder %s18, 3
    %p130 = por %p128, %p129
    %p132 = scmp.ne.s32.totalorder %s115, %s131
    %p133 = scmp.eq.s32.totalorder %s18, 0
    %p134 = por %p132, %p133
    %s135 = ssub.s32 %s12, %s19
    %p136 = scmp.eq.s32.totalorder %s135, 0
    %s138 = sadd.s32 %s137, 1
    %s139 = scalar_select %p136, %s137, %s138
    %p142 = pneg %p136
    %p143 = scmp.eq.s32.totalorder %s12, 3
    %p144 = por %p142, %p143
    %p145 = scmp.ne.s32.totalorder %s137, %s140
    %p146 = scmp.eq.s32.totalorder %s12, 0
    %p147 = por %p145, %p146
    %p148 = scmp.ne.s32.totalorder %s137, %s140
    %p149 = scmp.eq.s32.totalorder %s17, 3
    %p150 = por %p148, %p149
    %p151 = scmp.ne.s32.totalorder %s140, %s141
    %p152 = scmp.eq.s32.totalorder %s17, 0
    %p153 = por %p151, %p152
    %p154 = scmp.ne.s32.totalorder %s140, %s141
    %p155 = scmp.eq.s32.totalorder %s18, 3
    %p156 = por %p154, %p155
    %p158 = scmp.ne.s32.totalorder %s141, %s157
    %p159 = scmp.eq.s32.totalorder %s18, 0
    %p160 = por %p158, %p159
    %p161 = scmp.le.s32.totalorder 1, %s12
    %p162 = scmp.lt.s32.totalorder %s12, 5
    %p163 = pnand %p161, %p162
    %p164 = pneg %p163
    // Predicated region
    $region9: #{bottleneck_forward.6} parent=5 // pred_check
      _
    $region10: #{bottleneck_forward.6} parent=5 // pred_check_branch
      %166 = sbr.rel (%p163) target = $region12
    $region11: #{bottleneck_forward.6} parent=5 // pred_region
      %s167 = ssub.s32 %s12, 1
      // Predicated region
      $region13: #{bottleneck_forward.6} parent=11 // pred_check
        %p168 = pneg %p59
      $region14: #{bottleneck_forward.6} parent=11 // pred_check_branch
        %170 = sbr.rel (%p168) target = $region16
      $region15: #{bottleneck_forward.6} parent=11 // pred_region
        _
      $region16: #{bottleneck_forward.6} parent=11 // pred_fallthru
        _
      // Predicated region
      $region17: #{bottleneck_forward.6} parent=11 // pred_check
        %p171 = pneg %p80
      $region18: #{bottleneck_forward.6} parent=11 // pred_check_branch
        %173 = sbr.rel (%p171) target = $region20
      $region19: #{bottleneck_forward.6} parent=11 // pred_region
        _
      $region20: #{bottleneck_forward.6} parent=11 // pred_fallthru
        _
      // Predicated region
      $region21: #{bottleneck_forward.6} parent=11 // pred_check
        %p174 = pneg %p101
      $region22: #{bottleneck_forward.6} parent=11 // pred_check_branch
        %176 = sbr.rel (%p174) target = $region24
      $region23: #{bottleneck_forward.6} parent=11 // pred_region
        _
      $region24: #{bottleneck_forward.6} parent=11 // pred_fallthru
        _
    $region12: #{bottleneck_forward.6} parent=5 // pred_fallthru
      _
    %p177 = scmp.lt.s32.totalorder %s12, 4
    // Predicated region
    $region25: #{bottleneck_forward.6} parent=5 // pred_check
      %p178 = pneg %p177
    $region26: #{bottleneck_forward.6} parent=5 // pred_check_branch
      %180 = sbr.rel (%p178) target = $region28
    $region27: #{bottleneck_forward.6} parent=5 // pred_region
      // Predicated region
      $region29: #{bottleneck_forward.6} parent=27 // pred_check
        %p181 = pneg %p32
      $region30: #{bottleneck_forward.6} parent=27 // pred_check_branch
        %183 = sbr.rel (%p181) target = $region32
      $region31: #{bottleneck_forward.6} parent=27 // pred_region
        %s184 = smul.u32 16, %s12
        %p185 = scmp.lt.s32.totalorder %s184, 63
        %s186 = scalar_select %p185, %s184, 63
        %s187 = smul.addr %s186, 8
        %s188 = scalar_lea.vmem %s0, %s187
        %s189 = smul.u32 16, %s12
      $region32: #{bottleneck_forward.6} parent=27 // pred_fallthru
        _
    $region28: #{bottleneck_forward.6} parent=5 // pred_fallthru
      _
    %p190 = scmp.le.s32.totalorder 1, %s12
    %p191 = scmp.lt.s32.totalorder %s12, 5
    %p192 = pnand %p190, %p191
    %p193 = pneg %p192
    // Predicated region
    $region33: #{bottleneck_forward.6} parent=5 // pred_check
      _
    $region34: #{bottleneck_forward.6} parent=5 // pred_check_branch
      %195 = sbr.rel (%p192) target = $region36
    $region35: #{bottleneck_forward.6} parent=5 // pred_region
      %s196 = ssub.s32 %s12, 1
      %s197 = smul.u32 16, %s17
      %p198 = scmp.lt.s32.totalorder %s197, 63
      %s199 = scalar_select %p198, %s197, 63
      %s200 = smul.addr %s199, 8
      %s201 = scalar_lea.vmem %s0, %s200
      %p202 = pneg %p38
      %p203 = pneg %p35
      %p204 = pneg %p59
      %p205 = pneg %p56
      %p206 = pneg %p80
      %p207 = pneg %p77
      %p208 = pneg %p101
      %p209 = pneg %p98
      %p210 = pneg %p127
      %p211 = pneg %p124
      %s212 = smul.u32 16, %s17
      %p213 = scmp.lt.s32.totalorder %s212, 63
      %s214 = scalar_select %p213, %s212, 63
      %s215 = smul.addr %s214, 8
      %s216 = scalar_lea.vmem %s4, %s215
      %p217 = pneg %p153
      %p218 = pneg %p150
      %p219 = scmp.lt.s32.totalorder %s17, 3
      %s220 = scalar_select %p219, %s17, 3
      %s221 = smul.addr %s220, 2
      %s222 = scalar_lea.vmem %s5, %s221
      %s223 = smul.u32 16, %s17
      %p224 = scmp.lt.s32.totalorder %s223, 63
      %s225 = scalar_select %p224, %s223, 63
      %s226 = smul.addr %s225, 8
      %s227 = scalar_lea.vmem %s0, %s226
      %s228 = smul.u32 16, %s17
      %s229 = smul.u32 16, %s17
      %p230 = scmp.lt.s32.totalorder %s229, 63
      %s231 = scalar_select %p230, %s229, 63
      %s232 = smul.addr %s231, 8
      %s233 = scalar_lea.vmem %s4, %s232
      %s234 = smul.u32 16, %s17
      %p235 = scmp.lt.s32.totalorder %s17, 3
      %s236 = scalar_select %p235, %s17, 3
      %s237 = smul.addr %s236, 2
      %s238 = scalar_lea.vmem %s5, %s237
      %v240 = vld [vmem:[%s227] sm:$0xff]
      %v241 = vld [vmem:[%s227 + $0x8] sm:$0xff]
      %v242 = vld [vmem:[%s227 + $0x10] sm:$0xff]
      %v243 = vld [vmem:[%s227 + $0x18] sm:$0xff]
      %v244 = vld [vmem:[%s227 + $0x20] sm:$0xff]
      %v245 = vld [vmem:[%s227 + $0x28] sm:$0xff]
      %v246 = vld [vmem:[%s227 + $0x30] sm:$0xff]
      %v247 = vld [vmem:[%s227 + $0x38] sm:$0xff]
      %v248 = vld [vmem:[%s227 + $0x40] sm:$0xff]
      %v249 = vld [vmem:[%s227 + $0x48] sm:$0xff]
      %v250 = vld [vmem:[%s227 + $0x50] sm:$0xff]
      %v251 = vld [vmem:[%s227 + $0x58] sm:$0xff]
      %v252 = vld [vmem:[%s227 + $0x60] sm:$0xff]
      %v253 = vld [vmem:[%s227 + $0x68] sm:$0xff]
      %v254 = vld [vmem:[%s227 + $0x70] sm:$0xff]
      %v255 = vld [vmem:[%s227 + $0x78] sm:$0xff]
      %v256 = vld [vmem:[%s1] sm:$0x1]
      %v258 = vlaneseq
      %v259 = vshrl.u32 %v258, 7
      %v260 = vsub.s32 0, %v259
      %v261 = vrot.slane %v256, %v260
      %v263 = vmul.f32 %v240, %v261
      %v264 = vmul.f32 %v241, %v261
      %v265 = vmul.f32 %v242, %v261
      %v266 = vmul.f32 %v243, %v261
      %v267 = vmul.f32 %v244, %v261
      %v268 = vmul.f32 %v245, %v261
      %v269 = vmul.f32 %v246, %v261
      %v270 = vmul.f32 %v247, %v261
      %v271 = vmul.f32 %v248, %v261
      %v272 = vmul.f32 %v249, %v261
      %v273 = vmul.f32 %v250, %v261
      %v274 = vmul.f32 %v251, %v261
      %v275 = vmul.f32 %v252, %v261
      %v276 = vmul.f32 %v253, %v261
      %v277 = vmul.f32 %v254, %v261
      %v278 = vmul.f32 %v255, %v261
      %v279 = vld [vmem:[%s2] sm:$0x1]
      %v281 = vlaneseq
      %v282 = vshrl.u32 %v281, 7
      %v283 = vsub.s32 0, %v282
      %v284 = vrot.slane %v279, %v283
      %v286 = vadd.f32 %v263, %v284
      %v287 = vadd.f32 %v264, %v284
      %v288 = vadd.f32 %v265, %v284
      %v289 = vadd.f32 %v266, %v284
      %v290 = vadd.f32 %v267, %v284
      %v291 = vadd.f32 %v268, %v284
      %v292 = vadd.f32 %v269, %v284
      %v293 = vadd.f32 %v270, %v284
      %v294 = vadd.f32 %v271, %v284
      %v295 = vadd.f32 %v272, %v284
      %v296 = vadd.f32 %v273, %v284
      %v297 = vadd.f32 %v274, %v284
      %v298 = vadd.f32 %v275, %v284
      %v299 = vadd.f32 %v276, %v284
      %v300 = vadd.f32 %v277, %v284
      %v301 = vadd.f32 %v278, %v284
      %v302 = vmax.f32 %v286, 0.0
      %v303 = vmax.f32 %v287, 0.0
      %v304 = vmax.f32 %v288, 0.0
      %v305 = vmax.f32 %v289, 0.0
      %v306 = vmax.f32 %v290, 0.0
      %v307 = vmax.f32 %v291, 0.0
      %v308 = vmax.f32 %v292, 0.0
      %v309 = vmax.f32 %v293, 0.0
      %v310 = vmax.f32 %v294, 0.0
      %v311 = vmax.f32 %v295, 0.0
      %v312 = vmax.f32 %v296, 0.0
      %v313 = vmax.f32 %v297, 0.0
      %v314 = vmax.f32 %v298, 0.0
      %v315 = vmax.f32 %v299, 0.0
      %v316 = vmax.f32 %v300, 0.0
      %v317 = vmax.f32 %v301, 0.0
      %v318 = vpack.c.bf16 %v303, %v302
      %v319 = vpack.c.bf16 %v305, %v304
      %v320 = vpack.c.bf16 %v307, %v306
      %v321 = vpack.c.bf16 %v309, %v308
      %v322 = vpack.c.bf16 %v311, %v310
      %v323 = vpack.c.bf16 %v313, %v312
      %v324 = vpack.c.bf16 %v315, %v314
      %v325 = vpack.c.bf16 %v317, %v316
      %v326 = vld [vmem:[%s3] sm:$0xf]
      %v327 = vld [vmem:[%s3 + $0x4] sm:$0xf]
      %v328 = vld [vmem:[%s3 + $0x8] sm:$0xf]
      %v329 = vld [vmem:[%s3 + $0xc] sm:$0xf]
      %v330 = vld [vmem:[%s3 + $0x10] sm:$0xf]
      %v331 = vld [vmem:[%s3 + $0x14] sm:$0xf]
      %v332 = vld [vmem:[%s3 + $0x18] sm:$0xf]
      %v333 = vld [vmem:[%s3 + $0x1c] sm:$0xf]
      %v334 = vld [vmem:[%s3 + $0x20] sm:$0xf]
      %v335 = vld [vmem:[%s3 + $0x24] sm:$0xf]
      %v336 = vld [vmem:[%s3 + $0x28] sm:$0xf]
      %v337 = vld [vmem:[%s3 + $0x2c] sm:$0xf]
      %v338 = vld [vmem:[%s3 + $0x30] sm:$0xf]
      %v339 = vld [vmem:[%s3 + $0x34] sm:$0xf]
      %v340 = vld [vmem:[%s3 + $0x38] sm:$0xf]
      %v341 = vld [vmem:[%s3 + $0x3c] sm:$0xf]
      %v358 = vunpack.c.l.b16 %v326
      %v359 = vunpack.c.l.b16 %v327
      %v360 = vunpack.c.l.b16 %v328
      %v361 = vunpack.c.l.b16 %v329
      %v362 = vunpack.c.l.b16 %v330
      %v363 = vunpack.c.l.b16 %v331
      %v364 = vunpack.c.l.b16 %v332
      %v365 = vunpack.c.l.b16 %v333
      %v366 = vunpack.c.l.b16 %v334
      %v367 = vunpack.c.l.b16 %v335
      %v368 = vunpack.c.l.b16 %v336
      %v369 = vunpack.c.l.b16 %v337
      %v370 = vunpack.c.l.b16 %v338
      %v371 = vunpack.c.l.b16 %v339
      %v372 = vunpack.c.l.b16 %v340
      %v373 = vunpack.c.l.b16 %v341
      %v374 = vpack.c.b16 %v359, %v358
      %v375 = vpack.c.b16 %v361, %v360
      %v376 = vpack.c.b16 %v363, %v362
      %v377 = vpack.c.b16 %v365, %v364
      %v378 = vpack.c.b16 %v367, %v366
      %v379 = vpack.c.b16 %v369, %v368
      %v380 = vpack.c.b16 %v371, %v370
      %v381 = vpack.c.b16 %v373, %v372
      %390 = vmatprep.subr.bf16.mxu0 0
      %391 = vmatpush1.bf16.msra.mxu0 %v374
      %392 = vmatprep.subr.bf16.mxu0 0
      %393 = vmatpush1.bf16.msra.mxu0 %v375
      %394 = vmatprep.subr.bf16.mxu0 0
      %395 = vmatpush1.bf16.msra.mxu0 %v376
      %396 = vmatprep.subr.bf16.mxu0 0
      %397 = vmatpush1.bf16.msra.mxu0 %v377
      %398 = vmatprep.subr.bf16.mxu0 0
      %399 = vmatpush1.bf16.msra.mxu0 %v378
      %400 = vmatprep.subr.bf16.mxu0 0
      %401 = vmatpush1.bf16.msra.mxu0 %v379
      %402 = vmatprep.subr.bf16.mxu0 0
      %403 = vmatpush1.bf16.msra.mxu0 %v380
      %404 = vmatprep.subr.bf16.mxu0 0
      %405 = vmatpush1.bf16.msra.mxu0 %v381
      %406 = vmatprep.subr.bf16.mxu0 0
      %407 = vmatpush1.bf16.msra.mxu0 0
      %408 = vmatprep.subr.bf16.mxu0 0
      %409 = vmatpush1.bf16.msra.mxu0 0
      %410 = vmatprep.subr.bf16.mxu0 0
      %411 = vmatpush1.bf16.msra.mxu0 0
      %412 = vmatprep.subr.bf16.mxu0 0
      %413 = vmatpush1.bf16.msra.mxu0 0
      %414 = vmatprep.subr.bf16.mxu0 0
      %415 = vmatpush1.bf16.msra.mxu0 0
      %416 = vmatprep.subr.bf16.mxu0 0
      %417 = vmatpush1.bf16.msra.mxu0 0
      %418 = vmatprep.subr.bf16.mxu0 0
      %419 = vmatpush1.bf16.msra.mxu0 0
      %420 = vmatprep.subr.bf16.mxu0 0
      %421 = vmatpush1.bf16.msra.mxu0 0
      %422 = vmatprep.mubr.bf16.mxu0 0
      %423 = vmatmul.mubr.bf16.gmra.mrb[0].mxu0 %v318
      %v424 = vpop.f32.mrb[0].mxu0
      %v425 = vadd.f32 0.0, %v424
      %v426 = vpop.f32.mrb[0].mxu0
      %v427 = vpop.f32.mrb[0].mxu0
      %v428 = vadd.f32 0.0, %v427
      %v429 = vpop.f32.mrb[0].mxu0
      %430 = vmatprep.mubr.bf16.mxu0 0
      %431 = vmatmul.mubr.bf16.gmra.mrb[0].mxu0 %v319
      %v432 = vpop.f32.mrb[0].mxu0
      %v433 = vadd.f32 0.0, %v432
      %v434 = vpop.f32.mrb[0].mxu0
      %v435 = vpop.f32.mrb[0].mxu0
      %v436 = vadd.f32 0.0, %v435
      %v437 = vpop.f32.mrb[0].mxu0
      %438 = vmatprep.mubr.bf16.mxu0 0
      %439 = vmatmul.mubr.bf16.gmra.mrb[0].mxu0 %v320
      %v440 = vpop.f32.mrb[0].mxu0
      %v441 = vadd.f32 0.0, %v440
      %v442 = vpop.f32.mrb[0].mxu0
      %v443 = vpop.f32.mrb[0].mxu0
      %v444 = vadd.f32 0.0, %v443
      %v445 = vpop.f32.mrb[0].mxu0
      %446 = vmatprep.mubr.bf16.mxu0 0
      %447 = vmatmul.mubr.bf16.gmra.mrb[0].mxu0 %v321
      %v448 = vpop.f32.mrb[0].mxu0
      %v449 = vadd.f32 0.0, %v448
      %v450 = vpop.f32.mrb[0].mxu0
      %v451 = vpop.f32.mrb[0].mxu0
      %v452 = vadd.f32 0.0, %v451
      %v453 = vpop.f32.mrb[0].mxu0
      %454 = vmatprep.mubr.bf16.mxu0 0
      %455 = vmatmul.mubr.bf16.gmra.mrb[0].mxu0 %v322
      %v456 = vpop.f32.mrb[0].mxu0
      %v457 = vadd.f32 0.0, %v456
      %v458 = vpop.f32.mrb[0].mxu0
      %v459 = vpop.f32.mrb[0].mxu0
      %v460 = vadd.f32 0.0, %v459
      %v461 = vpop.f32.mrb[0].mxu0
      %462 = vmatprep.mubr.bf16.mxu0 0
      %463 = vmatmul.mubr.bf16.gmra.mrb[0].mxu0 %v323
      %v464 = vpop.f32.mrb[0].mxu0
      %v465 = vadd.f32 0.0, %v464
      %v466 = vpop.f32.mrb[0].mxu0
      %v467 = vpop.f32.mrb[0].mxu0
      %v468 = vadd.f32 0.0, %v467
      %v469 = vpop.f32.mrb[0].mxu0
      %470 = vmatprep.mubr.bf16.mxu0 0
      %471 = vmatmul.mubr.bf16.gmra.mrb[0].mxu0 %v324
      %v472 = vpop.f32.mrb[0].mxu0
      %v473 = vadd.f32 0.0, %v472
      %v474 = vpop.f32.mrb[0].mxu0
      %v475 = vpop.f32.mrb[0].mxu0
      %v476 = vadd.f32 0.0, %v475
      %v477 = vpop.f32.mrb[0].mxu0
      %478 = vmatprep.mubr.bf16.mxu0 0
      %479 = vmatmul.mubr.bf16.gmra.mrb[0].mxu0 %v325
      %v480 = vpop.f32.mrb[0].mxu0
      %v481 = vadd.f32 0.0, %v480
      %v482 = vpop.f32.mrb[0].mxu0
      %v483 = vpop.f32.mrb[0].mxu0
      %v484 = vadd.f32 0.0, %v483
      %v485 = vpop.f32.mrb[0].mxu0
      %486 = vdwg.mxu0
      %487 = vst [vmem:[%s233] sm:$0xff] %v425
      %488 = vst [vmem:[%s233 + $0x8] sm:$0xff] %v428
      %489 = vst [vmem:[%s233 + $0x10] sm:$0xff] %v433
      %490 = vst [vmem:[%s233 + $0x18] sm:$0xff] %v436
      %491 = vst [vmem:[%s233 + $0x20] sm:$0xff] %v441
      %492 = vst [vmem:[%s233 + $0x28] sm:$0xff] %v444
      %493 = vst [vmem:[%s233 + $0x30] sm:$0xff] %v449
      %494 = vst [vmem:[%s233 + $0x38] sm:$0xff] %v452
      %495 = vst [vmem:[%s233 + $0x40] sm:$0xff] %v457
      %496 = vst [vmem:[%s233 + $0x48] sm:$0xff] %v460
      %497 = vst [vmem:[%s233 + $0x50] sm:$0xff] %v465
      %498 = vst [vmem:[%s233 + $0x58] sm:$0xff] %v468
      %499 = vst [vmem:[%s233 + $0x60] sm:$0xff] %v473
      %500 = vst [vmem:[%s233 + $0x68] sm:$0xff] %v476
      %501 = vst [vmem:[%s233 + $0x70] sm:$0xff] %v481
      %502 = vst [vmem:[%s233 + $0x78] sm:$0xff] %v484
      %v503 = vadd.f32 %v425, %v428
      %v504 = vadd.f32 %v503, %v433
      %v505 = vadd.f32 %v504, %v436
      %v506 = vadd.f32 %v505, %v441
      %v507 = vadd.f32 %v506, %v444
      %v508 = vadd.f32 %v507, %v449
      %v509 = vadd.f32 %v508, %v452
      %v510 = vadd.f32 %v509, %v457
      %v511 = vadd.f32 %v510, %v460
      %v512 = vadd.f32 %v511, %v465
      %v513 = vadd.f32 %v512, %v468
      %v514 = vadd.f32 %v513, %v473
      %v515 = vadd.f32 %v514, %v476
      %v516 = vadd.f32 %v515, %v481
      %v517 = vadd.f32 %v516, %v484
      %v518 = vrot.slane %v517, 4
      %v519 = vadd.f32 %v517, %v518
      %v520 = vrot.slane %v519, 2
      %v521 = vadd.f32 %v519, %v520
      %v522 = vrot.slane %v521, 1
      %v523 = vadd.f32 %v521, %v522
      %524 = vst [vmem:[%s238] sm:$0x1] %v523
      %v525 = vmul.f32 %v425, %v425
      %v526 = vmul.f32 %v428, %v428
      %v527 = vmul.f32 %v433, %v433
      %v528 = vmul.f32 %v436, %v436
      %v529 = vmul.f32 %v441, %v441
      %v530 = vmul.f32 %v444, %v444
      %v531 = vmul.f32 %v449, %v449
      %v532 = vmul.f32 %v452, %v452
      %v533 = vmul.f32 %v457, %v457
      %v534 = vmul.f32 %v460, %v460
      %v535 = vmul.f32 %v465, %v465
      %v536 = vmul.f32 %v468, %v468
      %v537 = vmul.f32 %v473, %v473
      %v538 = vmul.f32 %v476, %v476
      %v539 = vmul.f32 %v481, %v481
      %v540 = vmul.f32 %v484, %v484
      %v541 = vadd.f32 %v525, %v526
      %v542 = vadd.f32 %v541, %v527
      %v543 = vadd.f32 %v542, %v528
      %v544 = vadd.f32 %v543, %v529
      %v545 = vadd.f32 %v544, %v530
      %v546 = vadd.f32 %v545, %v531
      %v547 = vadd.f32 %v546, %v532
      %v548 = vadd.f32 %v547, %v533
      %v549 = vadd.f32 %v548, %v534
      %v550 = vadd.f32 %v549, %v535
      %v551 = vadd.f32 %v550, %v536
      %v552 = vadd.f32 %v551, %v537
      %v553 = vadd.f32 %v552, %v538
      %v554 = vadd.f32 %v553, %v539
      %v555 = vadd.f32 %v554, %v540
      %v556 = vrot.slane %v555, 4
      %v557 = vadd.f32 %v555, %v556
      %v558 = vrot.slane %v557, 2
      %v559 = vadd.f32 %v557, %v558
      %v560 = vrot.slane %v559, 1
      %v561 = vadd.f32 %v559, %v560
      %562 = vst [vmem:[%s238 + $0x1] sm:$0x1] %v561
      %s563 = smul.u32 16, %s17
      %p564 = scmp.lt.s32.totalorder %s563, 63
      %s565 = scalar_select %p564, %s563, 63
      %s566 = smul.addr %s565, 8
      %s567 = scalar_lea.vmem %s4, %s566
      %p568 = scmp.lt.s32.totalorder %s17, 3
      %s569 = scalar_select %p568, %s17, 3
      %s570 = smul.addr %s569, 2
      %s571 = scalar_lea.vmem %s5, %s570
      // Predicated region
      $region37: #{bottleneck_forward.6} parent=35 // pred_check
        %p572 = pneg %p124
      $region38: #{bottleneck_forward.6} parent=35 // pred_check_branch
        %574 = sbr.rel (%p572) target = $region40
      $region39: #{bottleneck_forward.6} parent=35 // pred_region
        %s575 = smul.u32 16, %s17
      $region40: #{bottleneck_forward.6} parent=35 // pred_fallthru
        _
      // Predicated region
      $region41: #{bottleneck_forward.6} parent=35 // pred_check
        %p576 = pneg %p150
      $region42: #{bottleneck_forward.6} parent=35 // pred_check_branch
        %578 = sbr.rel (%p576) target = $region44
      $region43: #{bottleneck_forward.6} parent=35 // pred_region
        _
      $region44: #{bottleneck_forward.6} parent=35 // pred_fallthru
        _
    $region36: #{bottleneck_forward.6} parent=5 // pred_fallthru
      _
    %p579 = scmp.le.s32.totalorder 2, %s12
    // Predicated region
    $region45: #{bottleneck_forward.6} parent=5 // pred_check
      %p580 = pneg %p579
    $region46: #{bottleneck_forward.6} parent=5 // pred_check_branch
      %582 = sbr.rel (%p580) target = $region48
    $region47: #{bottleneck_forward.6} parent=5 // pred_region
      %s583 = ssub.s32 %s12, 2
      // Predicated region
      $region49: #{bottleneck_forward.6} parent=47 // pred_check
        %p584 = pneg %p130
      $region50: #{bottleneck_forward.6} parent=47 // pred_check_branch
        %586 = sbr.rel (%p584) target = $region52
      $region51: #{bottleneck_forward.6} parent=47 // pred_region
        %s587 = smul.u32 16, %s18
        %p588 = scmp.lt.s32.totalorder %s587, 63
        %s589 = scalar_select %p588, %s587, 63
        %s590 = smul.addr %s589, 8
        %s591 = scalar_lea.vmem %s4, %s590
      $region52: #{bottleneck_forward.6} parent=47 // pred_fallthru
        _
      // Predicated region
      $region53: #{bottleneck_forward.6} parent=47 // pred_check
        %p592 = pneg %p156
      $region54: #{bottleneck_forward.6} parent=47 // pred_check_branch
        %594 = sbr.rel (%p592) target = $region56
      $region55: #{bottleneck_forward.6} parent=47 // pred_region
        %p595 = scmp.lt.s32.totalorder %s18, 3
        %s596 = scalar_select %p595, %s18, 3
        %s597 = smul.addr %s596, 2
        %s598 = scalar_lea.vmem %s5, %s597
      $region56: #{bottleneck_forward.6} parent=47 // pred_fallthru
        _
    $region48: #{bottleneck_forward.6} parent=5 // pred_fallthru
      _
  $region6: #{bottleneck_forward.6} parent=0 // loop_footer
    %s16 = sadd.s32 1, %s12
  $region7: #{bottleneck_forward.6} parent=0 // loop_footer_branch
    %11 = sbr.rel target = $region3
  $region8: #{bottleneck_forward.6} parent=0 // loop_exit
    _

// kernel: bottleneck_forward.5
$region0: #{bottleneck_forward.5}
  #allocation0 [shape = 'u32[]', space=smem, size = 0x4, offset = 0x4, fixed_abs, tag = 'smem constant byte address 0x4 - core index']
  #allocation1 [shape = 'u32[144,128]{1,0:T(1,128)}', space=vmem, size = 0x12000, scoped, tag = 'internal scratch']
  %s0 = inlined_call_operand.vmem [shape: f32[2,18,18,128], index: 0, kind: input, shape index: {}]
  %s1 = inlined_call_operand.vmem [shape: f32[1,128], index: 1, kind: input, shape index: {}]
  %s2 = inlined_call_operand.vmem [shape: f32[1,128], index: 2, kind: input, shape index: {}]
  %s3 = inlined_call_operand.vmem [shape: bf16[9,128,128], index: 3, kind: input, shape index: {}]
  %s4 = inlined_call_operand.vmem [shape: f32[2,256,128], index: 4, kind: output, shape index: {0}]
  %s5 = inlined_call_operand.vmem [shape: f32[2,2,128], index: 5, kind: output, shape index: {1}]
  %6 = xla_tuple %s4, %s5
  %s7 = sld [smem:[#allocation0]]
  $region57: #{bottleneck_forward.5} parent=0
    _
  %s9 = ssub.s32 1, %s7
  %s10 = scalar_select 0, %s9, %s7
  loop: start=0, step=1, limit=4
  $region2: #{bottleneck_forward.5} parent=0 // loop_pre_header
    _
  $region3: #{bottleneck_forward.5} parent=0 // loop_header
    %s12 = sphi 0, %s16
    %p13 = scmp.ge.s32.totalorder %s12, 4
    %s22 = sphi 0, %s24
    %s25 = sphi 0, %s22
    %s26 = sphi 0, %s25
    %s42 = sphi 0, %s26
    %s46 = sphi 0, %s46
    %s48 = sphi 0, %s46
    %s49 = sphi 0, %s48
    %s63 = sphi 0, %s49
    %s67 = sphi 0, %s67
    %s69 = sphi 0, %s67
    %s70 = sphi 0, %s69
    %s84 = sphi 0, %s70
    %s88 = sphi 0, %s88
    %s90 = sphi 0, %s88
    %s91 = sphi 0, %s90
    %s105 = sphi 0, %s91
    %s111 = sphi 0, %s113
    %s114 = sphi 0, %s111
    %s115 = sphi 0, %s114
    %s131 = sphi 0, %s115
    %s137 = sphi 0, %s139
    %s140 = sphi 0, %s137
    %s141 = sphi 0, %s140
    %s157 = sphi 0, %s141
  $region4: #{bottleneck_forward.5} parent=0 // loop_header_branch
    %15 = sbr.rel (%p13) target = $region8
  $region5: #{bottleneck_forward.5} parent=0 // loop_body
    %s17 = ssub.s32 %s12, 1
    %s18 = ssub.s32 %s12, 2
    %s19 = sadd.s32 %s12, 1
    %s20 = ssub.s32 %s12, %s19
    %p21 = scmp.eq.s32.totalorder %s20, 0
    %s23 = sadd.s32 %s22, 1
    %s24 = scalar_select %p21, %s22, %s23
    %p27 = pneg %p21
    %p28 = scmp.eq.s32.totalorder %s12, 1
    %p29 = por %p27, %p28
    %p30 = scmp.ne.s32.totalorder %s22, %s25
    %p31 = scmp.eq.s32.totalorder %s12, 0
    %p32 = por %p30, %p31
    %p33 = scmp.ne.s32.totalorder %s22, %s25
    %p34 = scmp.eq.s32.totalorder %s17, 1
    %p35 = por %p33, %p34
    %p36 = scmp.ne.s32.totalorder %s25, %s26
    %p37 = scmp.eq.s32.totalorder %s17, 0
    %p38 = por %p36, %p37
    %p39 = scmp.ne.s32.totalorder %s25, %s26
    %p40 = scmp.eq.s32.totalorder %s18, 1
    %p41 = por %p39, %p40
    %p43 = scmp.ne.s32.totalorder %s26, %s42
    %p44 = scmp.eq.s32.totalorder %s18, 0
    %p45 = por %p43, %p44
    %s47 = sadd.s32 %s46, 1
    %p50 = scmp.eq.s32.totalorder %s12, 1
    %p51 = scmp.ne.s32.totalorder %s46, %s48
    %p52 = scmp.eq.s32.totalorder %s12, 0
    %p53 = por %p51, %p52
    %p54 = scmp.ne.s32.totalorder %s46, %s48
    %p55 = scmp.eq.s32.totalorder %s17, 1
    %p56 = por %p54, %p55
    %p57 = scmp.ne.s32.totalorder %s48, %s49
    %p58 = scmp.eq.s32.totalorder %s17, 0
    %p59 = por %p57, %p58
    %p60 = scmp.ne.s32.totalorder %s48, %s49
    %p61 = scmp.eq.s32.totalorder %s18, 1
    %p62 = por %p60, %p61
    %p64 = scmp.ne.s32.totalorder %s49, %s63
    %p65 = scmp.eq.s32.totalorder %s18, 0
    %p66 = por %p64, %p65
    %s68 = sadd.s32 %s67, 1
    %p71 = scmp.eq.s32.totalorder %s12, 1
    %p72 = scmp.ne.s32.totalorder %s67, %s69
    %p73 = scmp.eq.s32.totalorder %s12, 0
    %p74 = por %p72, %p73
    %p75 = scmp.ne.s32.totalorder %s67, %s69
    %p76 = scmp.eq.s32.totalorder %s17, 1
    %p77 = por %p75, %p76
    %p78 = scmp.ne.s32.totalorder %s69, %s70
    %p79 = scmp.eq.s32.totalorder %s17, 0
    %p80 = por %p78, %p79
    %p81 = scmp.ne.s32.totalorder %s69, %s70
    %p82 = scmp.eq.s32.totalorder %s18, 1
    %p83 = por %p81, %p82
    %p85 = scmp.ne.s32.totalorder %s70, %s84
    %p86 = scmp.eq.s32.totalorder %s18, 0
    %p87 = por %p85, %p86
    %s89 = sadd.s32 %s88, 1
    %p92 = scmp.eq.s32.totalorder %s12, 1
    %p93 = scmp.ne.s32.totalorder %s88, %s90
    %p94 = scmp.eq.s32.totalorder %s12, 0
    %p95 = por %p93, %p94
    %p96 = scmp.ne.s32.totalorder %s88, %s90
    %p97 = scmp.eq.s32.totalorder %s17, 1
    %p98 = por %p96, %p97
    %p99 = scmp.ne.s32.totalorder %s90, %s91
    %p100 = scmp.eq.s32.totalorder %s17, 0
    %p101 = por %p99, %p100
    %p102 = scmp.ne.s32.totalorder %s90, %s91
    %p103 = scmp.eq.s32.totalorder %s18, 1
    %p104 = por %p102, %p103
    %p106 = scmp.ne.s32.totalorder %s91, %s105
    %p107 = scmp.eq.s32.totalorder %s18, 0
    %p108 = por %p106, %p107
    %s109 = ssub.s32 %s12, %s19
    %p110 = scmp.eq.s32.totalorder %s109, 0
    %s112 = sadd.s32 %s111, 1
    %s113 = scalar_select %p110, %s111, %s112
    %p116 = pneg %p110
    %p117 = scmp.eq.s32.totalorder %s12, 1
    %p118 = por %p116, %p117
    %p119 = scmp.ne.s32.totalorder %s111, %s114
    %p120 = scmp.eq.s32.totalorder %s12, 0
    %p121 = por %p119, %p120
    %p122 = scmp.ne.s32.totalorder %s111, %s114
    %p123 = scmp.eq.s32.totalorder %s17, 1
    %p124 = por %p122, %p123
    %p125 = scmp.ne.s32.totalorder %s114, %s115
    %p126 = scmp.eq.s32.totalorder %s17, 0
    %p127 = por %p125, %p126
    %p128 = scmp.ne.s32.totalorder %s114, %s115
    %p129 = scmp.eq.s32.totalorder %s18, 1
    %p130 = por %p128, %p129
    %p132 = scmp.ne.s32.totalorder %s115, %s131
    %p133 = scmp.eq.s32.totalorder %s18, 0
    %p134 = por %p132, %p133
    %s135 = ssub.s32 %s12, %s19
    %p136 = scmp.eq.s32.totalorder %s135, 0
    %s138 = sadd.s32 %s137, 1
    %s139 = scalar_select %p136, %s137, %s138
    %p142 = pneg %p136
    %p143 = scmp.eq.s32.totalorder %s12, 1
    %p144 = por %p142, %p143
    %p145 = scmp.ne.s32.totalorder %s137, %s140
    %p146 = scmp.eq.s32.totalorder %s12, 0
    %p147 = por %p145, %p146
    %p148 = scmp.ne.s32.totalorder %s137, %s140
    %p149 = scmp.eq.s32.totalorder %s17, 1
    %p150 = por %p148, %p149
    %p151 = scmp.ne.s32.totalorder %s140, %s141
    %p152 = scmp.eq.s32.totalorder %s17, 0
    %p153 = por %p151, %p152
    %p154 = scmp.ne.s32.totalorder %s140, %s141
    %p155 = scmp.eq.s32.totalorder %s18, 1
    %p156 = por %p154, %p155
    %p158 = scmp.ne.s32.totalorder %s141, %s157
    %p159 = scmp.eq.s32.totalorder %s18, 0
    %p160 = por %p158, %p159
    %p161 = scmp.le.s32.totalorder 1, %s12
    %p162 = scmp.lt.s32.totalorder %s12, 3
    %p163 = pnand %p161, %p162
    %p164 = pneg %p163
    // Predicated region
    $region9: #{bottleneck_forward.5} parent=5 // pred_check
      _
    $region10: #{bottleneck_forward.5} parent=5 // pred_check_branch
      %166 = sbr.rel (%p163) target = $region12
    $region11: #{bottleneck_forward.5} parent=5 // pred_region
      %s167 = ssub.s32 %s12, 1
      // Predicated region
      $region13: #{bottleneck_forward.5} parent=11 // pred_check
        %p168 = pneg %p59
      $region14: #{bottleneck_forward.5} parent=11 // pred_check_branch
        %170 = sbr.rel (%p168) target = $region16
      $region15: #{bottleneck_forward.5} parent=11 // pred_region
        _
      $region16: #{bottleneck_forward.5} parent=11 // pred_fallthru
        _
      // Predicated region
      $region17: #{bottleneck_forward.5} parent=11 // pred_check
        %p171 = pneg %p80
      $region18: #{bottleneck_forward.5} parent=11 // pred_check_branch
        %173 = sbr.rel (%p171) target = $region20
      $region19: #{bottleneck_forward.5} parent=11 // pred_region
        _
      $region20: #{bottleneck_forward.5} parent=11 // pred_fallthru
        _
      // Predicated region
      $region21: #{bottleneck_forward.5} parent=11 // pred_check
        %p174 = pneg %p101
      $region22: #{bottleneck_forward.5} parent=11 // pred_check_branch
        %176 = sbr.rel (%p174) target = $region24
      $region23: #{bottleneck_forward.5} parent=11 // pred_region
        _
      $region24: #{bottleneck_forward.5} parent=11 // pred_fallthru
        _
    $region12: #{bottleneck_forward.5} parent=5 // pred_fallthru
      _
    %p177 = scmp.lt.s32.totalorder %s12, 2
    // Predicated region
    $region25: #{bottleneck_forward.5} parent=5 // pred_check
      %p178 = pneg %p177
    $region26: #{bottleneck_forward.5} parent=5 // pred_check_branch
      %180 = sbr.rel (%p178) target = $region28
    $region27: #{bottleneck_forward.5} parent=5 // pred_region
      // Predicated region
      $region29: #{bottleneck_forward.5} parent=27 // pred_check
        %p181 = pneg %p32
      $region30: #{bottleneck_forward.5} parent=27 // pred_check_branch
        %183 = sbr.rel (%p181) target = $region32
      $region31: #{bottleneck_forward.5} parent=27 // pred_region
        %p184 = scmp.lt.s32.totalorder %s12, 1
        %s185 = scalar_select %p184, %s12, 1
        %s186 = smul.addr %s185, 54
        %s187 = smul.addr %s186, 8
        %s188 = scalar_lea.vmem %s0, %s187
      $region32: #{bottleneck_forward.5} parent=27 // pred_fallthru
        _
    $region28: #{bottleneck_forward.5} parent=5 // pred_fallthru
      _
    %p189 = scmp.le.s32.totalorder 1, %s12
    %p190 = scmp.lt.s32.totalorder %s12, 3
    %p191 = pnand %p189, %p190
    %p192 = pneg %p191
    // Predicated region
    $region33: #{bottleneck_forward.5} parent=5 // pred_check
      _
    $region34: #{bottleneck_forward.5} parent=5 // pred_check_branch
      %194 = sbr.rel (%p191) target = $region36
    $region35: #{bottleneck_forward.5} parent=5 // pred_region
      %s195 = ssub.s32 %s12, 1
      %p196 = scmp.lt.s32.totalorder %s17, 1
      %s197 = scalar_select %p196, %s17, 1
      %s198 = smul.addr %s197, 54
      %s199 = smul.addr %s198, 8
      %s200 = scalar_lea.vmem %s0, %s199
      %p201 = pneg %p38
      %p202 = pneg %p35
      %p203 = pneg %p59
      %p204 = pneg %p56
      %p205 = pneg %p80
      %p206 = pneg %p77
      %p207 = pneg %p101
      %p208 = pneg %p98
      %p209 = pneg %p127
      %p210 = pneg %p124
      %p211 = scmp.lt.s32.totalorder %s17, 1
      %s212 = scalar_select %p211, %s17, 1
      %s213 = smul.addr %s212, 32
      %s214 = smul.addr %s213, 8
      %s215 = scalar_lea.vmem %s4, %s214
      %p216 = pneg %p153
      %p217 = pneg %p150
      %p218 = scmp.lt.s32.totalorder %s17, 1
      %s219 = scalar_select %p218, %s17, 1
      %s220 = smul.addr %s219, 2
      %s221 = scalar_lea.vmem %s5, %s220
      %p222 = scmp.lt.s32.totalorder %s17, 1
      %s223 = scalar_select %p222, %s17, 1
      %s224 = smul.addr %s223, 54
      %s225 = smul.addr %s224, 8
      %s226 = scalar_lea.vmem %s0, %s225
      %p227 = scmp.lt.s32.totalorder %s17, 1
      %s228 = scalar_select %p227, %s17, 1
      %s229 = smul.addr %s228, 32
      %s230 = smul.addr %s229, 8
      %s231 = scalar_lea.vmem %s4, %s230
      %p232 = scmp.lt.s32.totalorder %s17, 1
      %s233 = scalar_select %p232, %s17, 1
      %s234 = smul.addr %s233, 2
      %s235 = scalar_lea.vmem %s5, %s234
      %v237 = vld [vmem:[%s1] sm:$0x1]
      %v238 = vld [vmem:[%s2] sm:$0x1]
      %v239 = vld [vmem:[%s226] sm:$0xff]
      %v240 = vld [vmem:[%s226 + $0x8] sm:$0xff]
      %v241 = vld [vmem:[%s226 + $0x10] sm:$0x3]
      %v242 = vld [vmem:[%s226 + $0x18] sm:$0xff]
      %v243 = vld [vmem:[%s226 + $0x20] sm:$0xff]
      %v244 = vld [vmem:[%s226 + $0x28] sm:$0x3]
      %v245 = vld [vmem:[%s226 + $0x30] sm:$0xff]
      %v246 = vld [vmem:[%s226 + $0x38] sm:$0xff]
      %v247 = vld [vmem:[%s226 + $0x40] sm:$0x3]
      %v248 = vld [vmem:[%s226 + $0x48] sm:$0xff]
      %v249 = vld [vmem:[%s226 + $0x50] sm:$0xff]
      %v250 = vld [vmem:[%s226 + $0x58] sm:$0x3]
      %v251 = vld [vmem:[%s226 + $0x60] sm:$0xff]
      %v252 = vld [vmem:[%s226 + $0x68] sm:$0xff]
      %v253 = vld [vmem:[%s226 + $0x70] sm:$0x3]
      %v254 = vld [vmem:[%s226 + $0x78] sm:$0xff]
      %v255 = vld [vmem:[%s226 + $0x80] sm:$0xff]
      %v256 = vld [vmem:[%s226 + $0x88] sm:$0x3]
      %v257 = vld [vmem:[%s226 + $0x90] sm:$0xff]
      %v258 = vld [vmem:[%s226 + $0x98] sm:$0xff]
      %v259 = vld [vmem:[%s226 + $0xa0] sm:$0x3]
      %v260 = vld [vmem:[%s226 + $0xa8] sm:$0xff]
      %v261 = vld [vmem:[%s226 + $0xb0] sm:$0xff]
      %v262 = vld [vmem:[%s226 + $0xb8] sm:$0x3]
      %v263 = vld [vmem:[%s226 + $0xc0] sm:$0xff]
      %v264 = vld [vmem:[%s226 + $0xc8] sm:$0xff]
      %v265 = vld [vmem:[%s226 + $0xd0] sm:$0x3]
      %v266 = vld [vmem:[%s226 + $0xd8] sm:$0xff]
      %v267 = vld [vmem:[%s226 + $0xe0] sm:$0xff]
      %v268 = vld [vmem:[%s226 + $0xe8] sm:$0x3]
      %v269 = vld [vmem:[%s226 + $0xf0] sm:$0xff]
      %v270 = vld [vmem:[%s226 + $0xf8] sm:$0xff]
      %v271 = vld [vmem:[%s226 + $0x100] sm:$0x3]
      %v272 = vld [vmem:[%s226 + $0x108] sm:$0xff]
      %v273 = vld [vmem:[%s226 + $0x110] sm:$0xff]
      %v274 = vld [vmem:[%s226 + $0x118] sm:$0x3]
      %v275 = vld [vmem:[%s226 + $0x120] sm:$0xff]
      %v276 = vld [vmem:[%s226 + $0x128] sm:$0xff]
      %v277 = vld [vmem:[%s226 + $0x130] sm:$0x3]
      %v278 = vld [vmem:[%s226 + $0x138] sm:$0xff]
      %v279 = vld [vmem:[%s226 + $0x140] sm:$0xff]
      %v280 = vld [vmem:[%s226 + $0x148] sm:$0x3]
      %v281 = vld [vmem:[%s226 + $0x150] sm:$0xff]
      %v282 = vld [vmem:[%s226 + $0x158] sm:$0xff]
      %v283 = vld [vmem:[%s226 + $0x160] sm:$0x3]
      %v284 = vld [vmem:[%s226 + $0x168] sm:$0xff]
      %v285 = vld [vmem:[%s226 + $0x170] sm:$0xff]
      %v286 = vld [vmem:[%s226 + $0x178] sm:$0x3]
      %v287 = vld [vmem:[%s226 + $0x180] sm:$0xff]
      %v288 = vld [vmem:[%s226 + $0x188] sm:$0xff]
      %v289 = vld [vmem:[%s226 + $0x190] sm:$0x3]
      %v290 = vld [vmem:[%s226 + $0x198] sm:$0xff]
      %v291 = vld [vmem:[%s226 + $0x1a0] sm:$0xff]
      %v292 = vld [vmem:[%s226 + $0x1a8] sm:$0x3]
      %v294 = vlaneseq
      %v295 = vshrl.u32 %v294, 7
      %v296 = vsub.s32 0, %v295
      %v297 = vrot.slane %v237, %v296
      %v299 = vmul.f32 %v239, %v297
      %v300 = vmul.f32 %v240, %v297
      %v301 = vmul.f32 %v241, %v297
      %v302 = vmul.f32 %v242, %v297
      %v303 = vmul.f32 %v243, %v297
      %v304 = vmul.f32 %v244, %v297
      %v305 = vmul.f32 %v245, %v297
      %v306 = vmul.f32 %v246, %v297
      %v307 = vmul.f32 %v247, %v297
      %v308 = vmul.f32 %v248, %v297
      %v309 = vmul.f32 %v249, %v297
      %v310 = vmul.f32 %v250, %v297
      %v311 = vmul.f32 %v251, %v297
      %v312 = vmul.f32 %v252, %v297
      %v313 = vmul.f32 %v253, %v297
      %v314 = vmul.f32 %v254, %v297
      %v315 = vmul.f32 %v255, %v297
      %v316 = vmul.f32 %v256, %v297
      %v317 = vmul.f32 %v257, %v297
      %v318 = vmul.f32 %v258, %v297
      %v319 = vmul.f32 %v259, %v297
      %v320 = vmul.f32 %v260, %v297
      %v321 = vmul.f32 %v261, %v297
      %v322 = vmul.f32 %v262, %v297
      %v323 = vmul.f32 %v263, %v297
      %v324 = vmul.f32 %v264, %v297
      %v325 = vmul.f32 %v265, %v297
      %v326 = vmul.f32 %v266, %v297
      %v327 = vmul.f32 %v267, %v297
      %v328 = vmul.f32 %v268, %v297
      %v329 = vmul.f32 %v269, %v297
      %v330 = vmul.f32 %v270, %v297
      %v331 = vmul.f32 %v271, %v297
      %v332 = vmul.f32 %v272, %v297
      %v333 = vmul.f32 %v273, %v297
      %v334 = vmul.f32 %v274, %v297
      %v335 = vmul.f32 %v275, %v297
      %v336 = vmul.f32 %v276, %v297
      %v337 = vmul.f32 %v277, %v297
      %v338 = vmul.f32 %v278, %v297
      %v339 = vmul.f32 %v279, %v297
      %v340 = vmul.f32 %v280, %v297
      %v341 = vmul.f32 %v281, %v297
      %v342 = vmul.f32 %v282, %v297
      %v343 = vmul.f32 %v283, %v297
      %v344 = vmul.f32 %v284, %v297
      %v345 = vmul.f32 %v285, %v297
      %v346 = vmul.f32 %v286, %v297
      %v347 = vmul.f32 %v287, %v297
      %v348 = vmul.f32 %v288, %v297
      %v349 = vmul.f32 %v289, %v297
      %v350 = vmul.f32 %v290, %v297
      %v351 = vmul.f32 %v291, %v297
      %v352 = vmul.f32 %v292, %v297
      %v354 = vlaneseq
      %v355 = vshrl.u32 %v354, 7
      %v356 = vsub.s32 0, %v355
      %v357 = vrot.slane %v238, %v356
      %v359 = vadd.f32 %v299, %v357
      %v360 = vadd.f32 %v300, %v357
      %v361 = vadd.f32 %v301, %v357
      %v362 = vadd.f32 %v302, %v357
      %v363 = vadd.f32 %v303, %v357
      %v364 = vadd.f32 %v304, %v357
      %v365 = vadd.f32 %v305, %v357
      %v366 = vadd.f32 %v306, %v357
      %v367 = vadd.f32 %v307, %v357
      %v368 = vadd.f32 %v308, %v357
      %v369 = vadd.f32 %v309, %v357
      %v370 = vadd.f32 %v310, %v357
      %v371 = vadd.f32 %v311, %v357
      %v372 = vadd.f32 %v312, %v357
      %v373 = vadd.f32 %v313, %v357
      %v374 = vadd.f32 %v314, %v357
      %v375 = vadd.f32 %v315, %v357
      %v376 = vadd.f32 %v316, %v357
      %v377 = vadd.f32 %v317, %v357
      %v378 = vadd.f32 %v318, %v357
      %v379 = vadd.f32 %v319, %v357
      %v380 = vadd.f32 %v320, %v357
      %v381 = vadd.f32 %v321, %v357
      %v382 = vadd.f32 %v322, %v357
      %v383 = vadd.f32 %v323, %v357
      %v384 = vadd.f32 %v324, %v357
      %v385 = vadd.f32 %v325, %v357
      %v386 = vadd.f32 %v326, %v357
      %v387 = vadd.f32 %v327, %v357
      %v388 = vadd.f32 %v328, %v357
      %v389 = vadd.f32 %v329, %v357
      %v390 = vadd.f32 %v330, %v357
      %v391 = vadd.f32 %v331, %v357
      %v392 = vadd.f32 %v332, %v357
      %v393 = vadd.f32 %v333, %v357
      %v394 = vadd.f32 %v334, %v357
      %v395 = vadd.f32 %v335, %v357
      %v396 = vadd.f32 %v336, %v357
      %v397 = vadd.f32 %v337, %v357
      %v398 = vadd.f32 %v338, %v357
      %v399 = vadd.f32 %v339, %v357
      %v400 = vadd.f32 %v340, %v357
      %v401 = vadd.f32 %v341, %v357
      %v402 = vadd.f32 %v342, %v357
      %v403 = vadd.f32 %v343, %v357
      %v404 = vadd.f32 %v344, %v357
      %v405 = vadd.f32 %v345, %v357
      %v406 = vadd.f32 %v346, %v357
      %v407 = vadd.f32 %v347, %v357
      %v408 = vadd.f32 %v348, %v357
      %v409 = vadd.f32 %v349, %v357
      %v410 = vadd.f32 %v350, %v357
      %v411 = vadd.f32 %v351, %v357
      %v412 = vadd.f32 %v352, %v357
      %v413 = vmax.f32 %v359, 0.0
      %v414 = vmax.f32 %v360, 0.0
      %v415 = vmax.f32 %v361, 0.0
      %v416 = vmax.f32 %v362, 0.0
      %v417 = vmax.f32 %v363, 0.0
      %v418 = vmax.f32 %v364, 0.0
      %v419 = vmax.f32 %v365, 0.0
      %v420 = vmax.f32 %v366, 0.0
      %v421 = vmax.f32 %v367, 0.0
      %v422 = vmax.f32 %v368, 0.0
      %v423 = vmax.f32 %v369, 0.0
      %v424 = vmax.f32 %v370, 0.0
      %v425 = vmax.f32 %v371, 0.0
      %v426 = vmax.f32 %v372, 0.0
      %v427 = vmax.f32 %v373, 0.0
      %v428 = vmax.f32 %v374, 0.0
      %v429 = vmax.f32 %v375, 0.0
      %v430 = vmax.f32 %v376, 0.0
      %v431 = vmax.f32 %v377, 0.0
      %v432 = vmax.f32 %v378, 0.0
      %v433 = vmax.f32 %v379, 0.0
      %v434 = vmax.f32 %v380, 0.0
      %v435 = vmax.f32 %v381, 0.0
      %v436 = vmax.f32 %v382, 0.0
      %v437 = vmax.f32 %v383, 0.0
      %v438 = vmax.f32 %v384, 0.0
      %v439 = vmax.f32 %v385, 0.0
      %v440 = vmax.f32 %v386, 0.0
      %v441 = vmax.f32 %v387, 0.0
      %v442 = vmax.f32 %v388, 0.0
      %v443 = vmax.f32 %v389, 0.0
      %v444 = vmax.f32 %v390, 0.0
      %v445 = vmax.f32 %v391, 0.0
      %v446 = vmax.f32 %v392, 0.0
      %v447 = vmax.f32 %v393, 0.0
      %v448 = vmax.f32 %v394, 0.0
      %v449 = vmax.f32 %v395, 0.0
      %v450 = vmax.f32 %v396, 0.0
      %v451 = vmax.f32 %v397, 0.0
      %v452 = vmax.f32 %v398, 0.0
      %v453 = vmax.f32 %v399, 0.0
      %v454 = vmax.f32 %v400, 0.0
      %v455 = vmax.f32 %v401, 0.0
      %v456 = vmax.f32 %v402, 0.0
      %v457 = vmax.f32 %v403, 0.0
      %v458 = vmax.f32 %v404, 0.0
      %v459 = vmax.f32 %v405, 0.0
      %v460 = vmax.f32 %v406, 0.0
      %v461 = vmax.f32 %v407, 0.0
      %v462 = vmax.f32 %v408, 0.0
      %v463 = vmax.f32 %v409, 0.0
      %v464 = vmax.f32 %v410, 0.0
      %v465 = vmax.f32 %v411, 0.0
      %v466 = vmax.f32 %v412, 0.0
      %v467 = vlaneseq
      %v468 = vshrl.u32 %v467, 7
      %v469 = vadd.s32 %v468, 8
      %v470 = vadd.s32 %v468, 16
      %vm471 = vcmp.ge.s32.totalorder %v468, 1
      %vm472 = vcmp.ge.s32.totalorder %v469, 1
      %vm473 = vcmp.ge.s32.totalorder %v470, 1
      %vm474 = vmand 0, %vm471
      %vm475 = vmand 0, %vm472
      %vm476 = vmand 0, %vm473
      %vm477 = vmand 1, %vm471
      %vm478 = vmand 1, %vm472
      %vm479 = vmand 1, %vm473
      %vm480 = vcmp.le.s32.totalorder %v468, 16
      %vm481 = vcmp.le.s32.totalorder %v469, 16
      %vm482 = vcmp.le.s32.totalorder %v470, 16
      %vm483 = vmand %vm474, %vm480
      %vm484 = vmand %vm475, %vm481
      %vm485 = vmand %vm476, %vm482
      %vm486 = vmand %vm477, %vm480
      %vm487 = vmand %vm478, %vm481
      %vm488 = vmand %vm479, %vm482
      %v489 = vsel %vm483, %v413, 0.0
      %v490 = vsel %vm484, %v414, 0.0
      %v491 = vsel %vm485, %v415, 0.0
      %v492 = vsel %vm486, %v416, 0.0
      %v493 = vsel %vm487, %v417, 0.0
      %v494 = vsel %vm488, %v418, 0.0
      %v495 = vsel %vm486, %v419, 0.0
      %v496 = vsel %vm487, %v420, 0.0
      %v497 = vsel %vm488, %v421, 0.0
      %v498 = vsel %vm486, %v422, 0.0
      %v499 = vsel %vm487, %v423, 0.0
      %v500 = vsel %vm488, %v424, 0.0
      %v501 = vsel %vm486, %v425, 0.0
      %v502 = vsel %vm487, %v426, 0.0
      %v503 = vsel %vm488, %v427, 0.0
      %v504 = vsel %vm486, %v428, 0.0
      %v505 = vsel %vm487, %v429, 0.0
      %v506 = vsel %vm488, %v430, 0.0
      %v507 = vsel %vm486, %v431, 0.0
      %v508 = vsel %vm487, %v432, 0.0
      %v509 = vsel %vm488, %v433, 0.0
      %v510 = vsel %vm486, %v434, 0.0
      %v511 = vsel %vm487, %v435, 0.0
      %v512 = vsel %vm488, %v436, 0.0
      %v513 = vsel %vm486, %v437, 0.0
      %v514 = vsel %vm487, %v438, 0.0
      %v515 = vsel %vm488, %v439, 0.0
      %v516 = vsel %vm486, %v440, 0.0
      %v517 = vsel %vm487, %v441, 0.0
      %v518 = vsel %vm488, %v442, 0.0
      %v519 = vsel %vm486, %v443, 0.0
      %v520 = vsel %vm487, %v444, 0.0
      %v521 = vsel %vm488, %v445, 0.0
      %v522 = vsel %vm486, %v446, 0.0
      %v523 = vsel %vm487, %v447, 0.0
      %v524 = vsel %vm488, %v448, 0.0
      %v525 = vsel %vm486, %v449, 0.0
      %v526 = vsel %vm487, %v450, 0.0
      %v527 = vsel %vm488, %v451, 0.0
      %v528 = vsel %vm486, %v452, 0.0
      %v529 = vsel %vm487, %v453, 0.0
      %v530 = vsel %vm488, %v454, 0.0
      %v531 = vsel %vm486, %v455, 0.0
      %v532 = vsel %vm487, %v456, 0.0
      %v533 = vsel %vm488, %v457, 0.0
      %v534 = vsel %vm486, %v458, 0.0
      %v535 = vsel %vm487, %v459, 0.0
      %v536 = vsel %vm488, %v460, 0.0
      %v537 = vsel %vm486, %v461, 0.0
      %v538 = vsel %vm487, %v462, 0.0
      %v539 = vsel %vm488, %v463, 0.0
      %v540 = vsel %vm483, %v464, 0.0
      %v541 = vsel %vm484, %v465, 0.0
      %v542 = vsel %vm485, %v466, 0.0
      %v543 = vpack.c.bf16 %v490, %v489
      %v544 = vpack.c.bf16 %v493, %v492
      %v545 = vpack.c.bf16 %v496, %v495
      %v546 = vpack.c.bf16 %v499, %v498
      %v547 = vpack.c.bf16 %v502, %v501
      %v548 = vpack.c.bf16 %v505, %v504
      %v549 = vpack.c.bf16 %v508, %v507
      %v550 = vpack.c.bf16 %v511, %v510
      %v551 = vpack.c.bf16 %v514, %v513
      %v552 = vpack.c.bf16 %v517, %v516
      %v553 = vpack.c.bf16 %v520, %v519
      %v554 = vpack.c.bf16 %v523, %v522
      %v555 = vpack.c.bf16 %v526, %v525
      %v556 = vpack.c.bf16 %v529, %v528
      %v557 = vpack.c.bf16 %v532, %v531
      %v558 = vpack.c.bf16 %v535, %v534
      %v559 = vld [vmem:[%s3] sm:$0xf]
      %v560 = vld [vmem:[%s3 + $0x4] sm:$0xf]
      %v561 = vld [vmem:[%s3 + $0x8] sm:$0xf]
      %v562 = vld [vmem:[%s3 + $0xc] sm:$0xf]
      %v563 = vld [vmem:[%s3 + $0x10] sm:$0xf]
      %v564 = vld [vmem:[%s3 + $0x14] sm:$0xf]
      %v565 = vld [vmem:[%s3 + $0x18] sm:$0xf]
      %v566 = vld [vmem:[%s3 + $0x1c] sm:$0xf]
      %v567 = vld [vmem:[%s3 + $0x20] sm:$0xf]
      %v568 = vld [vmem:[%s3 + $0x24] sm:$0xf]
      %v569 = vld [vmem:[%s3 + $0x28] sm:$0xf]
      %v570 = vld [vmem:[%s3 + $0x2c] sm:$0xf]
      %v571 = vld [vmem:[%s3 + $0x30] sm:$0xf]
      %v572 = vld [vmem:[%s3 + $0x34] sm:$0xf]
      %v573 = vld [vmem:[%s3 + $0x38] sm:$0xf]
      %v574 = vld [vmem:[%s3 + $0x3c] sm:$0xf]
      %v575 = vpack.c.bf16 %v538, %v537
      %s576 = scalar_lea.vmem %s3, 192
      %v577 = vld [vmem:[%s576] sm:$0xf]
      %v578 = vld [vmem:[%s576 + $0x4] sm:$0xf]
      %v579 = vld [vmem:[%s576 + $0x8] sm:$0xf]
      %v580 = vld [vmem:[%s576 + $0xc] sm:$0xf]
      %v581 = vld [vmem:[%s576 + $0x10] sm:$0xf]
      %v582 = vld [vmem:[%s576 + $0x14] sm:$0xf]
      %v583 = vld [vmem:[%s576 + $0x18] sm:$0xf]
      %v584 = vld [vmem:[%s576 + $0x1c] sm:$0xf]
      %v585 = vld [vmem:[%s576 + $0x20] sm:$0xf]
      %v586 = vld [vmem:[%s576 + $0x24] sm:$0xf]
      %v587 = vld [vmem:[%s576 + $0x28] sm:$0xf]
      %v588 = vld [vmem:[%s576 + $0x2c] sm:$0xf]
      %v589 = vld [vmem:[%s576 + $0x30] sm:$0xf]
      %v590 = vld [vmem:[%s576 + $0x34] sm:$0xf]
      %v591 = vld [vmem:[%s576 + $0x38] sm:$0xf]
      %v592 = vld [vmem:[%s576 + $0x3c] sm:$0xf]
      %v609 = vunpack.c.l.b16 %v577
      %v610 = vunpack.c.l.b16 %v578
      %v611 = vunpack.c.l.b16 %v579
      %v612 = vunpack.c.l.b16 %v580
      %v613 = vunpack.c.l.b16 %v581
      %v614 = vunpack.c.l.b16 %v582
      %v615 = vunpack.c.l.b16 %v583
      %v616 = vunpack.c.l.b16 %v584
      %v617 = vunpack.c.l.b16 %v585
      %v618 = vunpack.c.l.b16 %v586
      %v619 = vunpack.c.l.b16 %v587
      %v620 = vunpack.c.l.b16 %v588
      %v621 = vunpack.c.l.b16 %v589
      %v622 = vunpack.c.l.b16 %v590
      %v623 = vunpack.c.l.b16 %v591
      %v624 = vunpack.c.l.b16 %v592
      %v625 = vpack.c.b16 %v610, %v609
      %v626 = vpack.c.b16 %v612, %v611
      %v627 = vpack.c.b16 %v614, %v613
      %v628 = vpack.c.b16 %v616, %v615
      %v629 = vpack.c.b16 %v618, %v617
      %v630 = vpack.c.b16 %v620, %v619
      %v631 = vpack.c.b16 %v622, %v621
      %v632 = vpack.c.b16 %v624, %v623
      %641 = vmatprep.subr.bf16.mxu0 0
      %642 = vmatpush1.bf16.msra.mxu0 %v625
      %643 = vmatprep.subr.bf16.mxu0 0
      %644 = vmatpush1.bf16.msra.mxu0 %v626
      %645 = vmatprep.subr.bf16.mxu0 0
      %646 = vmatpush1.bf16.msra.mxu0 %v627
      %647 = vmatprep.subr.bf16.mxu0 0
      %648 = vmatpush1.bf16.msra.mxu0 %v628
      %649 = vmatprep.subr.bf16.mxu0 0
      %650 = vmatpush1.bf16.msra.mxu0 %v629
      %651 = vmatprep.subr.bf16.mxu0 0
      %652 = vmatpush1.bf16.msra.mxu0 %v630
      %653 = vmatprep.subr.bf16.mxu0 0
      %654 = vmatpush1.bf16.msra.mxu0 %v631
      %655 = vmatprep.subr.bf16.mxu0 0
      %656 = vmatpush1.bf16.msra.mxu0 %v632
      %657 = vmatprep.subr.bf16.mxu0 0
      %658 = vmatpush1.bf16.msra.mxu0 0
      %659 = vmatprep.subr.bf16.mxu0 0
      %660 = vmatpush1.bf16.msra.mxu0 0
      %661 = vmatprep.subr.bf16.mxu0 0
      %662 = vmatpush1.bf16.msra.mxu0 0
      %663 = vmatprep.subr.bf16.mxu0 0
      %664 = vmatpush1.bf16.msra.mxu0 0
      %665 = vmatprep.subr.bf16.mxu0 0
      %666 = vmatpush1.bf16.msra.mxu0 0
      %667 = vmatprep.subr.bf16.mxu0 0
      %668 = vmatpush1.bf16.msra.mxu0 0
      %669 = vmatprep.subr.bf16.mxu0 0
      %670 = vmatpush1.bf16.msra.mxu0 0
      %671 = vmatprep.subr.bf16.mxu0 0
      %672 = vmatpush1.bf16.msra.mxu0 0
      %673 = vmatprep.mubr.bf16.mxu0 0
      %674 = vmatmul.mubr.bf16.gmra.mrb[0].mxu0 %v544
      %v675 = vpop.f32.mrb[0].mxu0
      %v676 = vadd.f32 0.0, %v675
      %v677 = vpop.f32.mrb[0].mxu0
      %v678 = vpop.f32.mrb[0].mxu0
      %v679 = vadd.f32 0.0, %v678
      %v680 = vpop.f32.mrb[0].mxu0
      %681 = vmatprep.mubr.bf16.mxu0 0
      %682 = vmatmul.mubr.bf16.gmra.mrb[0].mxu0 %v545
      %v683 = vpop.f32.mrb[0].mxu0
      %v684 = vadd.f32 0.0, %v683
      %v685 = vpop.f32.mrb[0].mxu0
      %v686 = vpop.f32.mrb[0].mxu0
      %v687 = vadd.f32 0.0, %v686
      %v688 = vpop.f32.mrb[0].mxu0
      %689 = vmatprep.mubr.bf16.mxu0 0
      %690 = vmatmul.mubr.bf16.gmra.mrb[0].mxu0 %v546
      %v691 = vpop.f32.mrb[0].mxu0
      %v692 = vadd.f32 0.0, %v691
      %v693 = vpop.f32.mrb[0].mxu0
      %v694 = vpop.f32.mrb[0].mxu0
      %v695 = vadd.f32 0.0, %v694
      %v696 = vpop.f32.mrb[0].mxu0
      %697 = vmatprep.mubr.bf16.mxu0 0
      %698 = vmatmul.mubr.bf16.gmra.mrb[0].mxu0 %v547
      %v699 = vpop.f32.mrb[0].mxu0
      %v700 = vadd.f32 0.0, %v699
      %v701 = vpop.f32.mrb[0].mxu0
      %v702 = vpop.f32.mrb[0].mxu0
      %v703 = vadd.f32 0.0, %v702
      %v704 = vpop.f32.mrb[0].mxu0
      %705 = vmatprep.mubr.bf16.mxu0 0
      %706 = vmatmul.mubr.bf16.gmra.mrb[0].mxu0 %v548
      %v707 = vpop.f32.mrb[0].mxu0
      %v708 = vadd.f32 0.0, %v707
      %v709 = vpop.f32.mrb[0].mxu0
      %v710 = vpop.f32.mrb[0].mxu0
      %v711 = vadd.f32 0.0, %v710
      %v712 = vpop.f32.mrb[0].mxu0
      %713 = vmatprep.mubr.bf16.mxu0 0
      %714 = vmatmul.mubr.bf16.gmra.mrb[0].mxu0 %v549
      %v715 = vpop.f32.mrb[0].mxu0
      %v716 = vadd.f32 0.0, %v715
      %v717 = vpop.f32.mrb[0].mxu0
      %v718 = vpop.f32.mrb[0].mxu0
      %v719 = vadd.f32 0.0, %v718
      %v720 = vpop.f32.mrb[0].mxu0
      %721 = vmatprep.mubr.bf16.mxu0 0
      %722 = vmatmul.mubr.bf16.gmra.mrb[0].mxu0 %v550
      %v723 = vpop.f32.mrb[0].mxu0
      %v724 = vadd.f32 0.0, %v723
      %v725 = vpop.f32.mrb[0].mxu0
      %v726 = vpop.f32.mrb[0].mxu0
      %v727 = vadd.f32 0.0, %v726
      %v728 = vpop.f32.mrb[0].mxu0
      %729 = vmatprep.mubr.bf16.mxu0 0
      %730 = vmatmul.mubr.bf16.gmra.mrb[0].mxu0 %v551
      %v731 = vpop.f32.mrb[0].mxu0
      %v732 = vadd.f32 0.0, %v731
      %v733 = vpop.f32.mrb[0].mxu0
      %v734 = vpop.f32.mrb[0].mxu0
      %v735 = vadd.f32 0.0, %v734
      %v736 = vpop.f32.mrb[0].mxu0
      %737 = vmatprep.mubr.bf16.mxu0 0
      %738 = vmatmul.mubr.bf16.gmra.mrb[0].mxu0 %v552
      %v739 = vpop.f32.mrb[0].mxu0
      %v740 = vadd.f32 0.0, %v739
      %v741 = vpop.f32.mrb[0].mxu0
      %v742 = vpop.f32.mrb[0].mxu0
      %v743 = vadd.f32 0.0, %v742
      %v744 = vpop.f32.mrb[0].mxu0
      %745 = vmatprep.mubr.bf16.mxu0 0
      %746 = vmatmul.mubr.bf16.gmra.mrb[0].mxu0 %v553
      %v747 = vpop.f32.mrb[0].mxu0
      %v748 = vadd.f32 0.0, %v747
      %v749 = vpop.f32.mrb[0].mxu0
      %v750 = vpop.f32.mrb[0].mxu0
      %v751 = vadd.f32 0.0, %v750
      %v752 = vpop.f32.mrb[0].mxu0
      %753 = vmatprep.mubr.bf16.mxu0 0
      %754 = vmatmul.mubr.bf16.gmra.mrb[0].mxu0 %v554
      %v755 = vpop.f32.mrb[0].mxu0
      %v756 = vadd.f32 0.0, %v755
      %v757 = vpop.f32.mrb[0].mxu0
      %v758 = vpop.f32.mrb[0].mxu0
      %v759 = vadd.f32 0.0, %v758
      %v760 = vpop.f32.mrb[0].mxu0
      %761 = vmatprep.mubr.bf16.mxu0 0
      %762 = vmatmul.mubr.bf16.gmra.mrb[0].mxu0 %v555
      %v763 = vpop.f32.mrb[0].mxu0
      %v764 = vadd.f32 0.0, %v763
      %v765 = vpop.f32.mrb[0].mxu0
      %v766 = vpop.f32.mrb[0].mxu0
      %v767 = vadd.f32 0.0, %v766
      %v768 = vpop.f32.mrb[0].mxu0
      %769 = vmatprep.mubr.bf16.mxu0 0
      %770 = vmatmul.mubr.bf16.gmra.mrb[0].mxu0 %v556
      %v771 = vpop.f32.mrb[0].mxu0
      %v772 = vadd.f32 0.0, %v771
      %v773 = vpop.f32.mrb[0].mxu0
      %v774 = vpop.f32.mrb[0].mxu0
      %v775 = vadd.f32 0.0, %v774
      %v776 = vpop.f32.mrb[0].mxu0
      %777 = vmatprep.mubr.bf16.mxu0 0
      %778 = vmatmul.mubr.bf16.gmra.mrb[0].mxu0 %v557
      %v779 = vpop.f32.mrb[0].mxu0
      %v780 = vadd.f32 0.0, %v779
      %v781 = vpop.f32.mrb[0].mxu0
      %v782 = vpop.f32.mrb[0].mxu0
      %v783 = vadd.f32 0.0, %v782
      %v784 = vpop.f32.mrb[0].mxu0
      %785 = vmatprep.mubr.bf16.mxu0 0
      %786 = vmatmul.mubr.bf16.gmra.mrb[0].mxu0 %v558
      %v787 = vpop.f32.mrb[0].mxu0
      %v788 = vadd.f32 0.0, %v787
      %v789 = vpop.f32.mrb[0].mxu0
      %v790 = vpop.f32.mrb[0].mxu0
      %v791 = vadd.f32 0.0, %v790
      %v792 = vpop.f32.mrb[0].mxu0
      %793 = vmatprep.mubr.bf16.mxu0 0
      %794 = vmatmul.mubr.bf16.gmra.mrb[0].mxu0 %v575
      %v795 = vpop.f32.mrb[0].mxu0
      %v796 = vadd.f32 0.0, %v795
      %v797 = vpop.f32.mrb[0].mxu0
      %v798 = vpop.f32.mrb[0].mxu0
      %v799 = vadd.f32 0.0, %v798
      %v800 = vpop.f32.mrb[0].mxu0
      %801 = vdwg.mxu0
      %v818 = vunpack.c.l.b16 %v559
      %v819 = vunpack.c.l.b16 %v560
      %v820 = vunpack.c.l.b16 %v561
      %v821 = vunpack.c.l.b16 %v562
      %v822 = vunpack.c.l.b16 %v563
      %v823 = vunpack.c.l.b16 %v564
      %v824 = vunpack.c.l.b16 %v565
      %v825 = vunpack.c.l.b16 %v566
      %v826 = vunpack.c.l.b16 %v567
      %v827 = vunpack.c.l.b16 %v568
      %v828 = vunpack.c.l.b16 %v569
      %v829 = vunpack.c.l.b16 %v570
      %v830 = vunpack.c.l.b16 %v571
      %v831 = vunpack.c.l.b16 %v572
      %v832 = vunpack.c.l.b16 %v573
      %v833 = vunpack.c.l.b16 %v574
      %v834 = vpack.c.b16 %v819, %v818
      %v835 = vpack.c.b16 %v821, %v820
      %v836 = vpack.c.b16 %v823, %v822
      %v837 = vpack.c.b16 %v825, %v824
      %v838 = vpack.c.b16 %v827, %v826
      %v839 = vpack.c.b16 %v829, %v828
      %v840 = vpack.c.b16 %v831, %v830
      %v841 = vpack.c.b16 %v833, %v832
      %850 = vmatprep.subr.bf16.mxu0 0
      %851 = vmatpush1.bf16.msra.mxu0 %v834
      %852 = vmatprep.subr.bf16.mxu0 0
      %853 = vmatpush1.bf16.msra.mxu0 %v835
      %854 = vmatprep.subr.bf16.mxu0 0
      %855 = vmatpush1.bf16.msra.mxu0 %v836
      %856 = vmatprep.subr.bf16.mxu0 0
      %857 = vmatpush1.bf16.msra.mxu0 %v837
      %858 = vmatprep.subr.bf16.mxu0 0
      %859 = vmatpush1.bf16.msra.mxu0 %v838
      %860 = vmatprep.subr.bf16.mxu0 0
      %861 = vmatpush1.bf16.msra.mxu0 %v839
      %862 = vmatprep.subr.bf16.mxu0 0
      %863 = vmatpush1.bf16.msra.mxu0 %v840
      %864 = vmatprep.subr.bf16.mxu0 0
      %865 = vmatpush1.bf16.msra.mxu0 %v841
      %866 = vmatprep.subr.bf16.mxu0 0
      %867 = vmatpush1.bf16.msra.mxu0 0
      %868 = vmatprep.subr.bf16.mxu0 0
      %869 = vmatpush1.bf16.msra.mxu0 0
      %870 = vmatprep.subr.bf16.mxu0 0
      %871 = vmatpush1.bf16.msra.mxu0 0
      %872 = vmatprep.subr.bf16.mxu0 0
      %873 = vmatpush1.bf16.msra.mxu0 0
      %874 = vmatprep.subr.bf16.mxu0 0
      %875 = vmatpush1.bf16.msra.mxu0 0
      %876 = vmatprep.subr.bf16.mxu0 0
      %877 = vmatpush1.bf16.msra.mxu0 0
      %878 = vmatprep.subr.bf16.mxu0 0
      %879 = vmatpush1.bf16.msra.mxu0 0
      %880 = vmatprep.subr.bf16.mxu0 0
      %881 = vmatpush1.bf16.msra.mxu0 0
      %882 = vmatprep.mubr.bf16.mxu0 0
      %883 = vmatmul.mubr.bf16.gmra.mrb[0].mxu0 %v543
      %v884 = vpop.f32.mrb[0].mxu0
      %v885 = vadd.f32 %v676, %v884
      %v886 = vpop.f32.mrb[0].mxu0
      %v887 = vpop.f32.mrb[0].mxu0
      %v888 = vadd.f32 %v679, %v887
      %v889 = vpop.f32.mrb[0].mxu0
      %890 = vmatprep.mubr.bf16.mxu0 0
      %891 = vmatmul.mubr.bf16.gmra.mrb[0].mxu0 %v544
      %v892 = vpop.f32.mrb[0].mxu0
      %v893 = vadd.f32 %v684, %v892
      %v894 = vpop.f32.mrb[0].mxu0
      %v895 = vpop.f32.mrb[0].mxu0
      %v896 = vadd.f32 %v687, %v895
      %v897 = vpop.f32.mrb[0].mxu0
      %898 = vmatprep.mubr.bf16.mxu0 0
      %899 = vmatmul.mubr.bf16.gmra.mrb[0].mxu0 %v545
      %v900 = vpop.f32.mrb[0].mxu0
      %v901 = vadd.f32 %v692, %v900
      %v902 = vpop.f32.mrb[0].mxu0
      %v903 = vpop.f32.mrb[0].mxu0
      %v904 = vadd.f32 %v695, %v903
      %v905 = vpop.f32.mrb[0].mxu0
      %906 = vmatprep.mubr.bf16.mxu0 0
      %907 = vmatmul.mubr.bf16.gmra.mrb[0].mxu0 %v546
      %v908 = vpop.f32.mrb[0].mxu0
      %v909 = vadd.f32 %v700, %v908
      %v910 = vpop.f32.mrb[0].mxu0
      %v911 = vpop.f32.mrb[0].mxu0
      %v912 = vadd.f32 %v703, %v911
      %v913 = vpop.f32.mrb[0].mxu0
      %914 = vmatprep.mubr.bf16.mxu0 0
      %915 = vmatmul.mubr.bf16.gmra.mrb[0].mxu0 %v547
      %v916 = vpop.f32.mrb[0].mxu0
      %v917 = vadd.f32 %v708, %v916
      %v918 = vpop.f32.mrb[0].mxu0
      %v919 = vpop.f32.mrb[0].mxu0
      %v920 = vadd.f32 %v711, %v919
      %v921 = vpop.f32.mrb[0].mxu0
      %922 = vmatprep.mubr.bf16.mxu0 0
      %923 = vmatmul.mubr.bf16.gmra.mrb[0].mxu0 %v548
      %v924 = vpop.f32.mrb[0].mxu0
      %v925 = vadd.f32 %v716, %v924
      %v926 = vpop.f32.mrb[0].mxu0
      %v927 = vpop.f32.mrb[0].mxu0
      %v928 = vadd.f32 %v719, %v927
      %v929 = vpop.f32.mrb[0].mxu0
      %930 = vmatprep.mubr.bf16.mxu0 0
      %931 = vmatmul.mubr.bf16.gmra.mrb[0].mxu0 %v549
      %v932 = vpop.f32.mrb[0].mxu0
      %v933 = vadd.f32 %v724, %v932
      %v934 = vpop.f32.mrb[0].mxu0
      %v935 = vpop.f32.mrb[0].mxu0
      %v936 = vadd.f32 %v727, %v935
      %v937 = vpop.f32.mrb[0].mxu0
      %938 = vmatprep.mubr.bf16.mxu0 0
      %939 = vmatmul.mubr.bf16.gmra.mrb[0].mxu0 %v550
      %v940 = vpop.f32.mrb[0].mxu0
      %v941 = vadd.f32 %v732, %v940
      %v942 = vpop.f32.mrb[0].mxu0
      %v943 = vpop.f32.mrb[0].mxu0
      %v944 = vadd.f32 %v735, %v943
      %v945 = vpop.f32.mrb[0].mxu0
      %946 = vmatprep.mubr.bf16.mxu0 0
      %947 = vmatmul.mubr.bf16.gmra.mrb[0].mxu0 %v551
      %v948 = vpop.f32.mrb[0].mxu0
      %v949 = vadd.f32 %v740, %v948
      %v950 = vpop.f32.mrb[0].mxu0
      %v951 = vpop.f32.mrb[0].mxu0
      %v952 = vadd.f32 %v743, %v951
      %v953 = vpop.f32.mrb[0].mxu0
      %954 = vmatprep.mubr.bf16.mxu0 0
      %955 = vmatmul.mubr.bf16.gmra.mrb[0].mxu0 %v552
      %v956 = vpop.f32.mrb[0].mxu0
      %v957 = vadd.f32 %v748, %v956
      %v958 = vpop.f32.mrb[0].mxu0
      %v959 = vpop.f32.mrb[0].mxu0
      %v960 = vadd.f32 %v751, %v959
      %v961 = vpop.f32.mrb[0].mxu0
      %962 = vmatprep.mubr.bf16.mxu0 0
      %963 = vmatmul.mubr.bf16.gmra.mrb[0].mxu0 %v553
      %v964 = vpop.f32.mrb[0].mxu0
      %v965 = vadd.f32 %v756, %v964
      %v966 = vpop.f32.mrb[0].mxu0
      %v967 = vpop.f32.mrb[0].mxu0
      %v968 = vadd.f32 %v759, %v967
      %v969 = vpop.f32.mrb[0].mxu0
      %970 = vmatprep.mubr.bf16.mxu0 0
      %971 = vmatmul.mubr.bf16.gmra.mrb[0].mxu0 %v554
      %v972 = vpop.f32.mrb[0].mxu0
      %v973 = vadd.f32 %v764, %v972
      %v974 = vpop.f32.mrb[0].mxu0
      %v975 = vpop.f32.mrb[0].mxu0
      %v976 = vadd.f32 %v767, %v975
      %v977 = vpop.f32.mrb[0].mxu0
      %978 = vmatprep.mubr.bf16.mxu0 0
      %979 = vmatmul.mubr.bf16.gmra.mrb[0].mxu0 %v555
      %v980 = vpop.f32.mrb[0].mxu0
      %v981 = vadd.f32 %v772, %v980
      %v982 = vpop.f32.mrb[0].mxu0
      %v983 = vpop.f32.mrb[0].mxu0
      %v984 = vadd.f32 %v775, %v983
      %v985 = vpop.f32.mrb[0].mxu0
      %986 = vmatprep.mubr.bf16.mxu0 0
      %987 = vmatmul.mubr.bf16.gmra.mrb[0].mxu0 %v556
      %v988 = vpop.f32.mrb[0].mxu0
      %v989 = vadd.f32 %v780, %v988
      %v990 = vpop.f32.mrb[0].mxu0
      %v991 = vpop.f32.mrb[0].mxu0
      %v992 = vadd.f32 %v783, %v991
      %v993 = vpop.f32.mrb[0].mxu0
      %994 = vmatprep.mubr.bf16.mxu0 0
      %995 = vmatmul.mubr.bf16.gmra.mrb[0].mxu0 %v557
      %v996 = vpop.f32.mrb[0].mxu0
      %v997 = vadd.f32 %v788, %v996
      %v998 = vpop.f32.mrb[0].mxu0
      %v999 = vpop.f32.mrb[0].mxu0
      %v1000 = vadd.f32 %v791, %v999
      %v1001 = vpop.f32.mrb[0].mxu0
      %1002 = vmatprep.mubr.bf16.mxu0 0
      %1003 = vmatmul.mubr.bf16.gmra.mrb[0].mxu0 %v558
      %v1004 = vpop.f32.mrb[0].mxu0
      %v1005 = vadd.f32 %v796, %v1004
      %v1006 = vpop.f32.mrb[0].mxu0
      %v1007 = vpop.f32.mrb[0].mxu0
      %v1008 = vadd.f32 %v799, %v1007
      %v1009 = vpop.f32.mrb[0].mxu0
      %1010 = vdwg.mxu0
      %v1011 = vpack.c.bf16 %v541, %v540
      %s1012 = scalar_lea.vmem %s3, 384
      %v1013 = vld [vmem:[%s1012] sm:$0xf]
      %v1014 = vld [vmem:[%s1012 + $0x4] sm:$0xf]
      %v1015 = vld [vmem:[%s1012 + $0x8] sm:$0xf]
      %v1016 = vld [vmem:[%s1012 + $0xc] sm:$0xf]
      %v1017 = vld [vmem:[%s1012 + $0x10] sm:$0xf]
      %v1018 = vld [vmem:[%s1012 + $0x14] sm:$0xf]
      %v1019 = vld [vmem:[%s1012 + $0x18] sm:$0xf]
      %v1020 = vld [vmem:[%s1012 + $0x1c] sm:$0xf]
      %v1021 = vld [vmem:[%s1012 + $0x20] sm:$0xf]
      %v1022 = vld [vmem:[%s1012 + $0x24] sm:$0xf]
      %v1023 = vld [vmem:[%s1012 + $0x28] sm:$0xf]
      %v1024 = vld [vmem:[%s1012 + $0x2c] sm:$0xf]
      %v1025 = vld [vmem:[%s1012 + $0x30] sm:$0xf]
      %v1026 = vld [vmem:[%s1012 + $0x34] sm:$0xf]
      %v1027 = vld [vmem:[%s1012 + $0x38] sm:$0xf]
      %v1028 = vld [vmem:[%s1012 + $0x3c] sm:$0xf]
      %v1045 = vunpack.c.l.b16 %v1013
      %v1046 = vunpack.c.l.b16 %v1014
      %v1047 = vunpack.c.l.b16 %v1015
      %v1048 = vunpack.c.l.b16 %v1016
      %v1049 = vunpack.c.l.b16 %v1017
      %v1050 = vunpack.c.l.b16 %v1018
      %v1051 = vunpack.c.l.b16 %v1019
      %v1052 = vunpack.c.l.b16 %v1020
      %v1053 = vunpack.c.l.b16 %v1021
      %v1054 = vunpack.c.l.b16 %v1022
      %v1055 = vunpack.c.l.b16 %v1023
      %v1056 = vunpack.c.l.b16 %v1024
      %v1057 = vunpack.c.l.b16 %v1025
      %v1058 = vunpack.c.l.b16 %v1026
      %v1059 = vunpack.c.l.b16 %v1027
      %v1060 = vunpack.c.l.b16 %v1028
      %v1061 = vpack.c.b16 %v1046, %v1045
      %v1062 = vpack.c.b16 %v1048, %v1047
      %v1063 = vpack.c.b16 %v1050, %v1049
      %v1064 = vpack.c.b16 %v1052, %v1051
      %v1065 = vpack.c.b16 %v1054, %v1053
      %v1066 = vpack.c.b16 %v1056, %v1055
      %v1067 = vpack.c.b16 %v1058, %v1057
      %v1068 = vpack.c.b16 %v1060, %v1059
      %1077 = vmatprep.subr.bf16.mxu0 0
      %1078 = vmatpush1.bf16.msra.mxu0 %v1061
      %1079 = vmatprep.subr.bf16.mxu0 0
      %1080 = vmatpush1.bf16.msra.mxu0 %v1062
      %1081 = vmatprep.subr.bf16.mxu0 0
      %1082 = vmatpush1.bf16.msra.mxu0 %v1063
      %1083 = vmatprep.subr.bf16.mxu0 0
      %1084 = vmatpush1.bf16.msra.mxu0 %v1064
      %1085 = vmatprep.subr.bf16.mxu0 0
      %1086 = vmatpush1.bf16.msra.mxu0 %v1065
      %1087 = vmatprep.subr.bf16.mxu0 0
      %1088 = vmatpush1.bf16.msra.mxu0 %v1066
      %1089 = vmatprep.subr.bf16.mxu0 0
      %1090 = vmatpush1.bf16.msra.mxu0 %v1067
      %1091 = vmatprep.subr.bf16.mxu0 0
      %1092 = vmatpush1.bf16.msra.mxu0 %v1068
      %1093 = vmatprep.subr.bf16.mxu0 0
      %1094 = vmatpush1.bf16.msra.mxu0 0
      %1095 = vmatprep.subr.bf16.mxu0 0
      %1096 = vmatpush1.bf16.msra.mxu0 0
      %1097 = vmatprep.subr.bf16.mxu0 0
      %1098 = vmatpush1.bf16.msra.mxu0 0
      %1099 = vmatprep.subr.bf16.mxu0 0
      %1100 = vmatpush1.bf16.msra.mxu0 0
      %1101 = vmatprep.subr.bf16.mxu0 0
      %1102 = vmatpush1.bf16.msra.mxu0 0
      %1103 = vmatprep.subr.bf16.mxu0 0
      %1104 = vmatpush1.bf16.msra.mxu0 0
      %1105 = vmatprep.subr.bf16.mxu0 0
      %1106 = vmatpush1.bf16.msra.mxu0 0
      %1107 = vmatprep.subr.bf16.mxu0 0
      %1108 = vmatpush1.bf16.msra.mxu0 0
      %1109 = vmatprep.mubr.bf16.mxu0 0
      %1110 = vmatmul.mubr.bf16.gmra.mrb[0].mxu0 %v545
      %v1111 = vpop.f32.mrb[0].mxu0
      %v1112 = vadd.f32 0.0, %v1111
      %v1113 = vpop.f32.mrb[0].mxu0
      %v1114 = vpop.f32.mrb[0].mxu0
      %v1115 = vadd.f32 0.0, %v1114
      %v1116 = vpop.f32.mrb[0].mxu0
      %1117 = vmatprep.mubr.bf16.mxu0 0
      %1118 = vmatmul.mubr.bf16.gmra.mrb[0].mxu0 %v546
      %v1119 = vpop.f32.mrb[0].mxu0
      %v1120 = vadd.f32 0.0, %v1119
      %v1121 = vpop.f32.mrb[0].mxu0
      %v1122 = vpop.f32.mrb[0].mxu0
      %v1123 = vadd.f32 0.0, %v1122
      %v1124 = vpop.f32.mrb[0].mxu0
      %1125 = vmatprep.mubr.bf16.mxu0 0
      %1126 = vmatmul.mubr.bf16.gmra.mrb[0].mxu0 %v547
      %v1127 = vpop.f32.mrb[0].mxu0
      %v1128 = vadd.f32 0.0, %v1127
      %v1129 = vpop.f32.mrb[0].mxu0
      %v1130 = vpop.f32.mrb[0].mxu0
      %v1131 = vadd.f32 0.0, %v1130
      %v1132 = vpop.f32.mrb[0].mxu0
      %1133 = vmatprep.mubr.bf16.mxu0 0
      %1134 = vmatmul.mubr.bf16.gmra.mrb[0].mxu0 %v548
      %v1135 = vpop.f32.mrb[0].mxu0
      %v1136 = vadd.f32 0.0, %v1135
      %v1137 = vpop.f32.mrb[0].mxu0
      %v1138 = vpop.f32.mrb[0].mxu0
      %v1139 = vadd.f32 0.0, %v1138
      %v1140 = vpop.f32.mrb[0].mxu0
      %1141 = vmatprep.mubr.bf16.mxu0 0
      %1142 = vmatmul.mubr.bf16.gmra.mrb[0].mxu0 %v549
      %v1143 = vpop.f32.mrb[0].mxu0
      %v1144 = vadd.f32 0.0, %v1143
      %v1145 = vpop.f32.mrb[0].mxu0
      %v1146 = vpop.f32.mrb[0].mxu0
      %v1147 = vadd.f32 0.0, %v1146
      %v1148 = vpop.f32.mrb[0].mxu0
      %1149 = vmatprep.mubr.bf16.mxu0 0
      %1150 = vmatmul.mubr.bf16.gmra.mrb[0].mxu0 %v550
      %v1151 = vpop.f32.mrb[0].mxu0
      %v1152 = vadd.f32 0.0, %v1151
      %v1153 = vpop.f32.mrb[0].mxu0
      %v1154 = vpop.f32.mrb[0].mxu0
      %v1155 = vadd.f32 0.0, %v1154
      %v1156 = vpop.f32.mrb[0].mxu0
      %1157 = vmatprep.mubr.bf16.mxu0 0
      %1158 = vmatmul.mubr.bf16.gmra.mrb[0].mxu0 %v551
      %v1159 = vpop.f32.mrb[0].mxu0
      %v1160 = vadd.f32 0.0, %v1159
      %v1161 = vpop.f32.mrb[0].mxu0
      %v1162 = vpop.f32.mrb[0].mxu0
      %v1163 = vadd.f32 0.0, %v1162
      %v1164 = vpop.f32.mrb[0].mxu0
      %1165 = vmatprep.mubr.bf16.mxu0 0
      %1166 = vmatmul.mubr.bf16.gmra.mrb[0].mxu0 %v552
      %v1167 = vpop.f32.mrb[0].mxu0
      %v1168 = vadd.f32 0.0, %v1167
      %v1169 = vpop.f32.mrb[0].mxu0
      %v1170 = vpop.f32.mrb[0].mxu0
      %v1171 = vadd.f32 0.0, %v1170
      %v1172 = vpop.f32.mrb[0].mxu0
      %1173 = vmatprep.mubr.bf16.mxu0 0
      %1174 = vmatmul.mubr.bf16.gmra.mrb[0].mxu0 %v553
      %v1175 = vpop.f32.mrb[0].mxu0
      %v1176 = vadd.f32 0.0, %v1175
      %v1177 = vpop.f32.mrb[0].mxu0
      %v1178 = vpop.f32.mrb[0].mxu0
      %v1179 = vadd.f32 0.0, %v1178
      %v1180 = vpop.f32.mrb[0].mxu0
      %1181 = vmatprep.mubr.bf16.mxu0 0
      %1182 = vmatmul.mubr.bf16.gmra.mrb[0].mxu0 %v554
      %v1183 = vpop.f32.mrb[0].mxu0
      %v1184 = vadd.f32 0.0, %v1183
      %v1185 = vpop.f32.mrb[0].mxu0
      %v1186 = vpop.f32.mrb[0].mxu0
      %v1187 = vadd.f32 0.0, %v1186
      %v1188 = vpop.f32.mrb[0].mxu0
      %1189 = vmatprep.mubr.bf16.mxu0 0
      %1190 = vmatmul.mubr.bf16.gmra.mrb[0].mxu0 %v555
      %v1191 = vpop.f32.mrb[0].mxu0
      %v1192 = vadd.f32 0.0, %v1191
      %v1193 = vpop.f32.mrb[0].mxu0
      %v1194 = vpop.f32.mrb[0].mxu0
      %v1195 = vadd.f32 0.0, %v1194
      %v1196 = vpop.f32.mrb[0].mxu0
      %1197 = vmatprep.mubr.bf16.mxu0 0
      %1198 = vmatmul.mubr.bf16.gmra.mrb[0].mxu0 %v556
      %v1199 = vpop.f32.mrb[0].mxu0
      %v1200 = vadd.f32 0.0, %v1199
      %v1201 = vpop.f32.mrb[0].mxu0
      %v1202 = vpop.f32.mrb[0].mxu0
      %v1203 = vadd.f32 0.0, %v1202
      %v1204 = vpop.f32.mrb[0].mxu0
      %1205 = vmatprep.mubr.bf16.mxu0 0
      %1206 = vmatmul.mubr.bf16.gmra.mrb[0].mxu0 %v557
      %v1207 = vpop.f32.mrb[0].mxu0
      %v1208 = vadd.f32 0.0, %v1207
      %v1209 = vpop.f32.mrb[0].mxu0
      %v1210 = vpop.f32.mrb[0].mxu0
      %v1211 = vadd.f32 0.0, %v1210
      %v1212 = vpop.f32.mrb[0].mxu0
      %1213 = vmatprep.mubr.bf16.mxu0 0
      %1214 = vmatmul.mubr.bf16.gmra.mrb[0].mxu0 %v558
      %v1215 = vpop.f32.mrb[0].mxu0
      %v1216 = vadd.f32 0.0, %v1215
      %v1217 = vpop.f32.mrb[0].mxu0
      %v1218 = vpop.f32.mrb[0].mxu0
      %v1219 = vadd.f32 0.0, %v1218
      %v1220 = vpop.f32.mrb[0].mxu0
      %1221 = vmatprep.mubr.bf16.mxu0 0
      %1222 = vmatmul.mubr.bf16.gmra.mrb[0].mxu0 %v575
      %v1223 = vpop.f32.mrb[0].mxu0
      %v1224 = vadd.f32 0.0, %v1223
      %v1225 = vpop.f32.mrb[0].mxu0
      %v1226 = vpop.f32.mrb[0].mxu0
      %v1227 = vadd.f32 0.0, %v1226
      %v1228 = vpop.f32.mrb[0].mxu0
      %1229 = vmatprep.mubr.bf16.mxu0 0
      %1230 = vmatmul.mubr.bf16.gmra.mrb[0].mxu0 %v1011
      %v1231 = vpop.f32.mrb[0].mxu0
      %v1232 = vadd.f32 0.0, %v1231
      %v1233 = vpop.f32.mrb[0].mxu0
      %v1234 = vpop.f32.mrb[0].mxu0
      %v1235 = vadd.f32 0.0, %v1234
      %v1236 = vpop.f32.mrb[0].mxu0
      %1237 = vdwg.mxu0
      %v1238 = vadd.f32 %v885, %v1112
      %v1239 = vadd.f32 %v888, %v1115
      %v1240 = vadd.f32 %v893, %v1120
      %v1241 = vadd.f32 %v896, %v1123
      %v1242 = vadd.f32 %v901, %v1128
      %v1243 = vadd.f32 %v904, %v1131
      %v1244 = vadd.f32 %v909, %v1136
      %v1245 = vadd.f32 %v912, %v1139
      %v1246 = vadd.f32 %v917, %v1144
      %v1247 = vadd.f32 %v920, %v1147
      %v1248 = vadd.f32 %v925, %v1152
      %v1249 = vadd.f32 %v928, %v1155
      %v1250 = vadd.f32 %v933, %v1160
      %v1251 = vadd.f32 %v936, %v1163
      %v1252 = vadd.f32 %v941, %v1168
      %v1253 = vadd.f32 %v944, %v1171
      %v1254 = vadd.f32 %v949, %v1176
      %v1255 = vadd.f32 %v952, %v1179
      %v1256 = vadd.f32 %v957, %v1184
      %v1257 = vadd.f32 %v960, %v1187
      %v1258 = vadd.f32 %v965, %v1192
      %v1259 = vadd.f32 %v968, %v1195
      %v1260 = vadd.f32 %v973, %v1200
      %v1261 = vadd.f32 %v976, %v1203
      %v1262 = vadd.f32 %v981, %v1208
      %v1263 = vadd.f32 %v984, %v1211
      %v1264 = vadd.f32 %v989, %v1216
      %v1265 = vadd.f32 %v992, %v1219
      %v1266 = vadd.f32 %v997, %v1224
      %v1267 = vadd.f32 %v1000, %v1227
      %v1268 = vadd.f32 %v1005, %v1232
      %v1269 = vadd.f32 %v1008, %v1235
      %vm1324 = vcmask 1046528
      %v1325 = vrot.slane %v489, 1
      %v1326 = vrot.slane %v490, 1
      %v1327 = vsel %vm1324, %v1325, %v1326
      %v1328 = vrot.slane %v491, 1
      %v1329 = vsel %vm1324, %v1326, %v1328
      %v1330 = vrot.slane %v492, 1
      %v1331 = vrot.slane %v493, 1
      %v1332 = vsel %vm1324, %v1330, %v1331
      %v1333 = vrot.slane %v494, 1
      %v1334 = vsel %vm1324, %v1331, %v1333
      %v1335 = vrot.slane %v495, 1
      %v1336 = vrot.slane %v496, 1
      %v1337 = vsel %vm1324, %v1335, %v1336
      %v1338 = vrot.slane %v497, 1
      %v1339 = vsel %vm1324, %v1336, %v1338
      %v1340 = vrot.slane %v498, 1
      %v1341 = vrot.slane %v499, 1
      %v1342 = vsel %vm1324, %v1340, %v1341
      %v1343 = vrot.slane %v500, 1
      %v1344 = vsel %vm1324, %v1341, %v1343
      %v1345 = vrot.slane %v501, 1
      %v1346 = vrot.slane %v502, 1
      %v1347 = vsel %vm1324, %v1345, %v1346
      %v1348 = vrot.slane %v503, 1
      %v1349 = vsel %vm1324, %v1346, %v1348
      %v1350 = vrot.slane %v504, 1
      %v1351 = vrot.slane %v505, 1
      %v1352 = vsel %vm1324, %v1350, %v1351
      %v1353 = vrot.slane %v506, 1
      %v1354 = vsel %vm1324, %v1351, %v1353
      %v1355 = vrot.slane %v507, 1
      %v1356 = vrot.slane %v508, 1
      %v1357 = vsel %vm1324, %v1355, %v1356
      %v1358 = vrot.slane %v509, 1
      %v1359 = vsel %vm1324, %v1356, %v1358
      %v1360 = vrot.slane %v510, 1
      %v1361 = vrot.slane %v511, 1
      %v1362 = vsel %vm1324, %v1360, %v1361
      %v1363 = vrot.slane %v512, 1
      %v1364 = vsel %vm1324, %v1361, %v1363
      %v1365 = vrot.slane %v513, 1
      %v1366 = vrot.slane %v514, 1
      %v1367 = vsel %vm1324, %v1365, %v1366
      %v1368 = vrot.slane %v515, 1
      %v1369 = vsel %vm1324, %v1366, %v1368
      %v1370 = vrot.slane %v516, 1
      %v1371 = vrot.slane %v517, 1
      %v1372 = vsel %vm1324, %v1370, %v1371
      %v1373 = vrot.slane %v518, 1
      %v1374 = vsel %vm1324, %v1371, %v1373
      %v1375 = vrot.slane %v519, 1
      %v1376 = vrot.slane %v520, 1
      %v1377 = vsel %vm1324, %v1375, %v1376
      %v1378 = vrot.slane %v521, 1
      %v1379 = vsel %vm1324, %v1376, %v1378
      %v1380 = vrot.slane %v522, 1
      %v1381 = vrot.slane %v523, 1
      %v1382 = vsel %vm1324, %v1380, %v1381
      %v1383 = vrot.slane %v524, 1
      %v1384 = vsel %vm1324, %v1381, %v1383
      %v1385 = vrot.slane %v525, 1
      %v1386 = vrot.slane %v526, 1
      %v1387 = vsel %vm1324, %v1385, %v1386
      %v1388 = vrot.slane %v527, 1
      %v1389 = vsel %vm1324, %v1386, %v1388
      %v1390 = vrot.slane %v528, 1
      %v1391 = vrot.slane %v529, 1
      %v1392 = vsel %vm1324, %v1390, %v1391
      %v1393 = vrot.slane %v530, 1
      %v1394 = vsel %vm1324, %v1391, %v1393
      %v1395 = vrot.slane %v531, 1
      %v1396 = vrot.slane %v532, 1
      %v1397 = vsel %vm1324, %v1395, %v1396
      %v1398 = vrot.slane %v533, 1
      %v1399 = vsel %vm1324, %v1396, %v1398
      %v1400 = vrot.slane %v534, 1
      %v1401 = vrot.slane %v535, 1
      %v1402 = vsel %vm1324, %v1400, %v1401
      %v1403 = vrot.slane %v536, 1
      %v1404 = vsel %vm1324, %v1401, %v1403
      %v1405 = vrot.slane %v537, 1
      %v1406 = vrot.slane %v538, 1
      %v1407 = vsel %vm1324, %v1405, %v1406
      %v1408 = vrot.slane %v539, 1
      %v1409 = vsel %vm1324, %v1406, %v1408
      %v1410 = vrot.slane %v540, 1
      %v1411 = vrot.slane %v541, 1
      %v1412 = vsel %vm1324, %v1410, %v1411
      %v1413 = vrot.slane %v542, 1
      %v1414 = vsel %vm1324, %v1411, %v1413
      %v1451 = vpack.c.bf16 %v1329, %v1327
      %v1452 = vpack.c.bf16 %v1334, %v1332
      %v1453 = vpack.c.bf16 %v1339, %v1337
      %v1454 = vpack.c.bf16 %v1344, %v1342
      %v1455 = vpack.c.bf16 %v1349, %v1347
      %v1456 = vpack.c.bf16 %v1354, %v1352
      %v1457 = vpack.c.bf16 %v1359, %v1357
      %v1458 = vpack.c.bf16 %v1364, %v1362
      %v1459 = vpack.c.bf16 %v1369, %v1367
      %v1460 = vpack.c.bf16 %v1374, %v1372
      %v1461 = vpack.c.bf16 %v1379, %v1377
      %v1462 = vpack.c.bf16 %v1384, %v1382
      %v1463 = vpack.c.bf16 %v1389, %v1387
      %v1464 = vpack.c.bf16 %v1394, %v1392
      %v1465 = vpack.c.bf16 %v1399, %v1397
      %v1466 = vpack.c.bf16 %v1404, %v1402
      %s1467 = scalar_lea.vmem %s3, 64
      %v1468 = vld [vmem:[%s1467] sm:$0xf]
      %v1469 = vld [vmem:[%s1467 + $0x4] sm:$0xf]
      %v1470 = vld [vmem:[%s1467 + $0x8] sm:$0xf]
      %v1471 = vld [vmem:[%s1467 + $0xc] sm:$0xf]
      %v1472 = vld [vmem:[%s1467 + $0x10] sm:$0xf]
      %v1473 = vld [vmem:[%s1467 + $0x14] sm:$0xf]
      %v1474 = vld [vmem:[%s1467 + $0x18] sm:$0xf]
      %v1475 = vld [vmem:[%s1467 + $0x1c] sm:$0xf]
      %v1476 = vld [vmem:[%s1467 + $0x20] sm:$0xf]
      %v1477 = vld [vmem:[%s1467 + $0x24] sm:$0xf]
      %v1478 = vld [vmem:[%s1467 + $0x28] sm:$0xf]
      %v1479 = vld [vmem:[%s1467 + $0x2c] sm:$0xf]
      %v1480 = vld [vmem:[%s1467 + $0x30] sm:$0xf]
      %v1481 = vld [vmem:[%s1467 + $0x34] sm:$0xf]
      %v1482 = vld [vmem:[%s1467 + $0x38] sm:$0xf]
      %v1483 = vld [vmem:[%s1467 + $0x3c] sm:$0xf]
      %v1500 = vunpack.c.l.b16 %v1468
      %v1501 = vunpack.c.l.b16 %v1469
      %v1502 = vunpack.c.l.b16 %v1470
      %v1503 = vunpack.c.l.b16 %v1471
      %v1504 = vunpack.c.l.b16 %v1472
      %v1505 = vunpack.c.l.b16 %v1473
      %v1506 = vunpack.c.l.b16 %v1474
      %v1507 = vunpack.c.l.b16 %v1475
      %v1508 = vunpack.c.l.b16 %v1476
      %v1509 = vunpack.c.l.b16 %v1477
      %v1510 = vunpack.c.l.b16 %v1478
      %v1511 = vunpack.c.l.b16 %v1479
      %v1512 = vunpack.c.l.b16 %v1480
      %v1513 = vunpack.c.l.b16 %v1481
      %v1514 = vunpack.c.l.b16 %v1482
      %v1515 = vunpack.c.l.b16 %v1483
      %v1516 = vpack.c.b16 %v1501, %v1500
      %v1517 = vpack.c.b16 %v1503, %v1502
      %v1518 = vpack.c.b16 %v1505, %v1504
      %v1519 = vpack.c.b16 %v1507, %v1506
      %v1520 = vpack.c.b16 %v1509, %v1508
      %v1521 = vpack.c.b16 %v1511, %v1510
      %v1522 = vpack.c.b16 %v1513, %v1512
      %v1523 = vpack.c.b16 %v1515, %v1514
      %1532 = vmatprep.subr.bf16.mxu0 0
      %1533 = vmatpush1.bf16.msra.mxu0 %v1516
      %1534 = vmatprep.subr.bf16.mxu0 0
      %1535 = vmatpush1.bf16.msra.mxu0 %v1517
      %1536 = vmatprep.subr.bf16.mxu0 0
      %1537 = vmatpush1.bf16.msra.mxu0 %v1518
      %1538 = vmatprep.subr.bf16.mxu0 0
      %1539 = vmatpush1.bf16.msra.mxu0 %v1519
      %1540 = vmatprep.subr.bf16.mxu0 0
      %1541 = vmatpush1.bf16.msra.mxu0 %v1520
      %1542 = vmatprep.subr.bf16.mxu0 0
      %1543 = vmatpush1.bf16.msra.mxu0 %v1521
      %1544 = vmatprep.subr.bf16.mxu0 0
      %1545 = vmatpush1.bf16.msra.mxu0 %v1522
      %1546 = vmatprep.subr.bf16.mxu0 0
      %1547 = vmatpush1.bf16.msra.mxu0 %v1523
      %1548 = vmatprep.subr.bf16.mxu0 0
      %1549 = vmatpush1.bf16.msra.mxu0 0
      %1550 = vmatprep.subr.bf16.mxu0 0
      %1551 = vmatpush1.bf16.msra.mxu0 0
      %1552 = vmatprep.subr.bf16.mxu0 0
      %1553 = vmatpush1.bf16.msra.mxu0 0
      %1554 = vmatprep.subr.bf16.mxu0 0
      %1555 = vmatpush1.bf16.msra.mxu0 0
      %1556 = vmatprep.subr.bf16.mxu0 0
      %1557 = vmatpush1.bf16.msra.mxu0 0
      %1558 = vmatprep.subr.bf16.mxu0 0
      %1559 = vmatpush1.bf16.msra.mxu0 0
      %1560 = vmatprep.subr.bf16.mxu0 0
      %1561 = vmatpush1.bf16.msra.mxu0 0
      %1562 = vmatprep.subr.bf16.mxu0 0
      %1563 = vmatpush1.bf16.msra.mxu0 0
      %1564 = vmatprep.mubr.bf16.mxu0 0
      %1565 = vmatmul.mubr.bf16.gmra.mrb[0].mxu0 %v1451
      %v1566 = vpop.f32.mrb[0].mxu0
      %v1567 = vadd.f32 0.0, %v1566
      %v1568 = vpop.f32.mrb[0].mxu0
      %v1569 = vpop.f32.mrb[0].mxu0
      %v1570 = vadd.f32 0.0, %v1569
      %v1571 = vpop.f32.mrb[0].mxu0
      %1572 = vmatprep.mubr.bf16.mxu0 0
      %1573 = vmatmul.mubr.bf16.gmra.mrb[0].mxu0 %v1452
      %v1574 = vpop.f32.mrb[0].mxu0
      %v1575 = vadd.f32 0.0, %v1574
      %v1576 = vpop.f32.mrb[0].mxu0
      %v1577 = vpop.f32.mrb[0].mxu0
      %v1578 = vadd.f32 0.0, %v1577
      %v1579 = vpop.f32.mrb[0].mxu0
      %1580 = vmatprep.mubr.bf16.mxu0 0
      %1581 = vmatmul.mubr.bf16.gmra.mrb[0].mxu0 %v1453
      %v1582 = vpop.f32.mrb[0].mxu0
      %v1583 = vadd.f32 0.0, %v1582
      %v1584 = vpop.f32.mrb[0].mxu0
      %v1585 = vpop.f32.mrb[0].mxu0
      %v1586 = vadd.f32 0.0, %v1585
      %v1587 = vpop.f32.mrb[0].mxu0
      %1588 = vmatprep.mubr.bf16.mxu0 0
      %1589 = vmatmul.mubr.bf16.gmra.mrb[0].mxu0 %v1454
      %v1590 = vpop.f32.mrb[0].mxu0
      %v1591 = vadd.f32 0.0, %v1590
      %v1592 = vpop.f32.mrb[0].mxu0
      %v1593 = vpop.f32.mrb[0].mxu0
      %v1594 = vadd.f32 0.0, %v1593
      %v1595 = vpop.f32.mrb[0].mxu0
      %1596 = vmatprep.mubr.bf16.mxu0 0
      %1597 = vmatmul.mubr.bf16.gmra.mrb[0].mxu0 %v1455
      %v1598 = vpop.f32.mrb[0].mxu0
      %v1599 = vadd.f32 0.0, %v1598
      %v1600 = vpop.f32.mrb[0].mxu0
      %v1601 = vpop.f32.mrb[0].mxu0
      %v1602 = vadd.f32 0.0, %v1601
      %v1603 = vpop.f32.mrb[0].mxu0
      %1604 = vmatprep.mubr.bf16.mxu0 0
      %1605 = vmatmul.mubr.bf16.gmra.mrb[0].mxu0 %v1456
      %v1606 = vpop.f32.mrb[0].mxu0
      %v1607 = vadd.f32 0.0, %v1606
      %v1608 = vpop.f32.mrb[0].mxu0
      %v1609 = vpop.f32.mrb[0].mxu0
      %v1610 = vadd.f32 0.0, %v1609
      %v1611 = vpop.f32.mrb[0].mxu0
      %1612 = vmatprep.mubr.bf16.mxu0 0
      %1613 = vmatmul.mubr.bf16.gmra.mrb[0].mxu0 %v1457
      %v1614 = vpop.f32.mrb[0].mxu0
      %v1615 = vadd.f32 0.0, %v1614
      %v1616 = vpop.f32.mrb[0].mxu0
      %v1617 = vpop.f32.mrb[0].mxu0
      %v1618 = vadd.f32 0.0, %v1617
      %v1619 = vpop.f32.mrb[0].mxu0
      %1620 = vmatprep.mubr.bf16.mxu0 0
      %1621 = vmatmul.mubr.bf16.gmra.mrb[0].mxu0 %v1458
      %v1622 = vpop.f32.mrb[0].mxu0
      %v1623 = vadd.f32 0.0, %v1622
      %v1624 = vpop.f32.mrb[0].mxu0
      %v1625 = vpop.f32.mrb[0].mxu0
      %v1626 = vadd.f32 0.0, %v1625
      %v1627 = vpop.f32.mrb[0].mxu0
      %1628 = vmatprep.mubr.bf16.mxu0 0
      %1629 = vmatmul.mubr.bf16.gmra.mrb[0].mxu0 %v1459
      %v1630 = vpop.f32.mrb[0].mxu0
      %v1631 = vadd.f32 0.0, %v1630
      %v1632 = vpop.f32.mrb[0].mxu0
      %v1633 = vpop.f32.mrb[0].mxu0
      %v1634 = vadd.f32 0.0, %v1633
      %v1635 = vpop.f32.mrb[0].mxu0
      %1636 = vmatprep.mubr.bf16.mxu0 0
      %1637 = vmatmul.mubr.bf16.gmra.mrb[0].mxu0 %v1460
      %v1638 = vpop.f32.mrb[0].mxu0
      %v1639 = vadd.f32 0.0, %v1638
      %v1640 = vpop.f32.mrb[0].mxu0
      %v1641 = vpop.f32.mrb[0].mxu0
      %v1642 = vadd.f32 0.0, %v1641
      %v1643 = vpop.f32.mrb[0].mxu0
      %1644 = vmatprep.mubr.bf16.mxu0 0
      %1645 = vmatmul.mubr.bf16.gmra.mrb[0].mxu0 %v1461
      %v1646 = vpop.f32.mrb[0].mxu0
      %v1647 = vadd.f32 0.0, %v1646
      %v1648 = vpop.f32.mrb[0].mxu0
      %v1649 = vpop.f32.mrb[0].mxu0
      %v1650 = vadd.f32 0.0, %v1649
      %v1651 = vpop.f32.mrb[0].mxu0
      %1652 = vmatprep.mubr.bf16.mxu0 0
      %1653 = vmatmul.mubr.bf16.gmra.mrb[0].mxu0 %v1462
      %v1654 = vpop.f32.mrb[0].mxu0
      %v1655 = vadd.f32 0.0, %v1654
      %v1656 = vpop.f32.mrb[0].mxu0
      %v1657 = vpop.f32.mrb[0].mxu0
      %v1658 = vadd.f32 0.0, %v1657
      %v1659 = vpop.f32.mrb[0].mxu0
      %1660 = vmatprep.mubr.bf16.mxu0 0
      %1661 = vmatmul.mubr.bf16.gmra.mrb[0].mxu0 %v1463
      %v1662 = vpop.f32.mrb[0].mxu0
      %v1663 = vadd.f32 0.0, %v1662
      %v1664 = vpop.f32.mrb[0].mxu0
      %v1665 = vpop.f32.mrb[0].mxu0
      %v1666 = vadd.f32 0.0, %v1665
      %v1667 = vpop.f32.mrb[0].mxu0
      %1668 = vmatprep.mubr.bf16.mxu0 0
      %1669 = vmatmul.mubr.bf16.gmra.mrb[0].mxu0 %v1464
      %v1670 = vpop.f32.mrb[0].mxu0
      %v1671 = vadd.f32 0.0, %v1670
      %v1672 = vpop.f32.mrb[0].mxu0
      %v1673 = vpop.f32.mrb[0].mxu0
      %v1674 = vadd.f32 0.0, %v1673
      %v1675 = vpop.f32.mrb[0].mxu0
      %1676 = vmatprep.mubr.bf16.mxu0 0
      %1677 = vmatmul.mubr.bf16.gmra.mrb[0].mxu0 %v1465
      %v1678 = vpop.f32.mrb[0].mxu0
      %v1679 = vadd.f32 0.0, %v1678
      %v1680 = vpop.f32.mrb[0].mxu0
      %v1681 = vpop.f32.mrb[0].mxu0
      %v1682 = vadd.f32 0.0, %v1681
      %v1683 = vpop.f32.mrb[0].mxu0
      %1684 = vmatprep.mubr.bf16.mxu0 0
      %1685 = vmatmul.mubr.bf16.gmra.mrb[0].mxu0 %v1466
      %v1686 = vpop.f32.mrb[0].mxu0
      %v1687 = vadd.f32 0.0, %v1686
      %v1688 = vpop.f32.mrb[0].mxu0
      %v1689 = vpop.f32.mrb[0].mxu0
      %v1690 = vadd.f32 0.0, %v1689
      %v1691 = vpop.f32.mrb[0].mxu0
      %1692 = vdwg.mxu0
      %v1693 = vadd.f32 %v1238, %v1567
      %v1694 = vadd.f32 %v1239, %v1570
      %v1695 = vadd.f32 %v1240, %v1575
      %v1696 = vadd.f32 %v1241, %v1578
      %v1697 = vadd.f32 %v1242, %v1583
      %v1698 = vadd.f32 %v1243, %v1586
      %v1699 = vadd.f32 %v1244, %v1591
      %v1700 = vadd.f32 %v1245, %v1594
      %v1701 = vadd.f32 %v1246, %v1599
      %v1702 = vadd.f32 %v1247, %v1602
      %v1703 = vadd.f32 %v1248, %v1607
      %v1704 = vadd.f32 %v1249, %v1610
      %v1705 = vadd.f32 %v1250, %v1615
      %v1706 = vadd.f32 %v1251, %v1618
      %v1707 = vadd.f32 %v1252, %v1623
      %v1708 = vadd.f32 %v1253, %v1626
      %v1709 = vadd.f32 %v1254, %v1631
      %v1710 = vadd.f32 %v1255, %v1634
      %v1711 = vadd.f32 %v1256, %v1639
      %v1712 = vadd.f32 %v1257, %v1642
      %v1713 = vadd.f32 %v1258, %v1647
      %v1714 = vadd.f32 %v1259, %v1650
      %v1715 = vadd.f32 %v1260, %v1655
      %v1716 = vadd.f32 %v1261, %v1658
      %v1717 = vadd.f32 %v1262, %v1663
      %v1718 = vadd.f32 %v1263, %v1666
      %v1719 = vadd.f32 %v1264, %v1671
      %v1720 = vadd.f32 %v1265, %v1674
      %v1721 = vadd.f32 %v1266, %v1679
      %v1722 = vadd.f32 %v1267, %v1682
      %v1723 = vadd.f32 %v1268, %v1687
      %v1724 = vadd.f32 %v1269, %v1690
      %v1725 = vpack.c.bf16 %v1409, %v1407
      %s1726 = scalar_lea.vmem %s3, 256
      %v1727 = vld [vmem:[%s1726] sm:$0xf]
      %v1728 = vld [vmem:[%s1726 + $0x4] sm:$0xf]
      %v1729 = vld [vmem:[%s1726 + $0x8] sm:$0xf]
      %v1730 = vld [vmem:[%s1726 + $0xc] sm:$0xf]
      %v1731 = vld [vmem:[%s1726 + $0x10] sm:$0xf]
      %v1732 = vld [vmem:[%s1726 + $0x14] sm:$0xf]
      %v1733 = vld [vmem:[%s1726 + $0x18] sm:$0xf]
      %v1734 = vld [vmem:[%s1726 + $0x1c] sm:$0xf]
      %v1735 = vld [vmem:[%s1726 + $0x20] sm:$0xf]
      %v1736 = vld [vmem:[%s1726 + $0x24] sm:$0xf]
      %v1737 = vld [vmem:[%s1726 + $0x28] sm:$0xf]
      %v1738 = vld [vmem:[%s1726 + $0x2c] sm:$0xf]
      %v1739 = vld [vmem:[%s1726 + $0x30] sm:$0xf]
      %v1740 = vld [vmem:[%s1726 + $0x34] sm:$0xf]
      %v1741 = vld [vmem:[%s1726 + $0x38] sm:$0xf]
      %v1742 = vld [vmem:[%s1726 + $0x3c] sm:$0xf]
      %v1759 = vunpack.c.l.b16 %v1727
      %v1760 = vunpack.c.l.b16 %v1728
      %v1761 = vunpack.c.l.b16 %v1729
      %v1762 = vunpack.c.l.b16 %v1730
      %v1763 = vunpack.c.l.b16 %v1731
      %v1764 = vunpack.c.l.b16 %v1732
      %v1765 = vunpack.c.l.b16 %v1733
      %v1766 = vunpack.c.l.b16 %v1734
      %v1767 = vunpack.c.l.b16 %v1735
      %v1768 = vunpack.c.l.b16 %v1736
      %v1769 = vunpack.c.l.b16 %v1737
      %v1770 = vunpack.c.l.b16 %v1738
      %v1771 = vunpack.c.l.b16 %v1739
      %v1772 = vunpack.c.l.b16 %v1740
      %v1773 = vunpack.c.l.b16 %v1741
      %v1774 = vunpack.c.l.b16 %v1742
      %v1775 = vpack.c.b16 %v1760, %v1759
      %v1776 = vpack.c.b16 %v1762, %v1761
      %v1777 = vpack.c.b16 %v1764, %v1763
      %v1778 = vpack.c.b16 %v1766, %v1765
      %v1779 = vpack.c.b16 %v1768, %v1767
      %v1780 = vpack.c.b16 %v1770, %v1769
      %v1781 = vpack.c.b16 %v1772, %v1771
      %v1782 = vpack.c.b16 %v1774, %v1773
      %1791 = vmatprep.subr.bf16.mxu0 0
      %1792 = vmatpush1.bf16.msra.mxu0 %v1775
      %1793 = vmatprep.subr.bf16.mxu0 0
      %1794 = vmatpush1.bf16.msra.mxu0 %v1776
      %1795 = vmatprep.subr.bf16.mxu0 0
      %1796 = vmatpush1.bf16.msra.mxu0 %v1777
      %1797 = vmatprep.subr.bf16.mxu0 0
      %1798 = vmatpush1.bf16.msra.mxu0 %v1778
      %1799 = vmatprep.subr.bf16.mxu0 0
      %1800 = vmatpush1.bf16.msra.mxu0 %v1779
      %1801 = vmatprep.subr.bf16.mxu0 0
      %1802 = vmatpush1.bf16.msra.mxu0 %v1780
      %1803 = vmatprep.subr.bf16.mxu0 0
      %1804 = vmatpush1.bf16.msra.mxu0 %v1781
      %1805 = vmatprep.subr.bf16.mxu0 0
      %1806 = vmatpush1.bf16.msra.mxu0 %v1782
      %1807 = vmatprep.subr.bf16.mxu0 0
      %1808 = vmatpush1.bf16.msra.mxu0 0
      %1809 = vmatprep.subr.bf16.mxu0 0
      %1810 = vmatpush1.bf16.msra.mxu0 0
      %1811 = vmatprep.subr.bf16.mxu0 0
      %1812 = vmatpush1.bf16.msra.mxu0 0
      %1813 = vmatprep.subr.bf16.mxu0 0
      %1814 = vmatpush1.bf16.msra.mxu0 0
      %1815 = vmatprep.subr.bf16.mxu0 0
      %1816 = vmatpush1.bf16.msra.mxu0 0
      %1817 = vmatprep.subr.bf16.mxu0 0
      %1818 = vmatpush1.bf16.msra.mxu0 0
      %1819 = vmatprep.subr.bf16.mxu0 0
      %1820 = vmatpush1.bf16.msra.mxu0 0
      %1821 = vmatprep.subr.bf16.mxu0 0
      %1822 = vmatpush1.bf16.msra.mxu0 0
      %1823 = vmatprep.mubr.bf16.mxu0 0
      %1824 = vmatmul.mubr.bf16.gmra.mrb[0].mxu0 %v1452
      %v1825 = vpop.f32.mrb[0].mxu0
      %v1826 = vadd.f32 0.0, %v1825
      %v1827 = vpop.f32.mrb[0].mxu0
      %v1828 = vpop.f32.mrb[0].mxu0
      %v1829 = vadd.f32 0.0, %v1828
      %v1830 = vpop.f32.mrb[0].mxu0
      %1831 = vmatprep.mubr.bf16.mxu0 0
      %1832 = vmatmul.mubr.bf16.gmra.mrb[0].mxu0 %v1453
      %v1833 = vpop.f32.mrb[0].mxu0
      %v1834 = vadd.f32 0.0, %v1833
      %v1835 = vpop.f32.mrb[0].mxu0
      %v1836 = vpop.f32.mrb[0].mxu0
      %v1837 = vadd.f32 0.0, %v1836
      %v1838 = vpop.f32.mrb[0].mxu0
      %1839 = vmatprep.mubr.bf16.mxu0 0
      %1840 = vmatmul.mubr.bf16.gmra.mrb[0].mxu0 %v1454
      %v1841 = vpop.f32.mrb[0].mxu0
      %v1842 = vadd.f32 0.0, %v1841
      %v1843 = vpop.f32.mrb[0].mxu0
      %v1844 = vpop.f32.mrb[0].mxu0
      %v1845 = vadd.f32 0.0, %v1844
      %v1846 = vpop.f32.mrb[0].mxu0
      %1847 = vmatprep.mubr.bf16.mxu0 0
      %1848 = vmatmul.mubr.bf16.gmra.mrb[0].mxu0 %v1455
      %v1849 = vpop.f32.mrb[0].mxu0
      %v1850 = vadd.f32 0.0, %v1849
      %v1851 = vpop.f32.mrb[0].mxu0
      %v1852 = vpop.f32.mrb[0].mxu0
      %v1853 = vadd.f32 0.0, %v1852
      %v1854 = vpop.f32.mrb[0].mxu0
      %1855 = vmatprep.mubr.bf16.mxu0 0
      %1856 = vmatmul.mubr.bf16.gmra.mrb[0].mxu0 %v1456
      %v1857 = vpop.f32.mrb[0].mxu0
      %v1858 = vadd.f32 0.0, %v1857
      %v1859 = vpop.f32.mrb[0].mxu0
      %v1860 = vpop.f32.mrb[0].mxu0
      %v1861 = vadd.f32 0.0, %v1860
      %v1862 = vpop.f32.mrb[0].mxu0
      %1863 = vmatprep.mubr.bf16.mxu0 0
      %1864 = vmatmul.mubr.bf16.gmra.mrb[0].mxu0 %v1457
      %v1865 = vpop.f32.mrb[0].mxu0
      %v1866 = vadd.f32 0.0, %v1865
      %v1867 = vpop.f32.mrb[0].mxu0
      %v1868 = vpop.f32.mrb[0].mxu0
      %v1869 = vadd.f32 0.0, %v1868
      %v1870 = vpop.f32.mrb[0].mxu0
      %1871 = vmatprep.mubr.bf16.mxu0 0
      %1872 = vmatmul.mubr.bf16.gmra.mrb[0].mxu0 %v1458
      %v1873 = vpop.f32.mrb[0].mxu0
      %v1874 = vadd.f32 0.0, %v1873
      %v1875 = vpop.f32.mrb[0].mxu0
      %v1876 = vpop.f32.mrb[0].mxu0
      %v1877 = vadd.f32 0.0, %v1876
      %v1878 = vpop.f32.mrb[0].mxu0
      %1879 = vmatprep.mubr.bf16.mxu0 0
      %1880 = vmatmul.mubr.bf16.gmra.mrb[0].mxu0 %v1459
      %v1881 = vpop.f32.mrb[0].mxu0
      %v1882 = vadd.f32 0.0, %v1881
      %v1883 = vpop.f32.mrb[0].mxu0
      %v1884 = vpop.f32.mrb[0].mxu0
      %v1885 = vadd.f32 0.0, %v1884
      %v1886 = vpop.f32.mrb[0].mxu0
      %1887 = vmatprep.mubr.bf16.mxu0 0
      %1888 = vmatmul.mubr.bf16.gmra.mrb[0].mxu0 %v1460
      %v1889 = vpop.f32.mrb[0].mxu0
      %v1890 = vadd.f32 0.0, %v1889
      %v1891 = vpop.f32.mrb[0].mxu0
      %v1892 = vpop.f32.mrb[0].mxu0
      %v1893 = vadd.f32 0.0, %v1892
      %v1894 = vpop.f32.mrb[0].mxu0
      %1895 = vmatprep.mubr.bf16.mxu0 0
      %1896 = vmatmul.mubr.bf16.gmra.mrb[0].mxu0 %v1461
      %v1897 = vpop.f32.mrb[0].mxu0
      %v1898 = vadd.f32 0.0, %v1897
      %v1899 = vpop.f32.mrb[0].mxu0
      %v1900 = vpop.f32.mrb[0].mxu0
      %v1901 = vadd.f32 0.0, %v1900
      %v1902 = vpop.f32.mrb[0].mxu0
      %1903 = vmatprep.mubr.bf16.mxu0 0
      %1904 = vmatmul.mubr.bf16.gmra.mrb[0].mxu0 %v1462
      %v1905 = vpop.f32.mrb[0].mxu0
      %v1906 = vadd.f32 0.0, %v1905
      %v1907 = vpop.f32.mrb[0].mxu0
      %v1908 = vpop.f32.mrb[0].mxu0
      %v1909 = vadd.f32 0.0, %v1908
      %v1910 = vpop.f32.mrb[0].mxu0
      %1911 = vmatprep.mubr.bf16.mxu0 0
      %1912 = vmatmul.mubr.bf16.gmra.mrb[0].mxu0 %v1463
      %v1913 = vpop.f32.mrb[0].mxu0
      %v1914 = vadd.f32 0.0, %v1913
      %v1915 = vpop.f32.mrb[0].mxu0
      %v1916 = vpop.f32.mrb[0].mxu0
      %v1917 = vadd.f32 0.0, %v1916
      %v1918 = vpop.f32.mrb[0].mxu0
      %1919 = vmatprep.mubr.bf16.mxu0 0
      %1920 = vmatmul.mubr.bf16.gmra.mrb[0].mxu0 %v1464
      %v1921 = vpop.f32.mrb[0].mxu0
      %v1922 = vadd.f32 0.0, %v1921
      %v1923 = vpop.f32.mrb[0].mxu0
      %v1924 = vpop.f32.mrb[0].mxu0
      %v1925 = vadd.f32 0.0, %v1924
      %v1926 = vpop.f32.mrb[0].mxu0
      %1927 = vmatprep.mubr.bf16.mxu0 0
      %1928 = vmatmul.mubr.bf16.gmra.mrb[0].mxu0 %v1465
      %v1929 = vpop.f32.mrb[0].mxu0
      %v1930 = vadd.f32 0.0, %v1929
      %v1931 = vpop.f32.mrb[0].mxu0
      %v1932 = vpop.f32.mrb[0].mxu0
      %v1933 = vadd.f32 0.0, %v1932
      %v1934 = vpop.f32.mrb[0].mxu0
      %1935 = vmatprep.mubr.bf16.mxu0 0
      %1936 = vmatmul.mubr.bf16.gmra.mrb[0].mxu0 %v1466
      %v1937 = vpop.f32.mrb[0].mxu0
      %v1938 = vadd.f32 0.0, %v1937
      %v1939 = vpop.f32.mrb[0].mxu0
      %v1940 = vpop.f32.mrb[0].mxu0
      %v1941 = vadd.f32 0.0, %v1940
      %v1942 = vpop.f32.mrb[0].mxu0
      %1943 = vmatprep.mubr.bf16.mxu0 0
      %1944 = vmatmul.mubr.bf16.gmra.mrb[0].mxu0 %v1725
      %v1945 = vpop.f32.mrb[0].mxu0
      %v1946 = vadd.f32 0.0, %v1945
      %v1947 = vpop.f32.mrb[0].mxu0
      %v1948 = vpop.f32.mrb[0].mxu0
      %v1949 = vadd.f32 0.0, %v1948
      %v1950 = vpop.f32.mrb[0].mxu0
      %1951 = vdwg.mxu0
      %v1952 = vadd.f32 %v1693, %v1826
      %v1953 = vadd.f32 %v1694, %v1829
      %v1954 = vadd.f32 %v1695, %v1834
      %v1955 = vadd.f32 %v1696, %v1837
      %v1956 = vadd.f32 %v1697, %v1842
      %v1957 = vadd.f32 %v1698, %v1845
      %v1958 = vadd.f32 %v1699, %v1850
      %v1959 = vadd.f32 %v1700, %v1853
      %v1960 = vadd.f32 %v1701, %v1858
      %v1961 = vadd.f32 %v1702, %v1861
      %v1962 = vadd.f32 %v1703, %v1866
      %v1963 = vadd.f32 %v1704, %v1869
      %v1964 = vadd.f32 %v1705, %v1874
      %v1965 = vadd.f32 %v1706, %v1877
      %v1966 = vadd.f32 %v1707, %v1882
      %v1967 = vadd.f32 %v1708, %v1885
      %v1968 = vadd.f32 %v1709, %v1890
      %v1969 = vadd.f32 %v1710, %v1893
      %v1970 = vadd.f32 %v1711, %v1898
      %v1971 = vadd.f32 %v1712, %v1901
      %v1972 = vadd.f32 %v1713, %v1906
      %v1973 = vadd.f32 %v1714, %v1909
      %v1974 = vadd.f32 %v1715, %v1914
      %v1975 = vadd.f32 %v1716, %v1917
      %v1976 = vadd.f32 %v1717, %v1922
      %v1977 = vadd.f32 %v1718, %v1925
      %v1978 = vadd.f32 %v1719, %v1930
      %v1979 = vadd.f32 %v1720, %v1933
      %v1980 = vadd.f32 %v1721, %v1938
      %v1981 = vadd.f32 %v1722, %v1941
      %v1982 = vadd.f32 %v1723, %v1946
      %v1983 = vadd.f32 %v1724, %v1949
      %v1984 = vpack.c.bf16 %v1414, %v1412
      %s1985 = scalar_lea.vmem %s3, 448
      %v1986 = vld [vmem:[%s1985] sm:$0xf]
      %v1987 = vld [vmem:[%s1985 + $0x4] sm:$0xf]
      %v1988 = vld [vmem:[%s1985 + $0x8] sm:$0xf]
      %v1989 = vld [vmem:[%s1985 + $0xc] sm:$0xf]
      %v1990 = vld [vmem:[%s1985 + $0x10] sm:$0xf]
      %v1991 = vld [vmem:[%s1985 + $0x14] sm:$0xf]
      %v1992 = vld [vmem:[%s1985 + $0x18] sm:$0xf]
      %v1993 = vld [vmem:[%s1985 + $0x1c] sm:$0xf]
      %v1994 = vld [vmem:[%s1985 + $0x20] sm:$0xf]
      %v1995 = vld [vmem:[%s1985 + $0x24] sm:$0xf]
      %v1996 = vld [vmem:[%s1985 + $0x28] sm:$0xf]
      %v1997 = vld [vmem:[%s1985 + $0x2c] sm:$0xf]
      %v1998 = vld [vmem:[%s1985 + $0x30] sm:$0xf]
      %v1999 = vld [vmem:[%s1985 + $0x34] sm:$0xf]
      %v2000 = vld [vmem:[%s1985 + $0x38] sm:$0xf]
      %v2001 = vld [vmem:[%s1985 + $0x3c] sm:$0xf]
      %v2018 = vunpack.c.l.b16 %v1986
      %v2019 = vunpack.c.l.b16 %v1987
      %v2020 = vunpack.c.l.b16 %v1988
      %v2021 = vunpack.c.l.b16 %v1989
      %v2022 = vunpack.c.l.b16 %v1990
      %v2023 = vunpack.c.l.b16 %v1991
      %v2024 = vunpack.c.l.b16 %v1992
      %v2025 = vunpack.c.l.b16 %v1993
      %v2026 = vunpack.c.l.b16 %v1994
      %v2027 = vunpack.c.l.b16 %v1995
      %v2028 = vunpack.c.l.b16 %v1996
      %v2029 = vunpack.c.l.b16 %v1997
      %v2030 = vunpack.c.l.b16 %v1998
      %v2031 = vunpack.c.l.b16 %v1999
      %v2032 = vunpack.c.l.b16 %v2000
      %v2033 = vunpack.c.l.b16 %v2001
      %v2034 = vpack.c.b16 %v2019, %v2018
      %v2035 = vpack.c.b16 %v2021, %v2020
      %v2036 = vpack.c.b16 %v2023, %v2022
      %v2037 = vpack.c.b16 %v2025, %v2024
      %v2038 = vpack.c.b16 %v2027, %v2026
      %v2039 = vpack.c.b16 %v2029, %v2028
      %v2040 = vpack.c.b16 %v2031, %v2030
      %v2041 = vpack.c.b16 %v2033, %v2032
      %2050 = vmatprep.subr.bf16.mxu0 0
      %2051 = vmatpush1.bf16.msra.mxu0 %v2034
      %2052 = vmatprep.subr.bf16.mxu0 0
      %2053 = vmatpush1.bf16.msra.mxu0 %v2035
      %2054 = vmatprep.subr.bf16.mxu0 0
      %2055 = vmatpush1.bf16.msra.mxu0 %v2036
      %2056 = vmatprep.subr.bf16.mxu0 0
      %2057 = vmatpush1.bf16.msra.mxu0 %v2037
      %2058 = vmatprep.subr.bf16.mxu0 0
      %2059 = vmatpush1.bf16.msra.mxu0 %v2038
      %2060 = vmatprep.subr.bf16.mxu0 0
      %2061 = vmatpush1.bf16.msra.mxu0 %v2039
      %2062 = vmatprep.subr.bf16.mxu0 0
      %2063 = vmatpush1.bf16.msra.mxu0 %v2040
      %2064 = vmatprep.subr.bf16.mxu0 0
      %2065 = vmatpush1.bf16.msra.mxu0 %v2041
      %2066 = vmatprep.subr.bf16.mxu0 0
      %2067 = vmatpush1.bf16.msra.mxu0 0
      %2068 = vmatprep.subr.bf16.mxu0 0
      %2069 = vmatpush1.bf16.msra.mxu0 0
      %2070 = vmatprep.subr.bf16.mxu0 0
      %2071 = vmatpush1.bf16.msra.mxu0 0
      %2072 = vmatprep.subr.bf16.mxu0 0
      %2073 = vmatpush1.bf16.msra.mxu0 0
      %2074 = vmatprep.subr.bf16.mxu0 0
      %2075 = vmatpush1.bf16.msra.mxu0 0
      %2076 = vmatprep.subr.bf16.mxu0 0
      %2077 = vmatpush1.bf16.msra.mxu0 0
      %2078 = vmatprep.subr.bf16.mxu0 0
      %2079 = vmatpush1.bf16.msra.mxu0 0
      %2080 = vmatprep.subr.bf16.mxu0 0
      %2081 = vmatpush1.bf16.msra.mxu0 0
      %2082 = vmatprep.mubr.bf16.mxu0 0
      %2083 = vmatmul.mubr.bf16.gmra.mrb[0].mxu0 %v1453
      %v2084 = vpop.f32.mrb[0].mxu0
      %v2085 = vadd.f32 0.0, %v2084
      %v2086 = vpop.f32.mrb[0].mxu0
      %v2087 = vpop.f32.mrb[0].mxu0
      %v2088 = vadd.f32 0.0, %v2087
      %v2089 = vpop.f32.mrb[0].mxu0
      %2090 = vmatprep.mubr.bf16.mxu0 0
      %2091 = vmatmul.mubr.bf16.gmra.mrb[0].mxu0 %v1454
      %v2092 = vpop.f32.mrb[0].mxu0
      %v2093 = vadd.f32 0.0, %v2092
      %v2094 = vpop.f32.mrb[0].mxu0
      %v2095 = vpop.f32.mrb[0].mxu0
      %v2096 = vadd.f32 0.0, %v2095
      %v2097 = vpop.f32.mrb[0].mxu0
      %2098 = vmatprep.mubr.bf16.mxu0 0
      %2099 = vmatmul.mubr.bf16.gmra.mrb[0].mxu0 %v1455
      %v2100 = vpop.f32.mrb[0].mxu0
      %v2101 = vadd.f32 0.0, %v2100
      %v2102 = vpop.f32.mrb[0].mxu0
      %v2103 = vpop.f32.mrb[0].mxu0
      %v2104 = vadd.f32 0.0, %v2103
      %v2105 = vpop.f32.mrb[0].mxu0
      %2106 = vmatprep.mubr.bf16.mxu0 0
      %2107 = vmatmul.mubr.bf16.gmra.mrb[0].mxu0 %v1456
      %v2108 = vpop.f32.mrb[0].mxu0
      %v2109 = vadd.f32 0.0, %v2108
      %v2110 = vpop.f32.mrb[0].mxu0
      %v2111 = vpop.f32.mrb[0].mxu0
      %v2112 = vadd.f32 0.0, %v2111
      %v2113 = vpop.f32.mrb[0].mxu0
      %2114 = vmatprep.mubr.bf16.mxu0 0
      %2115 = vmatmul.mubr.bf16.gmra.mrb[0].mxu0 %v1457
      %v2116 = vpop.f32.mrb[0].mxu0
      %v2117 = vadd.f32 0.0, %v2116
      %v2118 = vpop.f32.mrb[0].mxu0
      %v2119 = vpop.f32.mrb[0].mxu0
      %v2120 = vadd.f32 0.0, %v2119
      %v2121 = vpop.f32.mrb[0].mxu0
      %2122 = vmatprep.mubr.bf16.mxu0 0
      %2123 = vmatmul.mubr.bf16.gmra.mrb[0].mxu0 %v1458
      %v2124 = vpop.f32.mrb[0].mxu0
      %v2125 = vadd.f32 0.0, %v2124
      %v2126 = vpop.f32.mrb[0].mxu0
      %v2127 = vpop.f32.mrb[0].mxu0
      %v2128 = vadd.f32 0.0, %v2127
      %v2129 = vpop.f32.mrb[0].mxu0
      %2130 = vmatprep.mubr.bf16.mxu0 0
      %2131 = vmatmul.mubr.bf16.gmra.mrb[0].mxu0 %v1459
      %v2132 = vpop.f32.mrb[0].mxu0
      %v2133 = vadd.f32 0.0, %v2132
      %v2134 = vpop.f32.mrb[0].mxu0
      %v2135 = vpop.f32.mrb[0].mxu0
      %v2136 = vadd.f32 0.0, %v2135
      %v2137 = vpop.f32.mrb[0].mxu0
      %2138 = vmatprep.mubr.bf16.mxu0 0
      %2139 = vmatmul.mubr.bf16.gmra.mrb[0].mxu0 %v1460
      %v2140 = vpop.f32.mrb[0].mxu0
      %v2141 = vadd.f32 0.0, %v2140
      %v2142 = vpop.f32.mrb[0].mxu0
      %v2143 = vpop.f32.mrb[0].mxu0
      %v2144 = vadd.f32 0.0, %v2143
      %v2145 = vpop.f32.mrb[0].mxu0
      %2146 = vmatprep.mubr.bf16.mxu0 0
      %2147 = vmatmul.mubr.bf16.gmra.mrb[0].mxu0 %v1461
      %v2148 = vpop.f32.mrb[0].mxu0
      %v2149 = vadd.f32 0.0, %v2148
      %v2150 = vpop.f32.mrb[0].mxu0
      %v2151 = vpop.f32.mrb[0].mxu0
      %v2152 = vadd.f32 0.0, %v2151
      %v2153 = vpop.f32.mrb[0].mxu0
      %2154 = vmatprep.mubr.bf16.mxu0 0
      %2155 = vmatmul.mubr.bf16.gmra.mrb[0].mxu0 %v1462
      %v2156 = vpop.f32.mrb[0].mxu0
      %v2157 = vadd.f32 0.0, %v2156
      %v2158 = vpop.f32.mrb[0].mxu0
      %v2159 = vpop.f32.mrb[0].mxu0
      %v2160 = vadd.f32 0.0, %v2159
      %v2161 = vpop.f32.mrb[0].mxu0
      %2162 = vmatprep.mubr.bf16.mxu0 0
      %2163 = vmatmul.mubr.bf16.gmra.mrb[0].mxu0 %v1463
      %v2164 = vpop.f32.mrb[0].mxu0
      %v2165 = vadd.f32 0.0, %v2164
      %v2166 = vpop.f32.mrb[0].mxu0
      %v2167 = vpop.f32.mrb[0].mxu0
      %v2168 = vadd.f32 0.0, %v2167
      %v2169 = vpop.f32.mrb[0].mxu0
      %2170 = vmatprep.mubr.bf16.mxu0 0
      %2171 = vmatmul.mubr.bf16.gmra.mrb[0].mxu0 %v1464
      %v2172 = vpop.f32.mrb[0].mxu0
      %v2173 = vadd.f32 0.0, %v2172
      %v2174 = vpop.f32.mrb[0].mxu0
      %v2175 = vpop.f32.mrb[0].mxu0
      %v2176 = vadd.f32 0.0, %v2175
      %v2177 = vpop.f32.mrb[0].mxu0
      %2178 = vmatprep.mubr.bf16.mxu0 0
      %2179 = vmatmul.mubr.bf16.gmra.mrb[0].mxu0 %v1465
      %v2180 = vpop.f32.mrb[0].mxu0
      %v2181 = vadd.f32 0.0, %v2180
      %v2182 = vpop.f32.mrb[0].mxu0
      %v2183 = vpop.f32.mrb[0].mxu0
      %v2184 = vadd.f32 0.0, %v2183
      %v2185 = vpop.f32.mrb[0].mxu0
      %2186 = vmatprep.mubr.bf16.mxu0 0
      %2187 = vmatmul.mubr.bf16.gmra.mrb[0].mxu0 %v1466
      %v2188 = vpop.f32.mrb[0].mxu0
      %v2189 = vadd.f32 0.0, %v2188
      %v2190 = vpop.f32.mrb[0].mxu0
      %v2191 = vpop.f32.mrb[0].mxu0
      %v2192 = vadd.f32 0.0, %v2191
      %v2193 = vpop.f32.mrb[0].mxu0
      %2194 = vmatprep.mubr.bf16.mxu0 0
      %2195 = vmatmul.mubr.bf16.gmra.mrb[0].mxu0 %v1725
      %v2196 = vpop.f32.mrb[0].mxu0
      %v2197 = vadd.f32 0.0, %v2196
      %v2198 = vpop.f32.mrb[0].mxu0
      %v2199 = vpop.f32.mrb[0].mxu0
      %v2200 = vadd.f32 0.0, %v2199
      %v2201 = vpop.f32.mrb[0].mxu0
      %2202 = vmatprep.mubr.bf16.mxu0 0
      %2203 = vmatmul.mubr.bf16.gmra.mrb[0].mxu0 %v1984
      %v2204 = vpop.f32.mrb[0].mxu0
      %v2205 = vadd.f32 0.0, %v2204
      %v2206 = vpop.f32.mrb[0].mxu0
      %v2207 = vpop.f32.mrb[0].mxu0
      %v2208 = vadd.f32 0.0, %v2207
      %v2209 = vpop.f32.mrb[0].mxu0
      %2210 = vdwg.mxu0
      %v2211 = vadd.f32 %v1952, %v2085
      %v2212 = vadd.f32 %v1953, %v2088
      %v2213 = vadd.f32 %v1954, %v2093
      %v2214 = vadd.f32 %v1955, %v2096
      %v2215 = vadd.f32 %v1956, %v2101
      %v2216 = vadd.f32 %v1957, %v2104
      %v2217 = vadd.f32 %v1958, %v2109
      %v2218 = vadd.f32 %v1959, %v2112
      %v2219 = vadd.f32 %v1960, %v2117
      %v2220 = vadd.f32 %v1961, %v2120
      %v2221 = vadd.f32 %v1962, %v2125
      %v2222 = vadd.f32 %v1963, %v2128
      %v2223 = vadd.f32 %v1964, %v2133
      %v2224 = vadd.f32 %v1965, %v2136
      %v2225 = vadd.f32 %v1966, %v2141
      %v2226 = vadd.f32 %v1967, %v2144
      %v2227 = vadd.f32 %v1968, %v2149
      %v2228 = vadd.f32 %v1969, %v2152
      %v2229 = vadd.f32 %v1970, %v2157
      %v2230 = vadd.f32 %v1971, %v2160
      %v2231 = vadd.f32 %v1972, %v2165
      %v2232 = vadd.f32 %v1973, %v2168
      %v2233 = vadd.f32 %v1974, %v2173
      %v2234 = vadd.f32 %v1975, %v2176
      %v2235 = vadd.f32 %v1976, %v2181
      %v2236 = vadd.f32 %v1977, %v2184
      %v2237 = vadd.f32 %v1978, %v2189
      %v2238 = vadd.f32 %v1979, %v2192
      %v2239 = vadd.f32 %v1980, %v2197
      %v2240 = vadd.f32 %v1981, %v2200
      %v2241 = vadd.f32 %v1982, %v2205
      %v2242 = vadd.f32 %v1983, %v2208
      %vm2243 = vcmask 1045504
      %v2244 = vrot.slane %v489, 2
      %v2245 = vrot.slane %v490, 2
      %v2246 = vsel %vm2243, %v2244, %v2245
      %v2247 = vrot.slane %v491, 2
      %v2248 = vsel %vm2243, %v2245, %v2247
      %v2249 = vrot.slane %v492, 2
      %v2250 = vrot.slane %v493, 2
      %v2251 = vsel %vm2243, %v2249, %v2250
      %v2252 = vrot.slane %v494, 2
      %v2253 = vsel %vm2243, %v2250, %v2252
      %v2254 = vrot.slane %v495, 2
      %v2255 = vrot.slane %v496, 2
      %v2256 = vsel %vm2243, %v2254, %v2255
      %v2257 = vrot.slane %v497, 2
      %v2258 = vsel %vm2243, %v2255, %v2257
      %v2259 = vrot.slane %v498, 2
      %v2260 = vrot.slane %v499, 2
      %v2261 = vsel %vm2243, %v2259, %v2260
      %v2262 = vrot.slane %v500, 2
      %v2263 = vsel %vm2243, %v2260, %v2262
      %v2264 = vrot.slane %v501, 2
      %v2265 = vrot.slane %v502, 2
      %v2266 = vsel %vm2243, %v2264, %v2265
      %v2267 = vrot.slane %v503, 2
      %v2268 = vsel %vm2243, %v2265, %v2267
      %v2269 = vrot.slane %v504, 2
      %v2270 = vrot.slane %v505, 2
      %v2271 = vsel %vm2243, %v2269, %v2270
      %v2272 = vrot.slane %v506, 2
      %v2273 = vsel %vm2243, %v2270, %v2272
      %v2274 = vrot.slane %v507, 2
      %v2275 = vrot.slane %v508, 2
      %v2276 = vsel %vm2243, %v2274, %v2275
      %v2277 = vrot.slane %v509, 2
      %v2278 = vsel %vm2243, %v2275, %v2277
      %v2279 = vrot.slane %v510, 2
      %v2280 = vrot.slane %v511, 2
      %v2281 = vsel %vm2243, %v2279, %v2280
      %v2282 = vrot.slane %v512, 2
      %v2283 = vsel %vm2243, %v2280, %v2282
      %v2284 = vrot.slane %v513, 2
      %v2285 = vrot.slane %v514, 2
      %v2286 = vsel %vm2243, %v2284, %v2285
      %v2287 = vrot.slane %v515, 2
      %v2288 = vsel %vm2243, %v2285, %v2287
      %v2289 = vrot.slane %v516, 2
      %v2290 = vrot.slane %v517, 2
      %v2291 = vsel %vm2243, %v2289, %v2290
      %v2292 = vrot.slane %v518, 2
      %v2293 = vsel %vm2243, %v2290, %v2292
      %v2294 = vrot.slane %v519, 2
      %v2295 = vrot.slane %v520, 2
      %v2296 = vsel %vm2243, %v2294, %v2295
      %v2297 = vrot.slane %v521, 2
      %v2298 = vsel %vm2243, %v2295, %v2297
      %v2299 = vrot.slane %v522, 2
      %v2300 = vrot.slane %v523, 2
      %v2301 = vsel %vm2243, %v2299, %v2300
      %v2302 = vrot.slane %v524, 2
      %v2303 = vsel %vm2243, %v2300, %v2302
      %v2304 = vrot.slane %v525, 2
      %v2305 = vrot.slane %v526, 2
      %v2306 = vsel %vm2243, %v2304, %v2305
      %v2307 = vrot.slane %v527, 2
      %v2308 = vsel %vm2243, %v2305, %v2307
      %v2309 = vrot.slane %v528, 2
      %v2310 = vrot.slane %v529, 2
      %v2311 = vsel %vm2243, %v2309, %v2310
      %v2312 = vrot.slane %v530, 2
      %v2313 = vsel %vm2243, %v2310, %v2312
      %v2314 = vrot.slane %v531, 2
      %v2315 = vrot.slane %v532, 2
      %v2316 = vsel %vm2243, %v2314, %v2315
      %v2317 = vrot.slane %v533, 2
      %v2318 = vsel %vm2243, %v2315, %v2317
      %v2319 = vrot.slane %v534, 2
      %v2320 = vrot.slane %v535, 2
      %v2321 = vsel %vm2243, %v2319, %v2320
      %v2322 = vrot.slane %v536, 2
      %v2323 = vsel %vm2243, %v2320, %v2322
      %v2324 = vrot.slane %v537, 2
      %v2325 = vrot.slane %v538, 2
      %v2326 = vsel %vm2243, %v2324, %v2325
      %v2327 = vrot.slane %v539, 2
      %v2328 = vsel %vm2243, %v2325, %v2327
      %v2329 = vrot.slane %v540, 2
      %v2330 = vrot.slane %v541, 2
      %v2331 = vsel %vm2243, %v2329, %v2330
      %v2332 = vrot.slane %v542, 2
      %v2333 = vsel %vm2243, %v2330, %v2332
      %v2370 = vpack.c.bf16 %v2248, %v2246
      %v2371 = vpack.c.bf16 %v2253, %v2251
      %v2372 = vpack.c.bf16 %v2258, %v2256
      %v2373 = vpack.c.bf16 %v2263, %v2261
      %v2374 = vpack.c.bf16 %v2268, %v2266
      %v2375 = vpack.c.bf16 %v2273, %v2271
      %v2376 = vpack.c.bf16 %v2278, %v2276
      %v2377 = vpack.c.bf16 %v2283, %v2281
      %v2378 = vpack.c.bf16 %v2288, %v2286
      %v2379 = vpack.c.bf16 %v2293, %v2291
      %v2380 = vpack.c.bf16 %v2298, %v2296
      %v2381 = vpack.c.bf16 %v2303, %v2301
      %v2382 = vpack.c.bf16 %v2308, %v2306
      %v2383 = vpack.c.bf16 %v2313, %v2311
      %v2384 = vpack.c.bf16 %v2318, %v2316
      %v2385 = vpack.c.bf16 %v2323, %v2321
      %s2386 = scalar_lea.vmem %s3, 128
      %v2387 = vld [vmem:[%s2386] sm:$0xf]
      %v2388 = vld [vmem:[%s2386 + $0x4] sm:$0xf]
      %v2389 = vld [vmem:[%s2386 + $0x8] sm:$0xf]
      %v2390 = vld [vmem:[%s2386 + $0xc] sm:$0xf]
      %v2391 = vld [vmem:[%s2386 + $0x10] sm:$0xf]
      %v2392 = vld [vmem:[%s2386 + $0x14] sm:$0xf]
      %v2393 = vld [vmem:[%s2386 + $0x18] sm:$0xf]
      %v2394 = vld [vmem:[%s2386 + $0x1c] sm:$0xf]
      %v2395 = vld [vmem:[%s2386 + $0x20] sm:$0xf]
      %v2396 = vld [vmem:[%s2386 + $0x24] sm:$0xf]
      %v2397 = vld [vmem:[%s2386 + $0x28] sm:$0xf]
      %v2398 = vld [vmem:[%s2386 + $0x2c] sm:$0xf]
      %v2399 = vld [vmem:[%s2386 + $0x30] sm:$0xf]
      %v2400 = vld [vmem:[%s2386 + $0x34] sm:$0xf]
      %v2401 = vld [vmem:[%s2386 + $0x38] sm:$0xf]
      %v2402 = vld [vmem:[%s2386 + $0x3c] sm:$0xf]
      %v2419 = vunpack.c.l.b16 %v2387
      %v2420 = vunpack.c.l.b16 %v2388
      %v2421 = vunpack.c.l.b16 %v2389
      %v2422 = vunpack.c.l.b16 %v2390
      %v2423 = vunpack.c.l.b16 %v2391
      %v2424 = vunpack.c.l.b16 %v2392
      %v2425 = vunpack.c.l.b16 %v2393
      %v2426 = vunpack.c.l.b16 %v2394
      %v2427 = vunpack.c.l.b16 %v2395
      %v2428 = vunpack.c.l.b16 %v2396
      %v2429 = vunpack.c.l.b16 %v2397
      %v2430 = vunpack.c.l.b16 %v2398
      %v2431 = vunpack.c.l.b16 %v2399
      %v2432 = vunpack.c.l.b16 %v2400
      %v2433 = vunpack.c.l.b16 %v2401
      %v2434 = vunpack.c.l.b16 %v2402
      %v2435 = vpack.c.b16 %v2420, %v2419
      %v2436 = vpack.c.b16 %v2422, %v2421
      %v2437 = vpack.c.b16 %v2424, %v2423
      %v2438 = vpack.c.b16 %v2426, %v2425
      %v2439 = vpack.c.b16 %v2428, %v2427
      %v2440 = vpack.c.b16 %v2430, %v2429
      %v2441 = vpack.c.b16 %v2432, %v2431
      %v2442 = vpack.c.b16 %v2434, %v2433
      %2451 = vmatprep.subr.bf16.mxu0 0
      %2452 = vmatpush1.bf16.msra.mxu0 %v2435
      %2453 = vmatprep.subr.bf16.mxu0 0
      %2454 = vmatpush1.bf16.msra.mxu0 %v2436
      %2455 = vmatprep.subr.bf16.mxu0 0
      %2456 = vmatpush1.bf16.msra.mxu0 %v2437
      %2457 = vmatprep.subr.bf16.mxu0 0
      %2458 = vmatpush1.bf16.msra.mxu0 %v2438
      %2459 = vmatprep.subr.bf16.mxu0 0
      %2460 = vmatpush1.bf16.msra.mxu0 %v2439
      %2461 = vmatprep.subr.bf16.mxu0 0
      %2462 = vmatpush1.bf16.msra.mxu0 %v2440
      %2463 = vmatprep.subr.bf16.mxu0 0
      %2464 = vmatpush1.bf16.msra.mxu0 %v2441
      %2465 = vmatprep.subr.bf16.mxu0 0
      %2466 = vmatpush1.bf16.msra.mxu0 %v2442
      %2467 = vmatprep.subr.bf16.mxu0 0
      %2468 = vmatpush1.bf16.msra.mxu0 0
      %2469 = vmatprep.subr.bf16.mxu0 0
      %2470 = vmatpush1.bf16.msra.mxu0 0
      %2471 = vmatprep.subr.bf16.mxu0 0
      %2472 = vmatpush1.bf16.msra.mxu0 0
      %2473 = vmatprep.subr.bf16.mxu0 0
      %2474 = vmatpush1.bf16.msra.mxu0 0
      %2475 = vmatprep.subr.bf16.mxu0 0
      %2476 = vmatpush1.bf16.msra.mxu0 0
      %2477 = vmatprep.subr.bf16.mxu0 0
      %2478 = vmatpush1.bf16.msra.mxu0 0
      %2479 = vmatprep.subr.bf16.mxu0 0
      %2480 = vmatpush1.bf16.msra.mxu0 0
      %2481 = vmatprep.subr.bf16.mxu0 0
      %2482 = vmatpush1.bf16.msra.mxu0 0
      %2483 = vmatprep.mubr.bf16.mxu0 0
      %2484 = vmatmul.mubr.bf16.gmra.mrb[0].mxu0 %v2370
      %v2485 = vpop.f32.mrb[0].mxu0
      %v2486 = vadd.f32 0.0, %v2485
      %v2487 = vpop.f32.mrb[0].mxu0
      %v2488 = vpop.f32.mrb[0].mxu0
      %v2489 = vadd.f32 0.0, %v2488
      %v2490 = vpop.f32.mrb[0].mxu0
      %2491 = vmatprep.mubr.bf16.mxu0 0
      %2492 = vmatmul.mubr.bf16.gmra.mrb[0].mxu0 %v2371
      %v2493 = vpop.f32.mrb[0].mxu0
      %v2494 = vadd.f32 0.0, %v2493
      %v2495 = vpop.f32.mrb[0].mxu0
      %v2496 = vpop.f32.mrb[0].mxu0
      %v2497 = vadd.f32 0.0, %v2496
      %v2498 = vpop.f32.mrb[0].mxu0
      %2499 = vmatprep.mubr.bf16.mxu0 0
      %2500 = vmatmul.mubr.bf16.gmra.mrb[0].mxu0 %v2372
      %v2501 = vpop.f32.mrb[0].mxu0
      %v2502 = vadd.f32 0.0, %v2501
      %v2503 = vpop.f32.mrb[0].mxu0
      %v2504 = vpop.f32.mrb[0].mxu0
      %v2505 = vadd.f32 0.0, %v2504
      %v2506 = vpop.f32.mrb[0].mxu0
      %2507 = vmatprep.mubr.bf16.mxu0 0
      %2508 = vmatmul.mubr.bf16.gmra.mrb[0].mxu0 %v2373
      %v2509 = vpop.f32.mrb[0].mxu0
      %v2510 = vadd.f32 0.0, %v2509
      %v2511 = vpop.f32.mrb[0].mxu0
      %v2512 = vpop.f32.mrb[0].mxu0
      %v2513 = vadd.f32 0.0, %v2512
      %v2514 = vpop.f32.mrb[0].mxu0
      %2515 = vmatprep.mubr.bf16.mxu0 0
      %2516 = vmatmul.mubr.bf16.gmra.mrb[0].mxu0 %v2374
      %v2517 = vpop.f32.mrb[0].mxu0
      %v2518 = vadd.f32 0.0, %v2517
      %v2519 = vpop.f32.mrb[0].mxu0
      %v2520 = vpop.f32.mrb[0].mxu0
      %v2521 = vadd.f32 0.0, %v2520
      %v2522 = vpop.f32.mrb[0].mxu0
      %2523 = vmatprep.mubr.bf16.mxu0 0
      %2524 = vmatmul.mubr.bf16.gmra.mrb[0].mxu0 %v2375
      %v2525 = vpop.f32.mrb[0].mxu0
      %v2526 = vadd.f32 0.0, %v2525
      %v2527 = vpop.f32.mrb[0].mxu0
      %v2528 = vpop.f32.mrb[0].mxu0
      %v2529 = vadd.f32 0.0, %v2528
      %v2530 = vpop.f32.mrb[0].mxu0
      %2531 = vmatprep.mubr.bf16.mxu0 0
      %2532 = vmatmul.mubr.bf16.gmra.mrb[0].mxu0 %v2376
      %v2533 = vpop.f32.mrb[0].mxu0
      %v2534 = vadd.f32 0.0, %v2533
      %v2535 = vpop.f32.mrb[0].mxu0
      %v2536 = vpop.f32.mrb[0].mxu0
      %v2537 = vadd.f32 0.0, %v2536
      %v2538 = vpop.f32.mrb[0].mxu0
      %2539 = vmatprep.mubr.bf16.mxu0 0
      %2540 = vmatmul.mubr.bf16.gmra.mrb[0].mxu0 %v2377
      %v2541 = vpop.f32.mrb[0].mxu0
      %v2542 = vadd.f32 0.0, %v2541
      %v2543 = vpop.f32.mrb[0].mxu0
      %v2544 = vpop.f32.mrb[0].mxu0
      %v2545 = vadd.f32 0.0, %v2544
      %v2546 = vpop.f32.mrb[0].mxu0
      %2547 = vmatprep.mubr.bf16.mxu0 0
      %2548 = vmatmul.mubr.bf16.gmra.mrb[0].mxu0 %v2378
      %v2549 = vpop.f32.mrb[0].mxu0
      %v2550 = vadd.f32 0.0, %v2549
      %v2551 = vpop.f32.mrb[0].mxu0
      %v2552 = vpop.f32.mrb[0].mxu0
      %v2553 = vadd.f32 0.0, %v2552
      %v2554 = vpop.f32.mrb[0].mxu0
      %2555 = vmatprep.mubr.bf16.mxu0 0
      %2556 = vmatmul.mubr.bf16.gmra.mrb[0].mxu0 %v2379
      %v2557 = vpop.f32.mrb[0].mxu0
      %v2558 = vadd.f32 0.0, %v2557
      %v2559 = vpop.f32.mrb[0].mxu0
      %v2560 = vpop.f32.mrb[0].mxu0
      %v2561 = vadd.f32 0.0, %v2560
      %v2562 = vpop.f32.mrb[0].mxu0
      %2563 = vmatprep.mubr.bf16.mxu0 0
      %2564 = vmatmul.mubr.bf16.gmra.mrb[0].mxu0 %v2380
      %v2565 = vpop.f32.mrb[0].mxu0
      %v2566 = vadd.f32 0.0, %v2565
      %v2567 = vpop.f32.mrb[0].mxu0
      %v2568 = vpop.f32.mrb[0].mxu0
      %v2569 = vadd.f32 0.0, %v2568
      %v2570 = vpop.f32.mrb[0].mxu0
      %2571 = vmatprep.mubr.bf16.mxu0 0
      %2572 = vmatmul.mubr.bf16.gmra.mrb[0].mxu0 %v2381
      %v2573 = vpop.f32.mrb[0].mxu0
      %v2574 = vadd.f32 0.0, %v2573
      %v2575 = vpop.f32.mrb[0].mxu0
      %v2576 = vpop.f32.mrb[0].mxu0
      %v2577 = vadd.f32 0.0, %v2576
      %v2578 = vpop.f32.mrb[0].mxu0
      %2579 = vmatprep.mubr.bf16.mxu0 0
      %2580 = vmatmul.mubr.bf16.gmra.mrb[0].mxu0 %v2382
      %v2581 = vpop.f32.mrb[0].mxu0
      %v2582 = vadd.f32 0.0, %v2581
      %v2583 = vpop.f32.mrb[0].mxu0
      %v2584 = vpop.f32.mrb[0].mxu0
      %v2585 = vadd.f32 0.0, %v2584
      %v2586 = vpop.f32.mrb[0].mxu0
      %2587 = vmatprep.mubr.bf16.mxu0 0
      %2588 = vmatmul.mubr.bf16.gmra.mrb[0].mxu0 %v2383
      %v2589 = vpop.f32.mrb[0].mxu0
      %v2590 = vadd.f32 0.0, %v2589
      %v2591 = vpop.f32.mrb[0].mxu0
      %v2592 = vpop.f32.mrb[0].mxu0
      %v2593 = vadd.f32 0.0, %v2592
      %v2594 = vpop.f32.mrb[0].mxu0
      %2595 = vmatprep.mubr.bf16.mxu0 0
      %2596 = vmatmul.mubr.bf16.gmra.mrb[0].mxu0 %v2384
      %v2597 = vpop.f32.mrb[0].mxu0
      %v2598 = vadd.f32 0.0, %v2597
      %v2599 = vpop.f32.mrb[0].mxu0
      %v2600 = vpop.f32.mrb[0].mxu0
      %v2601 = vadd.f32 0.0, %v2600
      %v2602 = vpop.f32.mrb[0].mxu0
      %2603 = vmatprep.mubr.bf16.mxu0 0
      %2604 = vmatmul.mubr.bf16.gmra.mrb[0].mxu0 %v2385
      %v2605 = vpop.f32.mrb[0].mxu0
      %v2606 = vadd.f32 0.0, %v2605
      %v2607 = vpop.f32.mrb[0].mxu0
      %v2608 = vpop.f32.mrb[0].mxu0
      %v2609 = vadd.f32 0.0, %v2608
      %v2610 = vpop.f32.mrb[0].mxu0
      %2611 = vdwg.mxu0
      %v2612 = vadd.f32 %v2211, %v2486
      %v2613 = vadd.f32 %v2212, %v2489
      %v2614 = vadd.f32 %v2213, %v2494
      %v2615 = vadd.f32 %v2214, %v2497
      %v2616 = vadd.f32 %v2215, %v2502
      %v2617 = vadd.f32 %v2216, %v2505
      %v2618 = vadd.f32 %v2217, %v2510
      %v2619 = vadd.f32 %v2218, %v2513
      %v2620 = vadd.f32 %v2219, %v2518
      %v2621 = vadd.f32 %v2220, %v2521
      %v2622 = vadd.f32 %v2221, %v2526
      %v2623 = vadd.f32 %v2222, %v2529
      %v2624 = vadd.f32 %v2223, %v2534
      %v2625 = vadd.f32 %v2224, %v2537
      %v2626 = vadd.f32 %v2225, %v2542
      %v2627 = vadd.f32 %v2226, %v2545
      %v2628 = vadd.f32 %v2227, %v2550
      %v2629 = vadd.f32 %v2228, %v2553
      %v2630 = vadd.f32 %v2229, %v2558
      %v2631 = vadd.f32 %v2230, %v2561
      %v2632 = vadd.f32 %v2231, %v2566
      %v2633 = vadd.f32 %v2232, %v2569
      %v2634 = vadd.f32 %v2233, %v2574
      %v2635 = vadd.f32 %v2234, %v2577
      %v2636 = vadd.f32 %v2235, %v2582
      %v2637 = vadd.f32 %v2236, %v2585
      %v2638 = vadd.f32 %v2237, %v2590
      %v2639 = vadd.f32 %v2238, %v2593
      %v2640 = vadd.f32 %v2239, %v2598
      %v2641 = vadd.f32 %v2240, %v2601
      %v2642 = vadd.f32 %v2241, %v2606
      %v2643 = vadd.f32 %v2242, %v2609
      %v2644 = vpack.c.bf16 %v2328, %v2326
      %s2645 = scalar_lea.vmem %s3, 320
      %v2646 = vld [vmem:[%s2645] sm:$0xf]
      %v2647 = vld [vmem:[%s2645 + $0x4] sm:$0xf]
      %v2648 = vld [vmem:[%s2645 + $0x8] sm:$0xf]
      %v2649 = vld [vmem:[%s2645 + $0xc] sm:$0xf]
      %v2650 = vld [vmem:[%s2645 + $0x10] sm:$0xf]
      %v2651 = vld [vmem:[%s2645 + $0x14] sm:$0xf]
      %v2652 = vld [vmem:[%s2645 + $0x18] sm:$0xf]
      %v2653 = vld [vmem:[%s2645 + $0x1c] sm:$0xf]
      %v2654 = vld [vmem:[%s2645 + $0x20] sm:$0xf]
      %v2655 = vld [vmem:[%s2645 + $0x24] sm:$0xf]
      %v2656 = vld [vmem:[%s2645 + $0x28] sm:$0xf]
      %v2657 = vld [vmem:[%s2645 + $0x2c] sm:$0xf]
      %v2658 = vld [vmem:[%s2645 + $0x30] sm:$0xf]
      %v2659 = vld [vmem:[%s2645 + $0x34] sm:$0xf]
      %v2660 = vld [vmem:[%s2645 + $0x38] sm:$0xf]
      %v2661 = vld [vmem:[%s2645 + $0x3c] sm:$0xf]
      %v2678 = vunpack.c.l.b16 %v2646
      %v2679 = vunpack.c.l.b16 %v2647
      %v2680 = vunpack.c.l.b16 %v2648
      %v2681 = vunpack.c.l.b16 %v2649
      %v2682 = vunpack.c.l.b16 %v2650
      %v2683 = vunpack.c.l.b16 %v2651
      %v2684 = vunpack.c.l.b16 %v2652
      %v2685 = vunpack.c.l.b16 %v2653
      %v2686 = vunpack.c.l.b16 %v2654
      %v2687 = vunpack.c.l.b16 %v2655
      %v2688 = vunpack.c.l.b16 %v2656
      %v2689 = vunpack.c.l.b16 %v2657
      %v2690 = vunpack.c.l.b16 %v2658
      %v2691 = vunpack.c.l.b16 %v2659
      %v2692 = vunpack.c.l.b16 %v2660
      %v2693 = vunpack.c.l.b16 %v2661
      %v2694 = vpack.c.b16 %v2679, %v2678
      %v2695 = vpack.c.b16 %v2681, %v2680
      %v2696 = vpack.c.b16 %v2683, %v2682
      %v2697 = vpack.c.b16 %v2685, %v2684
      %v2698 = vpack.c.b16 %v2687, %v2686
      %v2699 = vpack.c.b16 %v2689, %v2688
      %v2700 = vpack.c.b16 %v2691, %v2690
      %v2701 = vpack.c.b16 %v2693, %v2692
      %2710 = vmatprep.subr.bf16.mxu0 0
      %2711 = vmatpush1.bf16.msra.mxu0 %v2694
      %2712 = vmatprep.subr.bf16.mxu0 0
      %2713 = vmatpush1.bf16.msra.mxu0 %v2695
      %2714 = vmatprep.subr.bf16.mxu0 0
      %2715 = vmatpush1.bf16.msra.mxu0 %v2696
      %2716 = vmatprep.subr.bf16.mxu0 0
      %2717 = vmatpush1.bf16.msra.mxu0 %v2697
      %2718 = vmatprep.subr.bf16.mxu0 0
      %2719 = vmatpush1.bf16.msra.mxu0 %v2698
      %2720 = vmatprep.subr.bf16.mxu0 0
      %2721 = vmatpush1.bf16.msra.mxu0 %v2699
      %2722 = vmatprep.subr.bf16.mxu0 0
      %2723 = vmatpush1.bf16.msra.mxu0 %v2700
      %2724 = vmatprep.subr.bf16.mxu0 0
      %2725 = vmatpush1.bf16.msra.mxu0 %v2701
      %2726 = vmatprep.subr.bf16.mxu0 0
      %2727 = vmatpush1.bf16.msra.mxu0 0
      %2728 = vmatprep.subr.bf16.mxu0 0
      %2729 = vmatpush1.bf16.msra.mxu0 0
      %2730 = vmatprep.subr.bf16.mxu0 0
      %2731 = vmatpush1.bf16.msra.mxu0 0
      %2732 = vmatprep.subr.bf16.mxu0 0
      %2733 = vmatpush1.bf16.msra.mxu0 0
      %2734 = vmatprep.subr.bf16.mxu0 0
      %2735 = vmatpush1.bf16.msra.mxu0 0
      %2736 = vmatprep.subr.bf16.mxu0 0
      %2737 = vmatpush1.bf16.msra.mxu0 0
      %2738 = vmatprep.subr.bf16.mxu0 0
      %2739 = vmatpush1.bf16.msra.mxu0 0
      %2740 = vmatprep.subr.bf16.mxu0 0
      %2741 = vmatpush1.bf16.msra.mxu0 0
      %2742 = vmatprep.mubr.bf16.mxu0 0
      %2743 = vmatmul.mubr.bf16.gmra.mrb[0].mxu0 %v2371
      %v2744 = vpop.f32.mrb[0].mxu0
      %v2745 = vadd.f32 0.0, %v2744
      %v2746 = vpop.f32.mrb[0].mxu0
      %v2747 = vpop.f32.mrb[0].mxu0
      %v2748 = vadd.f32 0.0, %v2747
      %v2749 = vpop.f32.mrb[0].mxu0
      %2750 = vmatprep.mubr.bf16.mxu0 0
      %2751 = vmatmul.mubr.bf16.gmra.mrb[0].mxu0 %v2372
      %v2752 = vpop.f32.mrb[0].mxu0
      %v2753 = vadd.f32 0.0, %v2752
      %v2754 = vpop.f32.mrb[0].mxu0
      %v2755 = vpop.f32.mrb[0].mxu0
      %v2756 = vadd.f32 0.0, %v2755
      %v2757 = vpop.f32.mrb[0].mxu0
      %2758 = vmatprep.mubr.bf16.mxu0 0
      %2759 = vmatmul.mubr.bf16.gmra.mrb[0].mxu0 %v2373
      %v2760 = vpop.f32.mrb[0].mxu0
      %v2761 = vadd.f32 0.0, %v2760
      %v2762 = vpop.f32.mrb[0].mxu0
      %v2763 = vpop.f32.mrb[0].mxu0
      %v2764 = vadd.f32 0.0, %v2763
      %v2765 = vpop.f32.mrb[0].mxu0
      %2766 = vmatprep.mubr.bf16.mxu0 0
      %2767 = vmatmul.mubr.bf16.gmra.mrb[0].mxu0 %v2374
      %v2768 = vpop.f32.mrb[0].mxu0
      %v2769 = vadd.f32 0.0, %v2768
      %v2770 = vpop.f32.mrb[0].mxu0
      %v2771 = vpop.f32.mrb[0].mxu0
      %v2772 = vadd.f32 0.0, %v2771
      %v2773 = vpop.f32.mrb[0].mxu0
      %2774 = vmatprep.mubr.bf16.mxu0 0
      %2775 = vmatmul.mubr.bf16.gmra.mrb[0].mxu0 %v2375
      %v2776 = vpop.f32.mrb[0].mxu0
      %v2777 = vadd.f32 0.0, %v2776
      %v2778 = vpop.f32.mrb[0].mxu0
      %v2779 = vpop.f32.mrb[0].mxu0
      %v2780 = vadd.f32 0.0, %v2779
      %v2781 = vpop.f32.mrb[0].mxu0
      %2782 = vmatprep.mubr.bf16.mxu0 0
      %2783 = vmatmul.mubr.bf16.gmra.mrb[0].mxu0 %v2376
      %v2784 = vpop.f32.mrb[0].mxu0
      %v2785 = vadd.f32 0.0, %v2784
      %v2786 = vpop.f32.mrb[0].mxu0
      %v2787 = vpop.f32.mrb[0].mxu0
      %v2788 = vadd.f32 0.0, %v2787
      %v2789 = vpop.f32.mrb[0].mxu0
      %2790 = vmatprep.mubr.bf16.mxu0 0
      %2791 = vmatmul.mubr.bf16.gmra.mrb[0].mxu0 %v2377
      %v2792 = vpop.f32.mrb[0].mxu0
      %v2793 = vadd.f32 0.0, %v2792
      %v2794 = vpop.f32.mrb[0].mxu0
      %v2795 = vpop.f32.mrb[0].mxu0
      %v2796 = vadd.f32 0.0, %v2795
      %v2797 = vpop.f32.mrb[0].mxu0
      %2798 = vmatprep.mubr.bf16.mxu0 0
      %2799 = vmatmul.mubr.bf16.gmra.mrb[0].mxu0 %v2378
      %v2800 = vpop.f32.mrb[0].mxu0
      %v2801 = vadd.f32 0.0, %v2800
      %v2802 = vpop.f32.mrb[0].mxu0
      %v2803 = vpop.f32.mrb[0].mxu0
      %v2804 = vadd.f32 0.0, %v2803
      %v2805 = vpop.f32.mrb[0].mxu0
      %2806 = vmatprep.mubr.bf16.mxu0 0
      %2807 = vmatmul.mubr.bf16.gmra.mrb[0].mxu0 %v2379
      %v2808 = vpop.f32.mrb[0].mxu0
      %v2809 = vadd.f32 0.0, %v2808
      %v2810 = vpop.f32.mrb[0].mxu0
      %v2811 = vpop.f32.mrb[0].mxu0
      %v2812 = vadd.f32 0.0, %v2811
      %v2813 = vpop.f32.mrb[0].mxu0
      %2814 = vmatprep.mubr.bf16.mxu0 0
      %2815 = vmatmul.mubr.bf16.gmra.mrb[0].mxu0 %v2380
      %v2816 = vpop.f32.mrb[0].mxu0
      %v2817 = vadd.f32 0.0, %v2816
      %v2818 = vpop.f32.mrb[0].mxu0
      %v2819 = vpop.f32.mrb[0].mxu0
      %v2820 = vadd.f32 0.0, %v2819
      %v2821 = vpop.f32.mrb[0].mxu0
      %2822 = vmatprep.mubr.bf16.mxu0 0
      %2823 = vmatmul.mubr.bf16.gmra.mrb[0].mxu0 %v2381
      %v2824 = vpop.f32.mrb[0].mxu0
      %v2825 = vadd.f32 0.0, %v2824
      %v2826 = vpop.f32.mrb[0].mxu0
      %v2827 = vpop.f32.mrb[0].mxu0
      %v2828 = vadd.f32 0.0, %v2827
      %v2829 = vpop.f32.mrb[0].mxu0
      %2830 = vmatprep.mubr.bf16.mxu0 0
      %2831 = vmatmul.mubr.bf16.gmra.mrb[0].mxu0 %v2382
      %v2832 = vpop.f32.mrb[0].mxu0
      %v2833 = vadd.f32 0.0, %v2832
      %v2834 = vpop.f32.mrb[0].mxu0
      %v2835 = vpop.f32.mrb[0].mxu0
      %v2836 = vadd.f32 0.0, %v2835
      %v2837 = vpop.f32.mrb[0].mxu0
      %2838 = vmatprep.mubr.bf16.mxu0 0
      %2839 = vmatmul.mubr.bf16.gmra.mrb[0].mxu0 %v2383
      %v2840 = vpop.f32.mrb[0].mxu0
      %v2841 = vadd.f32 0.0, %v2840
      %v2842 = vpop.f32.mrb[0].mxu0
      %v2843 = vpop.f32.mrb[0].mxu0
      %v2844 = vadd.f32 0.0, %v2843
      %v2845 = vpop.f32.mrb[0].mxu0
      %2846 = vmatprep.mubr.bf16.mxu0 0
      %2847 = vmatmul.mubr.bf16.gmra.mrb[0].mxu0 %v2384
      %v2848 = vpop.f32.mrb[0].mxu0
      %v2849 = vadd.f32 0.0, %v2848
      %v2850 = vpop.f32.mrb[0].mxu0
      %v2851 = vpop.f32.mrb[0].mxu0
      %v2852 = vadd.f32 0.0, %v2851
      %v2853 = vpop.f32.mrb[0].mxu0
      %2854 = vmatprep.mubr.bf16.mxu0 0
      %2855 = vmatmul.mubr.bf16.gmra.mrb[0].mxu0 %v2385
      %v2856 = vpop.f32.mrb[0].mxu0
      %v2857 = vadd.f32 0.0, %v2856
      %v2858 = vpop.f32.mrb[0].mxu0
      %v2859 = vpop.f32.mrb[0].mxu0
      %v2860 = vadd.f32 0.0, %v2859
      %v2861 = vpop.f32.mrb[0].mxu0
      %2862 = vmatprep.mubr.bf16.mxu0 0
      %2863 = vmatmul.mubr.bf16.gmra.mrb[0].mxu0 %v2644
      %v2864 = vpop.f32.mrb[0].mxu0
      %v2865 = vadd.f32 0.0, %v2864
      %v2866 = vpop.f32.mrb[0].mxu0
      %v2867 = vpop.f32.mrb[0].mxu0
      %v2868 = vadd.f32 0.0, %v2867
      %v2869 = vpop.f32.mrb[0].mxu0
      %2870 = vdwg.mxu0
      %v2871 = vadd.f32 %v2612, %v2745
      %v2872 = vadd.f32 %v2613, %v2748
      %v2873 = vadd.f32 %v2614, %v2753
      %v2874 = vadd.f32 %v2615, %v2756
      %v2875 = vadd.f32 %v2616, %v2761
      %v2876 = vadd.f32 %v2617, %v2764
      %v2877 = vadd.f32 %v2618, %v2769
      %v2878 = vadd.f32 %v2619, %v2772
      %v2879 = vadd.f32 %v2620, %v2777
      %v2880 = vadd.f32 %v2621, %v2780
      %v2881 = vadd.f32 %v2622, %v2785
      %v2882 = vadd.f32 %v2623, %v2788
      %v2883 = vadd.f32 %v2624, %v2793
      %v2884 = vadd.f32 %v2625, %v2796
      %v2885 = vadd.f32 %v2626, %v2801
      %v2886 = vadd.f32 %v2627, %v2804
      %v2887 = vadd.f32 %v2628, %v2809
      %v2888 = vadd.f32 %v2629, %v2812
      %v2889 = vadd.f32 %v2630, %v2817
      %v2890 = vadd.f32 %v2631, %v2820
      %v2891 = vadd.f32 %v2632, %v2825
      %v2892 = vadd.f32 %v2633, %v2828
      %v2893 = vadd.f32 %v2634, %v2833
      %v2894 = vadd.f32 %v2635, %v2836
      %v2895 = vadd.f32 %v2636, %v2841
      %v2896 = vadd.f32 %v2637, %v2844
      %v2897 = vadd.f32 %v2638, %v2849
      %v2898 = vadd.f32 %v2639, %v2852
      %v2899 = vadd.f32 %v2640, %v2857
      %v2900 = vadd.f32 %v2641, %v2860
      %v2901 = vadd.f32 %v2642, %v2865
      %v2902 = vadd.f32 %v2643, %v2868
      %v2903 = vpack.c.bf16 %v2333, %v2331
      %s2904 = scalar_lea.vmem %s3, 512
      %v2905 = vld [vmem:[%s2904] sm:$0xf]
      %v2906 = vld [vmem:[%s2904 + $0x4] sm:$0xf]
      %v2907 = vld [vmem:[%s2904 + $0x8] sm:$0xf]
      %v2908 = vld [vmem:[%s2904 + $0xc] sm:$0xf]
      %v2909 = vld [vmem:[%s2904 + $0x10] sm:$0xf]
      %v2910 = vld [vmem:[%s2904 + $0x14] sm:$0xf]
      %v2911 = vld [vmem:[%s2904 + $0x18] sm:$0xf]
      %v2912 = vld [vmem:[%s2904 + $0x1c] sm:$0xf]
      %v2913 = vld [vmem:[%s2904 + $0x20] sm:$0xf]
      %v2914 = vld [vmem:[%s2904 + $0x24] sm:$0xf]
      %v2915 = vld [vmem:[%s2904 + $0x28] sm:$0xf]
      %v2916 = vld [vmem:[%s2904 + $0x2c] sm:$0xf]
      %v2917 = vld [vmem:[%s2904 + $0x30] sm:$0xf]
      %v2918 = vld [vmem:[%s2904 + $0x34] sm:$0xf]
      %v2919 = vld [vmem:[%s2904 + $0x38] sm:$0xf]
      %v2920 = vld [vmem:[%s2904 + $0x3c] sm:$0xf]
      %v2937 = vunpack.c.l.b16 %v2905
      %v2938 = vunpack.c.l.b16 %v2906
      %v2939 = vunpack.c.l.b16 %v2907
      %v2940 = vunpack.c.l.b16 %v2908
      %v2941 = vunpack.c.l.b16 %v2909
      %v2942 = vunpack.c.l.b16 %v2910
      %v2943 = vunpack.c.l.b16 %v2911
      %v2944 = vunpack.c.l.b16 %v2912
      %v2945 = vunpack.c.l.b16 %v2913
      %v2946 = vunpack.c.l.b16 %v2914
      %v2947 = vunpack.c.l.b16 %v2915
      %v2948 = vunpack.c.l.b16 %v2916
      %v2949 = vunpack.c.l.b16 %v2917
      %v2950 = vunpack.c.l.b16 %v2918
      %v2951 = vunpack.c.l.b16 %v2919
      %v2952 = vunpack.c.l.b16 %v2920
      %v2953 = vpack.c.b16 %v2938, %v2937
      %v2954 = vpack.c.b16 %v2940, %v2939
      %v2955 = vpack.c.b16 %v2942, %v2941
      %v2956 = vpack.c.b16 %v2944, %v2943
      %v2957 = vpack.c.b16 %v2946, %v2945
      %v2958 = vpack.c.b16 %v2948, %v2947
      %v2959 = vpack.c.b16 %v2950, %v2949
      %v2960 = vpack.c.b16 %v2952, %v2951
      %2969 = vmatprep.subr.bf16.mxu0 0
      %2970 = vmatpush1.bf16.msra.mxu0 %v2953
      %2971 = vmatprep.subr.bf16.mxu0 0
      %2972 = vmatpush1.bf16.msra.mxu0 %v2954
      %2973 = vmatprep.subr.bf16.mxu0 0
      %2974 = vmatpush1.bf16.msra.mxu0 %v2955
      %2975 = vmatprep.subr.bf16.mxu0 0
      %2976 = vmatpush1.bf16.msra.mxu0 %v2956
      %2977 = vmatprep.subr.bf16.mxu0 0
      %2978 = vmatpush1.bf16.msra.mxu0 %v2957
      %2979 = vmatprep.subr.bf16.mxu0 0
      %2980 = vmatpush1.bf16.msra.mxu0 %v2958
      %2981 = vmatprep.subr.bf16.mxu0 0
      %2982 = vmatpush1.bf16.msra.mxu0 %v2959
      %2983 = vmatprep.subr.bf16.mxu0 0
      %2984 = vmatpush1.bf16.msra.mxu0 %v2960
      %2985 = vmatprep.subr.bf16.mxu0 0
      %2986 = vmatpush1.bf16.msra.mxu0 0
      %2987 = vmatprep.subr.bf16.mxu0 0
      %2988 = vmatpush1.bf16.msra.mxu0 0
      %2989 = vmatprep.subr.bf16.mxu0 0
      %2990 = vmatpush1.bf16.msra.mxu0 0
      %2991 = vmatprep.subr.bf16.mxu0 0
      %2992 = vmatpush1.bf16.msra.mxu0 0
      %2993 = vmatprep.subr.bf16.mxu0 0
      %2994 = vmatpush1.bf16.msra.mxu0 0
      %2995 = vmatprep.subr.bf16.mxu0 0
      %2996 = vmatpush1.bf16.msra.mxu0 0
      %2997 = vmatprep.subr.bf16.mxu0 0
      %2998 = vmatpush1.bf16.msra.mxu0 0
      %2999 = vmatprep.subr.bf16.mxu0 0
      %3000 = vmatpush1.bf16.msra.mxu0 0
      %3001 = vmatprep.mubr.bf16.mxu0 0
      %3002 = vmatmul.mubr.bf16.gmra.mrb[0].mxu0 %v2372
      %v3003 = vpop.f32.mrb[0].mxu0
      %v3004 = vadd.f32 0.0, %v3003
      %v3005 = vpop.f32.mrb[0].mxu0
      %v3006 = vpop.f32.mrb[0].mxu0
      %v3007 = vadd.f32 0.0, %v3006
      %v3008 = vpop.f32.mrb[0].mxu0
      %3009 = vmatprep.mubr.bf16.mxu0 0
      %3010 = vmatmul.mubr.bf16.gmra.mrb[0].mxu0 %v2373
      %v3011 = vpop.f32.mrb[0].mxu0
      %v3012 = vadd.f32 0.0, %v3011
      %v3013 = vpop.f32.mrb[0].mxu0
      %v3014 = vpop.f32.mrb[0].mxu0
      %v3015 = vadd.f32 0.0, %v3014
      %v3016 = vpop.f32.mrb[0].mxu0
      %3017 = vmatprep.mubr.bf16.mxu0 0
      %3018 = vmatmul.mubr.bf16.gmra.mrb[0].mxu0 %v2374
      %v3019 = vpop.f32.mrb[0].mxu0
      %v3020 = vadd.f32 0.0, %v3019
      %v3021 = vpop.f32.mrb[0].mxu0
      %v3022 = vpop.f32.mrb[0].mxu0
      %v3023 = vadd.f32 0.0, %v3022
      %v3024 = vpop.f32.mrb[0].mxu0
      %3025 = vmatprep.mubr.bf16.mxu0 0
      %3026 = vmatmul.mubr.bf16.gmra.mrb[0].mxu0 %v2375
      %v3027 = vpop.f32.mrb[0].mxu0
      %v3028 = vadd.f32 0.0, %v3027
      %v3029 = vpop.f32.mrb[0].mxu0
      %v3030 = vpop.f32.mrb[0].mxu0
      %v3031 = vadd.f32 0.0, %v3030
      %v3032 = vpop.f32.mrb[0].mxu0
      %3033 = vmatprep.mubr.bf16.mxu0 0
      %3034 = vmatmul.mubr.bf16.gmra.mrb[0].mxu0 %v2376
      %v3035 = vpop.f32.mrb[0].mxu0
      %v3036 = vadd.f32 0.0, %v3035
      %v3037 = vpop.f32.mrb[0].mxu0
      %v3038 = vpop.f32.mrb[0].mxu0
      %v3039 = vadd.f32 0.0, %v3038
      %v3040 = vpop.f32.mrb[0].mxu0
      %3041 = vmatprep.mubr.bf16.mxu0 0
      %3042 = vmatmul.mubr.bf16.gmra.mrb[0].mxu0 %v2377
      %v3043 = vpop.f32.mrb[0].mxu0
      %v3044 = vadd.f32 0.0, %v3043
      %v3045 = vpop.f32.mrb[0].mxu0
      %v3046 = vpop.f32.mrb[0].mxu0
      %v3047 = vadd.f32 0.0, %v3046
      %v3048 = vpop.f32.mrb[0].mxu0
      %3049 = vmatprep.mubr.bf16.mxu0 0
      %3050 = vmatmul.mubr.bf16.gmra.mrb[0].mxu0 %v2378
      %v3051 = vpop.f32.mrb[0].mxu0
      %v3052 = vadd.f32 0.0, %v3051
      %v3053 = vpop.f32.mrb[0].mxu0
      %v3054 = vpop.f32.mrb[0].mxu0
      %v3055 = vadd.f32 0.0, %v3054
      %v3056 = vpop.f32.mrb[0].mxu0
      %3057 = vmatprep.mubr.bf16.mxu0 0
      %3058 = vmatmul.mubr.bf16.gmra.mrb[0].mxu0 %v2379
      %v3059 = vpop.f32.mrb[0].mxu0
      %v3060 = vadd.f32 0.0, %v3059
      %v3061 = vpop.f32.mrb[0].mxu0
      %v3062 = vpop.f32.mrb[0].mxu0
      %v3063 = vadd.f32 0.0, %v3062
      %v3064 = vpop.f32.mrb[0].mxu0
      %3065 = vmatprep.mubr.bf16.mxu0 0
      %3066 = vmatmul.mubr.bf16.gmra.mrb[0].mxu0 %v2380
      %v3067 = vpop.f32.mrb[0].mxu0
      %v3068 = vadd.f32 0.0, %v3067
      %v3069 = vpop.f32.mrb[0].mxu0
      %v3070 = vpop.f32.mrb[0].mxu0
      %v3071 = vadd.f32 0.0, %v3070
      %v3072 = vpop.f32.mrb[0].mxu0
      %3073 = vmatprep.mubr.bf16.mxu0 0
      %3074 = vmatmul.mubr.bf16.gmra.mrb[0].mxu0 %v2381
      %v3075 = vpop.f32.mrb[0].mxu0
      %v3076 = vadd.f32 0.0, %v3075
      %v3077 = vpop.f32.mrb[0].mxu0
      %v3078 = vpop.f32.mrb[0].mxu0
      %v3079 = vadd.f32 0.0, %v3078
      %v3080 = vpop.f32.mrb[0].mxu0
      %3081 = vmatprep.mubr.bf16.mxu0 0
      %3082 = vmatmul.mubr.bf16.gmra.mrb[0].mxu0 %v2382
      %v3083 = vpop.f32.mrb[0].mxu0
      %v3084 = vadd.f32 0.0, %v3083
      %v3085 = vpop.f32.mrb[0].mxu0
      %v3086 = vpop.f32.mrb[0].mxu0
      %v3087 = vadd.f32 0.0, %v3086
      %v3088 = vpop.f32.mrb[0].mxu0
      %3089 = vmatprep.mubr.bf16.mxu0 0
      %3090 = vmatmul.mubr.bf16.gmra.mrb[0].mxu0 %v2383
      %v3091 = vpop.f32.mrb[0].mxu0
      %v3092 = vadd.f32 0.0, %v3091
      %v3093 = vpop.f32.mrb[0].mxu0
      %v3094 = vpop.f32.mrb[0].mxu0
      %v3095 = vadd.f32 0.0, %v3094
      %v3096 = vpop.f32.mrb[0].mxu0
      %3097 = vmatprep.mubr.bf16.mxu0 0
      %3098 = vmatmul.mubr.bf16.gmra.mrb[0].mxu0 %v2384
      %v3099 = vpop.f32.mrb[0].mxu0
      %v3100 = vadd.f32 0.0, %v3099
      %v3101 = vpop.f32.mrb[0].mxu0
      %v3102 = vpop.f32.mrb[0].mxu0
      %v3103 = vadd.f32 0.0, %v3102
      %v3104 = vpop.f32.mrb[0].mxu0
      %3105 = vmatprep.mubr.bf16.mxu0 0
      %3106 = vmatmul.mubr.bf16.gmra.mrb[0].mxu0 %v2385
      %v3107 = vpop.f32.mrb[0].mxu0
      %v3108 = vadd.f32 0.0, %v3107
      %v3109 = vpop.f32.mrb[0].mxu0
      %v3110 = vpop.f32.mrb[0].mxu0
      %v3111 = vadd.f32 0.0, %v3110
      %v3112 = vpop.f32.mrb[0].mxu0
      %3113 = vmatprep.mubr.bf16.mxu0 0
      %3114 = vmatmul.mubr.bf16.gmra.mrb[0].mxu0 %v2644
      %v3115 = vpop.f32.mrb[0].mxu0
      %v3116 = vadd.f32 0.0, %v3115
      %v3117 = vpop.f32.mrb[0].mxu0
      %v3118 = vpop.f32.mrb[0].mxu0
      %v3119 = vadd.f32 0.0, %v3118
      %v3120 = vpop.f32.mrb[0].mxu0
      %3121 = vmatprep.mubr.bf16.mxu0 0
      %3122 = vmatmul.mubr.bf16.gmra.mrb[0].mxu0 %v2903
      %v3123 = vpop.f32.mrb[0].mxu0
      %v3124 = vadd.f32 0.0, %v3123
      %v3125 = vpop.f32.mrb[0].mxu0
      %v3126 = vpop.f32.mrb[0].mxu0
      %v3127 = vadd.f32 0.0, %v3126
      %v3128 = vpop.f32.mrb[0].mxu0
      %3129 = vdwg.mxu0
      %v3130 = vadd.f32 %v2871, %v3004
      %v3131 = vadd.f32 %v2872, %v3007
      %v3132 = vadd.f32 %v2873, %v3012
      %v3133 = vadd.f32 %v2874, %v3015
      %v3134 = vadd.f32 %v2875, %v3020
      %v3135 = vadd.f32 %v2876, %v3023
      %v3136 = vadd.f32 %v2877, %v3028
      %v3137 = vadd.f32 %v2878, %v3031
      %v3138 = vadd.f32 %v2879, %v3036
      %v3139 = vadd.f32 %v2880, %v3039
      %v3140 = vadd.f32 %v2881, %v3044
      %v3141 = vadd.f32 %v2882, %v3047
      %v3142 = vadd.f32 %v2883, %v3052
      %v3143 = vadd.f32 %v2884, %v3055
      %v3144 = vadd.f32 %v2885, %v3060
      %v3145 = vadd.f32 %v2886, %v3063
      %v3146 = vadd.f32 %v2887, %v3068
      %v3147 = vadd.f32 %v2888, %v3071
      %v3148 = vadd.f32 %v2889, %v3076
      %v3149 = vadd.f32 %v2890, %v3079
      %v3150 = vadd.f32 %v2891, %v3084
      %v3151 = vadd.f32 %v2892, %v3087
      %v3152 = vadd.f32 %v2893, %v3092
      %v3153 = vadd.f32 %v2894, %v3095
      %v3154 = vadd.f32 %v2895, %v3100
      %v3155 = vadd.f32 %v2896, %v3103
      %v3156 = vadd.f32 %v2897, %v3108
      %v3157 = vadd.f32 %v2898, %v3111
      %v3158 = vadd.f32 %v2899, %v3116
      %v3159 = vadd.f32 %v2900, %v3119
      %v3160 = vadd.f32 %v2901, %v3124
      %v3161 = vadd.f32 %v2902, %v3127
      %3162 = vst [vmem:[%s231] sm:$0xff] %v3130
      %3163 = vst [vmem:[%s231 + $0x8] sm:$0xff] %v3131
      %3164 = vst [vmem:[%s231 + $0x10] sm:$0xff] %v3132
      %3165 = vst [vmem:[%s231 + $0x18] sm:$0xff] %v3133
      %3166 = vst [vmem:[%s231 + $0x20] sm:$0xff] %v3134
      %3167 = vst [vmem:[%s231 + $0x28] sm:$0xff] %v3135
      %3168 = vst [vmem:[%s231 + $0x30] sm:$0xff] %v3136
      %3169 = vst [vmem:[%s231 + $0x38] sm:$0xff] %v3137
      %3170 = vst [vmem:[%s231 + $0x40] sm:$0xff] %v3138
      %3171 = vst [vmem:[%s231 + $0x48] sm:$0xff] %v3139
      %3172 = vst [vmem:[%s231 + $0x50] sm:$0xff] %v3140
      %3173 = vst [vmem:[%s231 + $0x58] sm:$0xff] %v3141
      %3174 = vst [vmem:[%s231 + $0x60] sm:$0xff] %v3142
      %3175 = vst [vmem:[%s231 + $0x68] sm:$0xff] %v3143
      %3176 = vst [vmem:[%s231 + $0x70] sm:$0xff] %v3144
      %3177 = vst [vmem:[%s231 + $0x78] sm:$0xff] %v3145
      %3178 = vst [vmem:[%s231 + $0x80] sm:$0xff] %v3146
      %3179 = vst [vmem:[%s231 + $0x88] sm:$0xff] %v3147
      %3180 = vst [vmem:[%s231 + $0x90] sm:$0xff] %v3148
      %3181 = vst [vmem:[%s231 + $0x98] sm:$0xff] %v3149
      %3182 = vst [vmem:[%s231 + $0xa0] sm:$0xff] %v3150
      %3183 = vst [vmem:[%s231 + $0xa8] sm:$0xff] %v3151
      %3184 = vst [vmem:[%s231 + $0xb0] sm:$0xff] %v3152
      %3185 = vst [vmem:[%s231 + $0xb8] sm:$0xff] %v3153
      %3186 = vst [vmem:[%s231 + $0xc0] sm:$0xff] %v3154
      %3187 = vst [vmem:[%s231 + $0xc8] sm:$0xff] %v3155
      %3188 = vst [vmem:[%s231 + $0xd0] sm:$0xff] %v3156
      %3189 = vst [vmem:[%s231 + $0xd8] sm:$0xff] %v3157
      %3190 = vst [vmem:[%s231 + $0xe0] sm:$0xff] %v3158
      %3191 = vst [vmem:[%s231 + $0xe8] sm:$0xff] %v3159
      %3192 = vst [vmem:[%s231 + $0xf0] sm:$0xff] %v3160
      %3193 = vst [vmem:[%s231 + $0xf8] sm:$0xff] %v3161
      %v3194 = vadd.f32 %v3130, %v3131
      %v3195 = vadd.f32 %v3194, %v3132
      %v3196 = vadd.f32 %v3195, %v3133
      %v3197 = vadd.f32 %v3196, %v3134
      %v3198 = vadd.f32 %v3197, %v3135
      %v3199 = vadd.f32 %v3198, %v3136
      %v3200 = vadd.f32 %v3199, %v3137
      %v3201 = vadd.f32 %v3200, %v3138
      %v3202 = vadd.f32 %v3201, %v3139
      %v3203 = vadd.f32 %v3202, %v3140
      %v3204 = vadd.f32 %v3203, %v3141
      %v3205 = vadd.f32 %v3204, %v3142
      %v3206 = vadd.f32 %v3205, %v3143
      %v3207 = vadd.f32 %v3206, %v3144
      %v3208 = vadd.f32 %v3207, %v3145
      %v3209 = vadd.f32 %v3208, %v3146
      %v3210 = vadd.f32 %v3209, %v3147
      %v3211 = vadd.f32 %v3210, %v3148
      %v3212 = vadd.f32 %v3211, %v3149
      %v3213 = vadd.f32 %v3212, %v3150
      %v3214 = vadd.f32 %v3213, %v3151
      %v3215 = vadd.f32 %v3214, %v3152
      %v3216 = vadd.f32 %v3215, %v3153
      %v3217 = vadd.f32 %v3216, %v3154
      %v3218 = vadd.f32 %v3217, %v3155
      %v3219 = vadd.f32 %v3218, %v3156
      %v3220 = vadd.f32 %v3219, %v3157
      %v3221 = vadd.f32 %v3220, %v3158
      %v3222 = vadd.f32 %v3221, %v3159
      %v3223 = vadd.f32 %v3222, %v3160
      %v3224 = vadd.f32 %v3223, %v3161
      %v3225 = vrot.slane %v3224, 4
      %v3226 = vadd.f32 %v3224, %v3225
      %v3227 = vrot.slane %v3226, 2
      %v3228 = vadd.f32 %v3226, %v3227
      %v3229 = vrot.slane %v3228, 1
      %v3230 = vadd.f32 %v3228, %v3229
      %3231 = vst [vmem:[%s235] sm:$0x1] %v3230
      %v3232 = vmul.f32 %v3130, %v3130
      %v3233 = vmul.f32 %v3131, %v3131
      %v3234 = vmul.f32 %v3132, %v3132
      %v3235 = vmul.f32 %v3133, %v3133
      %v3236 = vmul.f32 %v3134, %v3134
      %v3237 = vmul.f32 %v3135, %v3135
      %v3238 = vmul.f32 %v3136, %v3136
      %v3239 = vmul.f32 %v3137, %v3137
      %v3240 = vmul.f32 %v3138, %v3138
      %v3241 = vmul.f32 %v3139, %v3139
      %v3242 = vmul.f32 %v3140, %v3140
      %v3243 = vmul.f32 %v3141, %v3141
      %v3244 = vmul.f32 %v3142, %v3142
      %v3245 = vmul.f32 %v3143, %v3143
      %v3246 = vmul.f32 %v3144, %v3144
      %v3247 = vmul.f32 %v3145, %v3145
      %v3248 = vmul.f32 %v3146, %v3146
      %v3249 = vmul.f32 %v3147, %v3147
      %v3250 = vmul.f32 %v3148, %v3148
      %v3251 = vmul.f32 %v3149, %v3149
      %v3252 = vmul.f32 %v3150, %v3150
      %v3253 = vmul.f32 %v3151, %v3151
      %v3254 = vmul.f32 %v3152, %v3152
      %v3255 = vmul.f32 %v3153, %v3153
      %v3256 = vmul.f32 %v3154, %v3154
      %v3257 = vmul.f32 %v3155, %v3155
      %v3258 = vmul.f32 %v3156, %v3156
      %v3259 = vmul.f32 %v3157, %v3157
      %v3260 = vmul.f32 %v3158, %v3158
      %v3261 = vmul.f32 %v3159, %v3159
      %v3262 = vmul.f32 %v3160, %v3160
      %v3263 = vmul.f32 %v3161, %v3161
      %v3264 = vadd.f32 %v3232, %v3233
      %v3265 = vadd.f32 %v3264, %v3234
      %v3266 = vadd.f32 %v3265, %v3235
      %v3267 = vadd.f32 %v3266, %v3236
      %v3268 = vadd.f32 %v3267, %v3237
      %v3269 = vadd.f32 %v3268, %v3238
      %v3270 = vadd.f32 %v3269, %v3239
      %v3271 = vadd.f32 %v3270, %v3240
      %v3272 = vadd.f32 %v3271, %v3241
      %v3273 = vadd.f32 %v3272, %v3242
      %v3274 = vadd.f32 %v3273, %v3243
      %v3275 = vadd.f32 %v3274, %v3244
      %v3276 = vadd.f32 %v3275, %v3245
      %v3277 = vadd.f32 %v3276, %v3246
      %v3278 = vadd.f32 %v3277, %v3247
      %v3279 = vadd.f32 %v3278, %v3248
      %v3280 = vadd.f32 %v3279, %v3249
      %v3281 = vadd.f32 %v3280, %v3250
      %v3282 = vadd.f32 %v3281, %v3251
      %v3283 = vadd.f32 %v3282, %v3252
      %v3284 = vadd.f32 %v3283, %v3253
      %v3285 = vadd.f32 %v3284, %v3254
      %v3286 = vadd.f32 %v3285, %v3255
      %v3287 = vadd.f32 %v3286, %v3256
      %v3288 = vadd.f32 %v3287, %v3257
      %v3289 = vadd.f32 %v3288, %v3258
      %v3290 = vadd.f32 %v3289, %v3259
      %v3291 = vadd.f32 %v3290, %v3260
      %v3292 = vadd.f32 %v3291, %v3261
      %v3293 = vadd.f32 %v3292, %v3262
      %v3294 = vadd.f32 %v3293, %v3263
      %v3295 = vrot.slane %v3294, 4
      %v3296 = vadd.f32 %v3294, %v3295
      %v3297 = vrot.slane %v3296, 2
      %v3298 = vadd.f32 %v3296, %v3297
      %v3299 = vrot.slane %v3298, 1
      %v3300 = vadd.f32 %v3298, %v3299
      %3301 = vst [vmem:[%s235 + $0x1] sm:$0x1] %v3300
      %p3302 = scmp.lt.s32.totalorder %s17, 1
      %s3303 = scalar_select %p3302, %s17, 1
      %s3304 = smul.addr %s3303, 32
      %s3305 = smul.addr %s3304, 8
      %s3306 = scalar_lea.vmem %s4, %s3305
      %p3307 = scmp.lt.s32.totalorder %s17, 1
      %s3308 = scalar_select %p3307, %s17, 1
      %s3309 = smul.addr %s3308, 2
      %s3310 = scalar_lea.vmem %s5, %s3309
      // Predicated region
      $region37: #{bottleneck_forward.5} parent=35 // pred_check
        %p3311 = pneg %p124
      $region38: #{bottleneck_forward.5} parent=35 // pred_check_branch
        %3313 = sbr.rel (%p3311) target = $region40
      $region39: #{bottleneck_forward.5} parent=35 // pred_region
        _
      $region40: #{bottleneck_forward.5} parent=35 // pred_fallthru
        _
      // Predicated region
      $region41: #{bottleneck_forward.5} parent=35 // pred_check
        %p3314 = pneg %p150
      $region42: #{bottleneck_forward.5} parent=35 // pred_check_branch
        %3316 = sbr.rel (%p3314) target = $region44
      $region43: #{bottleneck_forward.5} parent=35 // pred_region
        _
      $region44: #{bottleneck_forward.5} parent=35 // pred_fallthru
        _
    $region36: #{bottleneck_forward.5} parent=5 // pred_fallthru
      _
    %p3317 = scmp.le.s32.totalorder 2, %s12
    // Predicated region
    $region45: #{bottleneck_forward.5} parent=5 // pred_check
      %p3318 = pneg %p3317
    $region46: #{bottleneck_forward.5} parent=5 // pred_check_branch
      %3320 = sbr.rel (%p3318) target = $region48
    $region47: #{bottleneck_forward.5} parent=5 // pred_region
      %s3321 = ssub.s32 %s12, 2
      // Predicated region
      $region49: #{bottleneck_forward.5} parent=47 // pred_check
        %p3322 = pneg %p130
      $region50: #{bottleneck_forward.5} parent=47 // pred_check_branch
        %3324 = sbr.rel (%p3322) target = $region52
      $region51: #{bottleneck_forward.5} parent=47 // pred_region
        %p3325 = scmp.lt.s32.totalorder %s18, 1
        %s3326 = scalar_select %p3325, %s18, 1
        %s3327 = smul.addr %s3326, 32
        %s3328 = smul.addr %s3327, 8
        %s3329 = scalar_lea.vmem %s4, %s3328
      $region52: #{bottleneck_forward.5} parent=47 // pred_fallthru
        _
      // Predicated region
      $region53: #{bottleneck_forward.5} parent=47 // pred_check
        %p3330 = pneg %p156
      $region54: #{bottleneck_forward.5} parent=47 // pred_check_branch
        %3332 = sbr.rel (%p3330) target = $region56
      $region55: #{bottleneck_forward.5} parent=47 // pred_region
        %p3333 = scmp.lt.s32.totalorder %s18, 1
        %s3334 = scalar_select %p3333, %s18, 1
        %s3335 = smul.addr %s3334, 2
        %s3336 = scalar_lea.vmem %s5, %s3335
      $region56: #{bottleneck_forward.5} parent=47 // pred_fallthru
        _
    $region48: #{bottleneck_forward.5} parent=5 // pred_fallthru
      _
  $region6: #{bottleneck_forward.5} parent=0 // loop_footer
    %s16 = sadd.s32 1, %s12
  $region7: #{bottleneck_forward.5} parent=0 // loop_footer_branch
    %11 = sbr.rel target = $region3
  $region8: #{bottleneck_forward.5} parent=0 // loop_exit
    _

</llo_original>
